<compile_context>
chip_gen: v6e
topology: v6e:2x2x1
jax: 0.10.0
libtpu: 0.0.40
codegen_flags: <defaults>
</compile_context>

<pallas_src>
import functools

import jax
import jax.numpy as jnp
import numpy as np
from jax.experimental import pallas as pl
from jax.experimental.pallas import tpu as pltpu

EPS = 1e-5  # nn.BatchNorm2d default eps


def _round_up(a, b):
    return ((a + b - 1) // b) * b


# ---------------------------------------------------------------------------
# Fused kernel: 7x7/s2 conv (as 7 kh-matmuls) + folded-BN shift + ReLU + 3x3/s2
# maxpool for one (batch image, band of `tr` pooled rows).
#
# Be*/Bo* hold the paired row-im2col of the even / odd padded input rows:
#   row (s*Tp + t), lane (p*21 + kw*3 + c)  =  x_pad[2s(+1), 4t + 2p + kw, c]
# The matmul row k*Tp + t of the accumulator is conv row (2*b*tr - 1 + k),
# column pair t, with lanes = [64 ch of col 2t | 64 ch of col 2t+1].
# ---------------------------------------------------------------------------
def _stem_kernel(bem_ref, beh_ref, bom_ref, boh_ref, w_ref, shift_ref, o_ref,
                 acc_ref, *, tr, t_real, t_pad):
    b = pl.program_id(1)
    R = 2 * tr + 1          # conv rows computed per band (incl. 1 halo row)
    cout = o_ref.shape[-1]

    # contiguous even / odd padded-input-row planes for this band (+ halo rows)
    ev = jnp.concatenate([bem_ref[0], beh_ref[0]], axis=0)   # ((2tr+4)*Tp, 42)
    od = jnp.concatenate([bom_ref[0], boh_ref[0]], axis=0)

    # conv as 7 accumulated matmuls (one per kh), weights stay (42, 128)
    for kh in range(7):
        src = ev if kh % 2 == 0 else od
        s0 = (kh // 2) * t_pad
        lhs = src[s0:s0 + R * t_pad]                          # (R*Tp, 42) bf16
        prod = jnp.dot(lhs, w_ref[kh], preferred_element_type=jnp.float32)
        if kh == 0:
            acc_ref[...] = prod
        else:
            acc_ref[...] += prod

    # folded BN shift + ReLU
    conv = jnp.maximum(acc_ref[...] + shift_ref[...], 0.0)    # (R*Tp, 128) f32

    # ---- maxpool over columns (within each conv row) ----
    ec = conv[:, :cout]                 # channels of even conv columns
    oc = conv[:, cout:]                 # channels of odd  conv columns
    rolled = pltpu.roll(oc, shift=1, axis=0)                  # col j-1 at pos j
    row_idx = jax.lax.broadcasted_iota(jnp.int32, oc.shape, 0)
    # clamp at the left edge of every conv row (positions k*Tp)
    prev_oc = jnp.where(row_idx % t_pad == 0, oc, rolled)
    colmax = jnp.maximum(jnp.maximum(ec, oc), prev_oc)        # (R*Tp, 64)

    def crow(k):            # column-pooled conv row k of this band
        return colmax[k * t_pad:(k + 1) * t_pad]

    # band-local conv row 0 is the recomputed halo; for band 0 it corresponds to
    # the (nonexistent) conv row -1 -> replace by a duplicate of conv row 0.
    first = jnp.where(b == 0, crow(1), crow(0))

    # ---- maxpool over rows + store pooled rows ----
    for p in range(tr):
        top = first if p == 0 else crow(2 * p)
        pooled = jnp.maximum(jnp.maximum(top, crow(2 * p + 1)), crow(2 * p + 2))
        o_ref[0, p] = pooled[:t_real].astype(o_ref.dtype)


# ---------------------------------------------------------------------------
# Full forward pass of the `conv1` module (PyTorch-facing I/O is NCHW).
# ---------------------------------------------------------------------------
def conv1_forward(x_nchw, w, gamma, beta, rmean, rvar):
    N, Cin, H, W = x_nchw.shape
    Cout, _, KH, KW = w.shape
    assert (Cin, KH, KW) == (3, 7, 7) and Cout == 64
    S, PAD = 2, 3
    Hc = (H + 2 * PAD - KH) // S + 1
    Wc = (W + 2 * PAD - KW) // S + 1
    assert Hc % 2 == 0 and Wc % 2 == 0, "stem expects H, W multiples of 4"
    Ho, Wo = Hc // 2, Wc // 2
    assert Ho % 2 == 0, "stem expects H multiple of 8"

    T = Wo                                   # conv-column pairs per row
    Tp = _round_up(T, 16)                    # sublane-aligned pair count
    Kp = 2 * KW * Cin                        # 42 = two pixels' (kw, c) patch
    tr = next(d for d in (8, 4, 2) if Ho % d == 0)   # pooled rows per band
    nb = Ho // tr
    R = 2 * tr + 1

    # ---- cheap XLA plumbing on the small raw input (bf16 first) ----
    x_nhwc = jnp.transpose(x_nchw.astype(jnp.bfloat16), (0, 2, 3, 1))
    # conv zero-pad (3) + 2 extra top rows so the recomputed band-0 halo conv row
    # stays in-bounds (it is masked out of the max inside the kernel).
    xp = jnp.pad(x_nhwc, ((0, 0), (PAD + 2, PAD), (PAD, PAD), (0, 0)))
    Hq = H + 8

    # row-level paired im2col: B[n,q,t, p*21+kw*3+c] = xp[n, q, 4t+2p+kw, c]
    cols = []
    for p2 in range(2):
        for kw in range(KW):
            st = 2 * p2 + kw
            cols.append(xp[:, :, st:st + 4 * (T - 1) + 1:4, :])
    Brow = jnp.stack(cols, axis=3).reshape(N, Hq, T, Kp)
    if Tp != T:
        Brow = jnp.pad(Brow, ((0, 0), (0, 0), (0, Tp - T), (0, 0)))
    Brow = Brow.reshape(N, Hq // 2, 2, Tp, Kp)
    Be = Brow[:, :, 0].reshape(N, (Hq // 2) * Tp, Kp)   # even padded rows
    Bo = Brow[:, :, 1].reshape(N, (Hq // 2) * Tp, Kp)   # odd  padded rows

    # ---- fold eval-mode BatchNorm: scale into weights, shift into epilogue ----
    scale = gamma / jnp.sqrt(rvar + EPS)
    shift = beta - rmean * scale
    wt = jnp.transpose(w * scale[:, None, None, None],
                       (2, 3, 1, 0)).reshape(KH, KW * Cin, Cout)     # (7,21,64)
    w2 = (jnp.zeros((KH, Kp, 2 * Cout), jnp.float32)
          .at[:, :KW * Cin, :Cout].set(wt)
          .at[:, KW * Cin:, Cout:].set(wt)).astype(jnp.bfloat16)     # (7,42,128)
    shift2 = jnp.concatenate([shift, shift]).reshape(1, 2 * Cout).astype(jnp.float32)

    kernel = functools.partial(_stem_kernel, tr=tr, t_real=T, t_pad=Tp)
    out = pl.pallas_call(
        kernel,
        out_shape=jax.ShapeDtypeStruct((N, Ho, Wo, Cout), jnp.float32),
        grid_spec=pltpu.PrefetchScalarGridSpec(
            num_scalar_prefetch=0,
            grid=(N, nb),
            in_specs=[
                pl.BlockSpec((1, 2 * tr * Tp, Kp), lambda n, b: (n, b, 0)),
                pl.BlockSpec((1, 4 * Tp, Kp),
                             lambda n, b: (n, (b + 1) * (tr // 2), 0)),
                pl.BlockSpec((1, 2 * tr * Tp, Kp), lambda n, b: (n, b, 0)),
                pl.BlockSpec((1, 4 * Tp, Kp),
                             lambda n, b: (n, (b + 1) * (tr // 2), 0)),
                pl.BlockSpec((KH, Kp, 2 * Cout), lambda n, b: (0, 0, 0)),
                pl.BlockSpec((1, 2 * Cout), lambda n, b: (0, 0)),
            ],
            out_specs=pl.BlockSpec((1, tr, Wo, Cout), lambda n, b: (n, b, 0, 0)),
            scratch_shapes=[pltpu.VMEM((R * Tp, 2 * Cout), jnp.float32)],
        ),
        compiler_params=pltpu.CompilerParams(
            dimension_semantics=("parallel", "parallel"),
            vmem_limit_bytes=48 * 1024 * 1024),
    )(Be, Be, Bo, Bo, w2, shift2)

    return jnp.transpose(out, (0, 3, 1, 2))              # NHWC -> NCHW


# pure-JAX reference for the correctness check
def _reference(x, w, gamma, beta, rmean, rvar):
    y = jax.lax.conv_general_dilated(x, w, (2, 2), [(3, 3), (3, 3)],
                                     dimension_numbers=("NCHW", "OIHW", "NCHW"))
    scale = (gamma / jnp.sqrt(rvar + EPS)).reshape(1, -1, 1, 1)
    shift = (beta - rmean * gamma / jnp.sqrt(rvar + EPS)).reshape(1, -1, 1, 1)
    y = jnp.maximum(y * scale + shift, 0.0)
    return jax.lax.reduce_window(y, -jnp.inf, jax.lax.max,
                                 (1, 1, 3, 3), (1, 1, 2, 2),
                                 [(0, 0), (0, 0), (1, 1), (1, 1)])


if __name__ == "__main__":
    key = jax.random.PRNGKey(0)
    k1, k2, k3, k4, k5, k6 = jax.random.split(key, 6)

    # deterministic synthetic parameters (shapes from the module __init__)
    w = jax.random.normal(k1, (64, 3, 7, 7), jnp.float32) * 0.05
    gamma = jax.random.uniform(k2, (64,), jnp.float32, 0.5, 1.5)
    beta = jax.random.normal(k3, (64,), jnp.float32) * 0.1
    rmean = jax.random.normal(k4, (64,), jnp.float32) * 0.1
    rvar = jax.random.uniform(k5, (64,), jnp.float32, 0.5, 1.5)

    # small example input consistent with the module (3 input channels)
    x = jax.random.normal(k6, (2, 3, 32, 32), jnp.float32)

    out = jax.block_until_ready(conv1_forward(x, w, gamma, beta, rmean, rvar))
    ref = jax.block_until_ready(_reference(x, w, gamma, beta, rmean, rvar))

    assert out.shape == (2, 64, 8, 8), out.shape
    # bf16 matmul inputs (f32 accumulation) -> slightly relaxed tolerances
    np.testing.assert_allclose(np.asarray(out), np.asarray(ref),
                               rtol=2e-2, atol=2e-2)
    print("KERNEL_OK")
</pallas_src>

<mosaic_0001>
module attributes {stable_mosaic.version = 11 : i64} {
  func.func @_stem_kernel(%arg0: i32, %arg1: i32, %arg2: memref<1x256x42xbf16, #tpu.memory_space<vmem>>, %arg3: memref<1x64x42xbf16, #tpu.memory_space<vmem>>, %arg4: memref<1x256x42xbf16, #tpu.memory_space<vmem>>, %arg5: memref<1x64x42xbf16, #tpu.memory_space<vmem>>, %arg6: memref<7x42x128xbf16, #tpu.memory_space<vmem>>, %arg7: memref<1x128xf32, #tpu.memory_space<vmem>>, %arg8: memref<1x8x8x64xf32, #tpu.memory_space<vmem>>, %arg9: memref<272x128xf32, #tpu.memory_space<vmem>>) attributes {dimension_semantics = [#tpu.dimension_semantics<parallel>, #tpu.dimension_semantics<parallel>], iteration_bounds = array<i64: 2, 1>, scalar_prefetch = 0 : i64, scratch_operands = 1 : i64, tpu.core_type = #tpu.core_type<tc>, window_params = [{transform_indices = @transform_0, window_bounds = array<i64: 1, 256, 42>}, {transform_indices = @transform_1, window_bounds = array<i64: 1, 64, 42>}, {transform_indices = @transform_2, window_bounds = array<i64: 1, 256, 42>}, {transform_indices = @transform_3, window_bounds = array<i64: 1, 64, 42>}, {pipeline_mode = #tpu.pipeline_mode<synchronous>, transform_indices = @transform_4, window_bounds = array<i64: 7, 42, 128>}, {pipeline_mode = #tpu.pipeline_mode<synchronous>, transform_indices = @transform_5, window_bounds = array<i64: 1, 128>}, {transform_indices = @transform_6, window_bounds = array<i64: 1, 8, 8, 64>}]} {
    %c0 = arith.constant 0 : index
    %c0_0 = arith.constant 0 : index
    %c0_1 = arith.constant 0 : index
    %0 = vector.load %arg2[%c0, %c0_0, %c0_1] : memref<1x256x42xbf16, #tpu.memory_space<vmem>>, vector<1x256x42xbf16>
    %1 = vector.shape_cast %0 : vector<1x256x42xbf16> to vector<256x42xbf16>
    %c0_2 = arith.constant 0 : index
    %c0_3 = arith.constant 0 : index
    %c0_4 = arith.constant 0 : index
    %2 = vector.load %arg3[%c0_2, %c0_3, %c0_4] : memref<1x64x42xbf16, #tpu.memory_space<vmem>>, vector<1x64x42xbf16>
    %3 = vector.shape_cast %2 : vector<1x64x42xbf16> to vector<64x42xbf16>
    %4 = tpu.concatenate %1, %3 in 0 : vector<256x42xbf16>, vector<64x42xbf16> -> vector<320x42xbf16>
    %c0_5 = arith.constant 0 : index
    %c0_6 = arith.constant 0 : index
    %c0_7 = arith.constant 0 : index
    %5 = vector.load %arg4[%c0_5, %c0_6, %c0_7] : memref<1x256x42xbf16, #tpu.memory_space<vmem>>, vector<1x256x42xbf16>
    %6 = vector.shape_cast %5 : vector<1x256x42xbf16> to vector<256x42xbf16>
    %c0_8 = arith.constant 0 : index
    %c0_9 = arith.constant 0 : index
    %c0_10 = arith.constant 0 : index
    %7 = vector.load %arg5[%c0_8, %c0_9, %c0_10] : memref<1x64x42xbf16, #tpu.memory_space<vmem>>, vector<1x64x42xbf16>
    %8 = vector.shape_cast %7 : vector<1x64x42xbf16> to vector<64x42xbf16>
    %9 = tpu.concatenate %6, %8 in 0 : vector<256x42xbf16>, vector<64x42xbf16> -> vector<320x42xbf16>
    %10 = vector.extract_strided_slice %4 {offsets = [0, 0], sizes = [272, 42], strides = [1, 1]} : vector<320x42xbf16> to vector<272x42xbf16>
    %c0_11 = arith.constant 0 : index
    %c0_12 = arith.constant 0 : index
    %c0_13 = arith.constant 0 : index
    %11 = vector.load %arg6[%c0_11, %c0_12, %c0_13] : memref<7x42x128xbf16, #tpu.memory_space<vmem>>, vector<1x42x128xbf16>
    %12 = vector.shape_cast %11 : vector<1x42x128xbf16> to vector<42x128xbf16>
    %cst = arith.constant dense<0.000000e+00> : vector<272x128xf32>
    %13 = tpu.matmul %10, %12, %cst {dimension_numbers = #tpu.dot_dimension_numbers<[1], [0], [0], [1], [0, 0, 1, 1], [], []>} : vector<272x42xbf16>, vector<42x128xbf16>, vector<272x128xf32> -> vector<272x128xf32>
    %c0_14 = arith.constant 0 : index
    %c0_15 = arith.constant 0 : index
    %14 = vector.load %arg9[%c0_14, %c0_15] : memref<272x128xf32, #tpu.memory_space<vmem>>, vector<272x128xf32>
    tpu.vector_store %arg9[%c0_14, %c0_15], %13 {strides = array<i32>} : memref<272x128xf32, #tpu.memory_space<vmem>>, vector<272x128xf32>,
    %15 = vector.extract_strided_slice %9 {offsets = [0, 0], sizes = [272, 42], strides = [1, 1]} : vector<320x42xbf16> to vector<272x42xbf16>
    %c1 = arith.constant 1 : index
    %c0_16 = arith.constant 0 : index
    %c0_17 = arith.constant 0 : index
    %16 = vector.load %arg6[%c1, %c0_16, %c0_17] : memref<7x42x128xbf16, #tpu.memory_space<vmem>>, vector<1x42x128xbf16>
    %17 = vector.shape_cast %16 : vector<1x42x128xbf16> to vector<42x128xbf16>
    %cst_18 = arith.constant dense<0.000000e+00> : vector<272x128xf32>
    %18 = tpu.matmul %15, %17, %cst_18 {dimension_numbers = #tpu.dot_dimension_numbers<[1], [0], [0], [1], [0, 0, 1, 1], [], []>} : vector<272x42xbf16>, vector<42x128xbf16>, vector<272x128xf32> -> vector<272x128xf32>
    %c0_19 = arith.constant 0 : index
    %c0_20 = arith.constant 0 : index
    %19 = vector.load %arg9[%c0_19, %c0_20] : memref<272x128xf32, #tpu.memory_space<vmem>>, vector<272x128xf32>
    %20 = arith.addf %19, %18 : vector<272x128xf32>
    %c0_21 = arith.constant 0 : index
    %c0_22 = arith.constant 0 : index
    %21 = vector.load %arg9[%c0_21, %c0_22] : memref<272x128xf32, #tpu.memory_space<vmem>>, vector<272x128xf32>
    tpu.vector_store %arg9[%c0_21, %c0_22], %20 {strides = array<i32>} : memref<272x128xf32, #tpu.memory_space<vmem>>, vector<272x128xf32>,
    %22 = vector.extract_strided_slice %4 {offsets = [16, 0], sizes = [272, 42], strides = [1, 1]} : vector<320x42xbf16> to vector<272x42xbf16>
    %c2 = arith.constant 2 : index
    %c0_23 = arith.constant 0 : index
    %c0_24 = arith.constant 0 : index
    %23 = vector.load %arg6[%c2, %c0_23, %c0_24] : memref<7x42x128xbf16, #tpu.memory_space<vmem>>, vector<1x42x128xbf16>
    %24 = vector.shape_cast %23 : vector<1x42x128xbf16> to vector<42x128xbf16>
    %cst_25 = arith.constant dense<0.000000e+00> : vector<272x128xf32>
    %25 = tpu.matmul %22, %24, %cst_25 {dimension_numbers = #tpu.dot_dimension_numbers<[1], [0], [0], [1], [0, 0, 1, 1], [], []>} : vector<272x42xbf16>, vector<42x128xbf16>, vector<272x128xf32> -> vector<272x128xf32>
    %c0_26 = arith.constant 0 : index
    %c0_27 = arith.constant 0 : index
    %26 = vector.load %arg9[%c0_26, %c0_27] : memref<272x128xf32, #tpu.memory_space<vmem>>, vector<272x128xf32>
    %27 = arith.addf %26, %25 : vector<272x128xf32>
    %c0_28 = arith.constant 0 : index
    %c0_29 = arith.constant 0 : index
    %28 = vector.load %arg9[%c0_28, %c0_29] : memref<272x128xf32, #tpu.memory_space<vmem>>, vector<272x128xf32>
    tpu.vector_store %arg9[%c0_28, %c0_29], %27 {strides = array<i32>} : memref<272x128xf32, #tpu.memory_space<vmem>>, vector<272x128xf32>,
    %29 = vector.extract_strided_slice %9 {offsets = [16, 0], sizes = [272, 42], strides = [1, 1]} : vector<320x42xbf16> to vector<272x42xbf16>
    %c3 = arith.constant 3 : index
    %c0_30 = arith.constant 0 : index
    %c0_31 = arith.constant 0 : index
    %30 = vector.load %arg6[%c3, %c0_30, %c0_31] : memref<7x42x128xbf16, #tpu.memory_space<vmem>>, vector<1x42x128xbf16>
    %31 = vector.shape_cast %30 : vector<1x42x128xbf16> to vector<42x128xbf16>
    %cst_32 = arith.constant dense<0.000000e+00> : vector<272x128xf32>
    %32 = tpu.matmul %29, %31, %cst_32 {dimension_numbers = #tpu.dot_dimension_numbers<[1], [0], [0], [1], [0, 0, 1, 1], [], []>} : vector<272x42xbf16>, vector<42x128xbf16>, vector<272x128xf32> -> vector<272x128xf32>
    %c0_33 = arith.constant 0 : index
    %c0_34 = arith.constant 0 : index
    %33 = vector.load %arg9[%c0_33, %c0_34] : memref<272x128xf32, #tpu.memory_space<vmem>>, vector<272x128xf32>
    %34 = arith.addf %33, %32 : vector<272x128xf32>
    %c0_35 = arith.constant 0 : index
    %c0_36 = arith.constant 0 : index
    %35 = vector.load %arg9[%c0_35, %c0_36] : memref<272x128xf32, #tpu.memory_space<vmem>>, vector<272x128xf32>
    tpu.vector_store %arg9[%c0_35, %c0_36], %34 {strides = array<i32>} : memref<272x128xf32, #tpu.memory_space<vmem>>, vector<272x128xf32>,
    %36 = vector.extract_strided_slice %4 {offsets = [32, 0], sizes = [272, 42], strides = [1, 1]} : vector<320x42xbf16> to vector<272x42xbf16>
    %c4 = arith.constant 4 : index
    %c0_37 = arith.constant 0 : index
    %c0_38 = arith.constant 0 : index
    %37 = vector.load %arg6[%c4, %c0_37, %c0_38] : memref<7x42x128xbf16, #tpu.memory_space<vmem>>, vector<1x42x128xbf16>
    %38 = vector.shape_cast %37 : vector<1x42x128xbf16> to vector<42x128xbf16>
    %cst_39 = arith.constant dense<0.000000e+00> : vector<272x128xf32>
    %39 = tpu.matmul %36, %38, %cst_39 {dimension_numbers = #tpu.dot_dimension_numbers<[1], [0], [0], [1], [0, 0, 1, 1], [], []>} : vector<272x42xbf16>, vector<42x128xbf16>, vector<272x128xf32> -> vector<272x128xf32>
    %c0_40 = arith.constant 0 : index
    %c0_41 = arith.constant 0 : index
    %40 = vector.load %arg9[%c0_40, %c0_41] : memref<272x128xf32, #tpu.memory_space<vmem>>, vector<272x128xf32>
    %41 = arith.addf %40, %39 : vector<272x128xf32>
    %c0_42 = arith.constant 0 : index
    %c0_43 = arith.constant 0 : index
    %42 = vector.load %arg9[%c0_42, %c0_43] : memref<272x128xf32, #tpu.memory_space<vmem>>, vector<272x128xf32>
    tpu.vector_store %arg9[%c0_42, %c0_43], %41 {strides = array<i32>} : memref<272x128xf32, #tpu.memory_space<vmem>>, vector<272x128xf32>,
    %43 = vector.extract_strided_slice %9 {offsets = [32, 0], sizes = [272, 42], strides = [1, 1]} : vector<320x42xbf16> to vector<272x42xbf16>
    %c5 = arith.constant 5 : index
    %c0_44 = arith.constant 0 : index
    %c0_45 = arith.constant 0 : index
    %44 = vector.load %arg6[%c5, %c0_44, %c0_45] : memref<7x42x128xbf16, #tpu.memory_space<vmem>>, vector<1x42x128xbf16>
    %45 = vector.shape_cast %44 : vector<1x42x128xbf16> to vector<42x128xbf16>
    %cst_46 = arith.constant dense<0.000000e+00> : vector<272x128xf32>
    %46 = tpu.matmul %43, %45, %cst_46 {dimension_numbers = #tpu.dot_dimension_numbers<[1], [0], [0], [1], [0, 0, 1, 1], [], []>} : vector<272x42xbf16>, vector<42x128xbf16>, vector<272x128xf32> -> vector<272x128xf32>
    %c0_47 = arith.constant 0 : index
    %c0_48 = arith.constant 0 : index
    %47 = vector.load %arg9[%c0_47, %c0_48] : memref<272x128xf32, #tpu.memory_space<vmem>>, vector<272x128xf32>
    %48 = arith.addf %47, %46 : vector<272x128xf32>
    %c0_49 = arith.constant 0 : index
    %c0_50 = arith.constant 0 : index
    %49 = vector.load %arg9[%c0_49, %c0_50] : memref<272x128xf32, #tpu.memory_space<vmem>>, vector<272x128xf32>
    tpu.vector_store %arg9[%c0_49, %c0_50], %48 {strides = array<i32>} : memref<272x128xf32, #tpu.memory_space<vmem>>, vector<272x128xf32>,
    %50 = vector.extract_strided_slice %4 {offsets = [48, 0], sizes = [272, 42], strides = [1, 1]} : vector<320x42xbf16> to vector<272x42xbf16>
    %c6 = arith.constant 6 : index
    %c0_51 = arith.constant 0 : index
    %c0_52 = arith.constant 0 : index
    %51 = vector.load %arg6[%c6, %c0_51, %c0_52] : memref<7x42x128xbf16, #tpu.memory_space<vmem>>, vector<1x42x128xbf16>
    %52 = vector.shape_cast %51 : vector<1x42x128xbf16> to vector<42x128xbf16>
    %cst_53 = arith.constant dense<0.000000e+00> : vector<272x128xf32>
    %53 = tpu.matmul %50, %52, %cst_53 {dimension_numbers = #tpu.dot_dimension_numbers<[1], [0], [0], [1], [0, 0, 1, 1], [], []>} : vector<272x42xbf16>, vector<42x128xbf16>, vector<272x128xf32> -> vector<272x128xf32>
    %c0_54 = arith.constant 0 : index
    %c0_55 = arith.constant 0 : index
    %54 = vector.load %arg9[%c0_54, %c0_55] : memref<272x128xf32, #tpu.memory_space<vmem>>, vector<272x128xf32>
    %55 = arith.addf %54, %53 : vector<272x128xf32>
    %c0_56 = arith.constant 0 : index
    %c0_57 = arith.constant 0 : index
    %56 = vector.load %arg9[%c0_56, %c0_57] : memref<272x128xf32, #tpu.memory_space<vmem>>, vector<272x128xf32>
    tpu.vector_store %arg9[%c0_56, %c0_57], %55 {strides = array<i32>} : memref<272x128xf32, #tpu.memory_space<vmem>>, vector<272x128xf32>,
    %c0_58 = arith.constant 0 : index
    %c0_59 = arith.constant 0 : index
    %57 = vector.load %arg9[%c0_58, %c0_59] : memref<272x128xf32, #tpu.memory_space<vmem>>, vector<272x128xf32>
    %c0_60 = arith.constant 0 : index
    %c0_61 = arith.constant 0 : index
    %58 = vector.load %arg7[%c0_60, %c0_61] : memref<1x128xf32, #tpu.memory_space<vmem>>, vector<1x128xf32>
    %59 = vector.broadcast %58 : vector<1x128xf32> to vector<272x128xf32>
    %60 = arith.addf %57, %59 : vector<272x128xf32>
    %cst_62 = arith.constant 0.000000e+00 : f32
    %61 = vector.broadcast %cst_62 : f32 to vector<272x128xf32>
    %62 = arith.maximumf %60, %61 : vector<272x128xf32>
    %63 = vector.extract_strided_slice %62 {offsets = [0, 0], sizes = [272, 64], strides = [1, 1]} : vector<272x128xf32> to vector<272x64xf32>
    %64 = vector.extract_strided_slice %62 {offsets = [0, 64], sizes = [272, 64], strides = [1, 1]} : vector<272x128xf32> to vector<272x64xf32>
    %c1_i32 = arith.constant 1 : i32
    %65 = tpu.dynamic_rotate %64 by %c1_i32 dim 0 : vector<272x64xf32>, i32 -> vector<272x64xf32>
    %66 = tpu.iota {dimensions = array<i32: 0>} : vector<272x64xi32>
    %c16_i32 = arith.constant 16 : i32
    %c0_i32 = arith.constant 0 : i32
    %67 = arith.cmpi eq, %c16_i32, %c0_i32 : i32
    %c1_i32_63 = arith.constant 1 : i32
    %68 = arith.select %67, %c1_i32_63, %c16_i32 : i32
    %69 = vector.broadcast %68 : i32 to vector<272x64xi32>
    %70 = arith.remsi %66, %69 : vector<272x64xi32>
    %c0_i32_64 = arith.constant 0 : i32
    %71 = vector.broadcast %c0_i32_64 : i32 to vector<272x64xi32>
    %72 = arith.cmpi ne, %70, %71 : vector<272x64xi32>
    %c0_i32_65 = arith.constant 0 : i32
    %73 = vector.broadcast %c0_i32_65 : i32 to vector<272x64xi32>
    %74 = arith.cmpi slt, %70, %73 : vector<272x64xi32>
    %c0_i32_66 = arith.constant 0 : i32
    %75 = arith.cmpi slt, %68, %c0_i32_66 : i32
    %76 = vector.broadcast %75 : i1 to vector<272x64xi1>
    %77 = vector.broadcast %76 : vector<272x64xi1> to vector<272x64xi1>
    %78 = arith.xori %74, %77 : vector<272x64xi1>
    %79 = arith.andi %78, %72 : vector<272x64xi1>
    %80 = vector.broadcast %68 : i32 to vector<272x64xi32>
    %81 = arith.addi %70, %80 : vector<272x64xi32>
    %82 = arith.select %79, %81, %70 : vector<272x64xi1>, vector<272x64xi32>
    %c0_i32_67 = arith.constant 0 : i32
    %83 = vector.broadcast %c0_i32_67 : i32 to vector<272x64xi32>
    %84 = arith.cmpi eq, %82, %83 : vector<272x64xi32>
    %85 = arith.select %84, %64, %65 : vector<272x64xi1>, vector<272x64xf32>
    %86 = arith.maximumf %63, %64 : vector<272x64xf32>
    %87 = arith.maximumf %86, %85 : vector<272x64xf32>
    %c0_i32_68 = arith.constant 0 : i32
    %88 = arith.cmpi eq, %arg1, %c0_i32_68 : i32
    %89 = vector.extract_strided_slice %87 {offsets = [16, 0], sizes = [16, 64], strides = [1, 1]} : vector<272x64xf32> to vector<16x64xf32>
    %90 = vector.extract_strided_slice %87 {offsets = [0, 0], sizes = [16, 64], strides = [1, 1]} : vector<272x64xf32> to vector<16x64xf32>
    %91 = arith.select %88, %89, %90 : vector<16x64xf32>
    %92 = vector.extract_strided_slice %87 {offsets = [16, 0], sizes = [16, 64], strides = [1, 1]} : vector<272x64xf32> to vector<16x64xf32>
    %93 = arith.maximumf %91, %92 : vector<16x64xf32>
    %94 = vector.extract_strided_slice %87 {offsets = [32, 0], sizes = [16, 64], strides = [1, 1]} : vector<272x64xf32> to vector<16x64xf32>
    %95 = arith.maximumf %93, %94 : vector<16x64xf32>
    %96 = vector.extract_strided_slice %95 {offsets = [0, 0], sizes = [8, 64], strides = [1, 1]} : vector<16x64xf32> to vector<8x64xf32>
    %c0_69 = arith.constant 0 : index
    %c0_70 = arith.constant 0 : index
    %c0_71 = arith.constant 0 : index
    %c0_72 = arith.constant 0 : index
    %97 = vector.load %arg8[%c0_69, %c0_70, %c0_71, %c0_72] : memref<1x8x8x64xf32, #tpu.memory_space<vmem>>, vector<1x1x8x64xf32>
    %98 = vector.shape_cast %97 : vector<1x1x8x64xf32> to vector<8x64xf32>
    %99 = vector.shape_cast %96 : vector<8x64xf32> to vector<1x1x8x64xf32>
    tpu.vector_store %arg8[%c0_69, %c0_70, %c0_71, %c0_72], %99 {strides = array<i32>} : memref<1x8x8x64xf32, #tpu.memory_space<vmem>>, vector<1x1x8x64xf32>,
    %100 = vector.extract_strided_slice %87 {offsets = [32, 0], sizes = [16, 64], strides = [1, 1]} : vector<272x64xf32> to vector<16x64xf32>
    %101 = vector.extract_strided_slice %87 {offsets = [48, 0], sizes = [16, 64], strides = [1, 1]} : vector<272x64xf32> to vector<16x64xf32>
    %102 = arith.maximumf %100, %101 : vector<16x64xf32>
    %103 = vector.extract_strided_slice %87 {offsets = [64, 0], sizes = [16, 64], strides = [1, 1]} : vector<272x64xf32> to vector<16x64xf32>
    %104 = arith.maximumf %102, %103 : vector<16x64xf32>
    %105 = vector.extract_strided_slice %104 {offsets = [0, 0], sizes = [8, 64], strides = [1, 1]} : vector<16x64xf32> to vector<8x64xf32>
    %c0_73 = arith.constant 0 : index
    %c1_74 = arith.constant 1 : index
    %c0_75 = arith.constant 0 : index
    %c0_76 = arith.constant 0 : index
    %106 = vector.load %arg8[%c0_73, %c1_74, %c0_75, %c0_76] : memref<1x8x8x64xf32, #tpu.memory_space<vmem>>, vector<1x1x8x64xf32>
    %107 = vector.shape_cast %106 : vector<1x1x8x64xf32> to vector<8x64xf32>
    %108 = vector.shape_cast %105 : vector<8x64xf32> to vector<1x1x8x64xf32>
    tpu.vector_store %arg8[%c0_73, %c1_74, %c0_75, %c0_76], %108 {strides = array<i32>} : memref<1x8x8x64xf32, #tpu.memory_space<vmem>>, vector<1x1x8x64xf32>,
    %109 = vector.extract_strided_slice %87 {offsets = [64, 0], sizes = [16, 64], strides = [1, 1]} : vector<272x64xf32> to vector<16x64xf32>
    %110 = vector.extract_strided_slice %87 {offsets = [80, 0], sizes = [16, 64], strides = [1, 1]} : vector<272x64xf32> to vector<16x64xf32>
    %111 = arith.maximumf %109, %110 : vector<16x64xf32>
    %112 = vector.extract_strided_slice %87 {offsets = [96, 0], sizes = [16, 64], strides = [1, 1]} : vector<272x64xf32> to vector<16x64xf32>
    %113 = arith.maximumf %111, %112 : vector<16x64xf32>
    %114 = vector.extract_strided_slice %113 {offsets = [0, 0], sizes = [8, 64], strides = [1, 1]} : vector<16x64xf32> to vector<8x64xf32>
    %c0_77 = arith.constant 0 : index
    %c2_78 = arith.constant 2 : index
    %c0_79 = arith.constant 0 : index
    %c0_80 = arith.constant 0 : index
    %115 = vector.load %arg8[%c0_77, %c2_78, %c0_79, %c0_80] : memref<1x8x8x64xf32, #tpu.memory_space<vmem>>, vector<1x1x8x64xf32>
    %116 = vector.shape_cast %115 : vector<1x1x8x64xf32> to vector<8x64xf32>
    %117 = vector.shape_cast %114 : vector<8x64xf32> to vector<1x1x8x64xf32>
    tpu.vector_store %arg8[%c0_77, %c2_78, %c0_79, %c0_80], %117 {strides = array<i32>} : memref<1x8x8x64xf32, #tpu.memory_space<vmem>>, vector<1x1x8x64xf32>,
    %118 = vector.extract_strided_slice %87 {offsets = [96, 0], sizes = [16, 64], strides = [1, 1]} : vector<272x64xf32> to vector<16x64xf32>
    %119 = vector.extract_strided_slice %87 {offsets = [112, 0], sizes = [16, 64], strides = [1, 1]} : vector<272x64xf32> to vector<16x64xf32>
    %120 = arith.maximumf %118, %119 : vector<16x64xf32>
    %121 = vector.extract_strided_slice %87 {offsets = [128, 0], sizes = [16, 64], strides = [1, 1]} : vector<272x64xf32> to vector<16x64xf32>
    %122 = arith.maximumf %120, %121 : vector<16x64xf32>
    %123 = vector.extract_strided_slice %122 {offsets = [0, 0], sizes = [8, 64], strides = [1, 1]} : vector<16x64xf32> to vector<8x64xf32>
    %c0_81 = arith.constant 0 : index
    %c3_82 = arith.constant 3 : index
    %c0_83 = arith.constant 0 : index
    %c0_84 = arith.constant 0 : index
    %124 = vector.load %arg8[%c0_81, %c3_82, %c0_83, %c0_84] : memref<1x8x8x64xf32, #tpu.memory_space<vmem>>, vector<1x1x8x64xf32>
    %125 = vector.shape_cast %124 : vector<1x1x8x64xf32> to vector<8x64xf32>
    %126 = vector.shape_cast %123 : vector<8x64xf32> to vector<1x1x8x64xf32>
    tpu.vector_store %arg8[%c0_81, %c3_82, %c0_83, %c0_84], %126 {strides = array<i32>} : memref<1x8x8x64xf32, #tpu.memory_space<vmem>>, vector<1x1x8x64xf32>,
    %127 = vector.extract_strided_slice %87 {offsets = [128, 0], sizes = [16, 64], strides = [1, 1]} : vector<272x64xf32> to vector<16x64xf32>
    %128 = vector.extract_strided_slice %87 {offsets = [144, 0], sizes = [16, 64], strides = [1, 1]} : vector<272x64xf32> to vector<16x64xf32>
    %129 = arith.maximumf %127, %128 : vector<16x64xf32>
    %130 = vector.extract_strided_slice %87 {offsets = [160, 0], sizes = [16, 64], strides = [1, 1]} : vector<272x64xf32> to vector<16x64xf32>
    %131 = arith.maximumf %129, %130 : vector<16x64xf32>
    %132 = vector.extract_strided_slice %131 {offsets = [0, 0], sizes = [8, 64], strides = [1, 1]} : vector<16x64xf32> to vector<8x64xf32>
    %c0_85 = arith.constant 0 : index
    %c4_86 = arith.constant 4 : index
    %c0_87 = arith.constant 0 : index
    %c0_88 = arith.constant 0 : index
    %133 = vector.load %arg8[%c0_85, %c4_86, %c0_87, %c0_88] : memref<1x8x8x64xf32, #tpu.memory_space<vmem>>, vector<1x1x8x64xf32>
    %134 = vector.shape_cast %133 : vector<1x1x8x64xf32> to vector<8x64xf32>
    %135 = vector.shape_cast %132 : vector<8x64xf32> to vector<1x1x8x64xf32>
    tpu.vector_store %arg8[%c0_85, %c4_86, %c0_87, %c0_88], %135 {strides = array<i32>} : memref<1x8x8x64xf32, #tpu.memory_space<vmem>>, vector<1x1x8x64xf32>,
    %136 = vector.extract_strided_slice %87 {offsets = [160, 0], sizes = [16, 64], strides = [1, 1]} : vector<272x64xf32> to vector<16x64xf32>
    %137 = vector.extract_strided_slice %87 {offsets = [176, 0], sizes = [16, 64], strides = [1, 1]} : vector<272x64xf32> to vector<16x64xf32>
    %138 = arith.maximumf %136, %137 : vector<16x64xf32>
    %139 = vector.extract_strided_slice %87 {offsets = [192, 0], sizes = [16, 64], strides = [1, 1]} : vector<272x64xf32> to vector<16x64xf32>
    %140 = arith.maximumf %138, %139 : vector<16x64xf32>
    %141 = vector.extract_strided_slice %140 {offsets = [0, 0], sizes = [8, 64], strides = [1, 1]} : vector<16x64xf32> to vector<8x64xf32>
    %c0_89 = arith.constant 0 : index
    %c5_90 = arith.constant 5 : index
    %c0_91 = arith.constant 0 : index
    %c0_92 = arith.constant 0 : index
    %142 = vector.load %arg8[%c0_89, %c5_90, %c0_91, %c0_92] : memref<1x8x8x64xf32, #tpu.memory_space<vmem>>, vector<1x1x8x64xf32>
    %143 = vector.shape_cast %142 : vector<1x1x8x64xf32> to vector<8x64xf32>
    %144 = vector.shape_cast %141 : vector<8x64xf32> to vector<1x1x8x64xf32>
    tpu.vector_store %arg8[%c0_89, %c5_90, %c0_91, %c0_92], %144 {strides = array<i32>} : memref<1x8x8x64xf32, #tpu.memory_space<vmem>>, vector<1x1x8x64xf32>,
    %145 = vector.extract_strided_slice %87 {offsets = [192, 0], sizes = [16, 64], strides = [1, 1]} : vector<272x64xf32> to vector<16x64xf32>
    %146 = vector.extract_strided_slice %87 {offsets = [208, 0], sizes = [16, 64], strides = [1, 1]} : vector<272x64xf32> to vector<16x64xf32>
    %147 = arith.maximumf %145, %146 : vector<16x64xf32>
    %148 = vector.extract_strided_slice %87 {offsets = [224, 0], sizes = [16, 64], strides = [1, 1]} : vector<272x64xf32> to vector<16x64xf32>
    %149 = arith.maximumf %147, %148 : vector<16x64xf32>
    %150 = vector.extract_strided_slice %149 {offsets = [0, 0], sizes = [8, 64], strides = [1, 1]} : vector<16x64xf32> to vector<8x64xf32>
    %c0_93 = arith.constant 0 : index
    %c6_94 = arith.constant 6 : index
    %c0_95 = arith.constant 0 : index
    %c0_96 = arith.constant 0 : index
    %151 = vector.load %arg8[%c0_93, %c6_94, %c0_95, %c0_96] : memref<1x8x8x64xf32, #tpu.memory_space<vmem>>, vector<1x1x8x64xf32>
    %152 = vector.shape_cast %151 : vector<1x1x8x64xf32> to vector<8x64xf32>
    %153 = vector.shape_cast %150 : vector<8x64xf32> to vector<1x1x8x64xf32>
    tpu.vector_store %arg8[%c0_93, %c6_94, %c0_95, %c0_96], %153 {strides = array<i32>} : memref<1x8x8x64xf32, #tpu.memory_space<vmem>>, vector<1x1x8x64xf32>,
    %154 = vector.extract_strided_slice %87 {offsets = [224, 0], sizes = [16, 64], strides = [1, 1]} : vector<272x64xf32> to vector<16x64xf32>
    %155 = vector.extract_strided_slice %87 {offsets = [240, 0], sizes = [16, 64], strides = [1, 1]} : vector<272x64xf32> to vector<16x64xf32>
    %156 = arith.maximumf %154, %155 : vector<16x64xf32>
    %157 = vector.extract_strided_slice %87 {offsets = [256, 0], sizes = [16, 64], strides = [1, 1]} : vector<272x64xf32> to vector<16x64xf32>
    %158 = arith.maximumf %156, %157 : vector<16x64xf32>
    %159 = vector.extract_strided_slice %158 {offsets = [0, 0], sizes = [8, 64], strides = [1, 1]} : vector<16x64xf32> to vector<8x64xf32>
    %c0_97 = arith.constant 0 : index
    %c7 = arith.constant 7 : index
    %c0_98 = arith.constant 0 : index
    %c0_99 = arith.constant 0 : index
    %160 = vector.load %arg8[%c0_97, %c7, %c0_98, %c0_99] : memref<1x8x8x64xf32, #tpu.memory_space<vmem>>, vector<1x1x8x64xf32>
    %161 = vector.shape_cast %160 : vector<1x1x8x64xf32> to vector<8x64xf32>
    %162 = vector.shape_cast %159 : vector<8x64xf32> to vector<1x1x8x64xf32>
    tpu.vector_store %arg8[%c0_97, %c7, %c0_98, %c0_99], %162 {strides = array<i32>} : memref<1x8x8x64xf32, #tpu.memory_space<vmem>>, vector<1x1x8x64xf32>,
    return
  }
  func.func @transform_0(%arg0: i32, %arg1: i32) -> (i32, i32, i32) {
    %c0_i32 = arith.constant 0 : i32
    %c0_i32_0 = arith.constant 0 : i32
    return %arg0, %arg1, %c0_i32 : i32, i32, i32
  }
  func.func @transform_1(%arg0: i32, %arg1: i32) -> (i32, i32, i32) {
    %c1_i32 = arith.constant 1 : i32
    %0 = arith.addi %arg1, %c1_i32 : i32
    %c4_i32 = arith.constant 4 : i32
    %1 = arith.muli %0, %c4_i32 : i32
    %c0_i32 = arith.constant 0 : i32
    %c0_i32_0 = arith.constant 0 : i32
    return %arg0, %1, %c0_i32 : i32, i32, i32
  }
  func.func @transform_2(%arg0: i32, %arg1: i32) -> (i32, i32, i32) {
    %c0_i32 = arith.constant 0 : i32
    %c0_i32_0 = arith.constant 0 : i32
    return %arg0, %arg1, %c0_i32 : i32, i32, i32
  }
  func.func @transform_3(%arg0: i32, %arg1: i32) -> (i32, i32, i32) {
    %c1_i32 = arith.constant 1 : i32
    %0 = arith.addi %arg1, %c1_i32 : i32
    %c4_i32 = arith.constant 4 : i32
    %1 = arith.muli %0, %c4_i32 : i32
    %c0_i32 = arith.constant 0 : i32
    %c0_i32_0 = arith.constant 0 : i32
    return %arg0, %1, %c0_i32 : i32, i32, i32
  }
  func.func @transform_4(%arg0: i32, %arg1: i32) -> (i32, i32, i32) {
    %c0_i32 = arith.constant 0 : i32
    %c0_i32_0 = arith.constant 0 : i32
    %c0_i32_1 = arith.constant 0 : i32
    %c0_i32_2 = arith.constant 0 : i32
    return %c0_i32, %c0_i32_0, %c0_i32_1 : i32, i32, i32
  }
  func.func @transform_5(%arg0: i32, %arg1: i32) -> (i32, i32) {
    %c0_i32 = arith.constant 0 : i32
    %c0_i32_0 = arith.constant 0 : i32
    %c0_i32_1 = arith.constant 0 : i32
    return %c0_i32, %c0_i32_0 : i32, i32
  }
  func.func @transform_6(%arg0: i32, %arg1: i32) -> (i32, i32, i32, i32) {
    %c0_i32 = arith.constant 0 : i32
    %c0_i32_0 = arith.constant 0 : i32
    %c0_i32_1 = arith.constant 0 : i32
    return %arg0, %arg1, %c0_i32, %c0_i32_0 : i32, i32, i32, i32
  }
}

</mosaic_0001>

<llo_original>
// kernel: tpu_custom_call.1
$region0: #{tpu_custom_call.1}
  #allocation0 [shape = 'u32[]', space=smem, size = 0x4, offset = 0x4, fixed_abs, tag = 'smem constant byte address 0x4 - core index']
  #allocation1 [shape = 'u32[144,128]{1,0:T(1,128)}', space=vmem, size = 0x12000, scoped, tag = 'internal scratch']
  #allocation2 [shape = 'f32[272,128]{1,0:T(8,128)}', space=vmem, size = 0x22000, scoped, tag = 'scratch operand']
  %s0 = inlined_call_operand.vmem [shape: bf16[2,320,42], index: 0, kind: input, shape index: {}]
  %s1 = inlined_call_operand.vmem [shape: bf16[2,320,42], index: 1, kind: input, shape index: {}]
  %s2 = inlined_call_operand.vmem [shape: bf16[2,320,42], index: 2, kind: input, shape index: {}]
  %s3 = inlined_call_operand.vmem [shape: bf16[2,320,42], index: 3, kind: input, shape index: {}]
  %s4 = inlined_call_operand.vmem [shape: bf16[7,42,128], index: 4, kind: input, shape index: {}]
  %s5 = inlined_call_operand.vmem [shape: f32[1,128], index: 5, kind: input, shape index: {}]
  %s6 = inlined_call_operand.hbm [shape: f32[2,8,8,64], index: 6, kind: output, shape index: {}]
  %s7 = sld [smem:[#allocation0]]
  $region57: #{tpu_custom_call.1} parent=0
    _
  %s9 = ssub.s32 1, %s7
  %s10 = scalar_select 0, %s9, %s7
  $region1: #{tpu_custom_call.1} parent=0
    #allocation3 [shape = 'u8[65536]{0}', space=vmem, size = 0x10000, scoped, tag = 'output window, operand 0']
    #allocation4 [shape = 's32[2]{0}', space=sflag, size = 0x8, scoped, tag = 'scoped memory for tpu_custom_call.1']
    %11 = vsyncpa [#allocation4], 0
    %s12 = scalar_lea.sflag [#allocation4], 1
    %13 = vsyncpa %s12, 0
    loop: start=0, step=1, limit=4
    $region2: #{tpu_custom_call.1} parent=1 // loop_pre_header
      _
    $region3: #{tpu_custom_call.1} parent=1 // loop_header
      %s15 = sphi 0, %s19
      %p16 = scmp.ge.s32.totalorder %s15, 4
      %s22 = sphi 0, %s34
      %s23 = sphi 0, %s30
      %s24 = sphi 0, %s22
      %s25 = sphi 0, %s23
      %s26 = sphi 0, %s24
      %s27 = sphi 0, %s25
      %s39 = sphi 0, %s41
      %s42 = sphi 0, %s39
      %s43 = sphi 0, %s42
      %s59 = sphi 0, %s43
      %s71 = sphi 0, %s73
      %s74 = sphi 0, %s71
      %s75 = sphi 0, %s74
      %s91 = sphi 0, %s75
      %s99 = sphi 0, %s101
      %s102 = sphi 0, %s99
      %s103 = sphi 0, %s102
      %s119 = sphi 0, %s103
      %s131 = sphi 0, %s133
      %s134 = sphi 0, %s131
      %s135 = sphi 0, %s134
      %s151 = sphi 0, %s135
      %s155 = sphi 0, %s155
      %s157 = sphi 0, %s155
      %s158 = sphi 0, %s157
      %s172 = sphi 0, %s158
      %s176 = sphi 0, %s176
      %s178 = sphi 0, %s176
      %s179 = sphi 0, %s178
      %s193 = sphi 0, %s179
      %s201 = sphi 0, %s203
      %s204 = sphi 0, %s201
      %s205 = sphi 0, %s204
      %s221 = sphi 0, %s205
    $region4: #{tpu_custom_call.1} parent=1 // loop_header_branch
      %18 = sbr.rel (%p16) target = $region8
    $region5: #{tpu_custom_call.1} parent=1 // loop_body
      %s20 = ssub.s32 %s15, 1
      %s21 = ssub.s32 %s15, 2
      %s28 = sadd.s32 1, %s23
      %p29 = scmp.ge.s32.totalorder %s28, 1
      %s30 = scalar_select %p29, 0, %s28
      %s31 = sadd.s32 1, %s22
      %s32 = scalar_select %p29, %s31, %s22
      %p33 = scmp.ge.s32.totalorder %s32, 2
      %s34 = scalar_select %p33, 0, %s32
      %s35 = ssub.s32 %s22, %s34
      %s36 = ssub.s32 %s23, %s30
      %s37 = sor.u32 %s35, %s36
      %p38 = scmp.eq.s32.totalorder %s37, 0
      %s40 = sadd.s32 %s39, 1
      %s41 = scalar_select %p38, %s39, %s40
      %p44 = pneg %p38
      %p45 = scmp.eq.s32.totalorder %s15, 1
      %p46 = por %p44, %p45
      %p47 = scmp.ne.s32.totalorder %s39, %s42
      %p48 = scmp.eq.s32.totalorder %s15, 0
      %p49 = por %p47, %p48
      %p50 = scmp.ne.s32.totalorder %s39, %s42
      %p51 = scmp.eq.s32.totalorder %s20, 1
      %p52 = por %p50, %p51
      %p53 = scmp.ne.s32.totalorder %s42, %s43
      %p54 = scmp.eq.s32.totalorder %s20, 0
      %p55 = por %p53, %p54
      %p56 = scmp.ne.s32.totalorder %s42, %s43
      %p57 = scmp.eq.s32.totalorder %s21, 1
      %p58 = por %p56, %p57
      %p60 = scmp.ne.s32.totalorder %s43, %s59
      %p61 = scmp.eq.s32.totalorder %s21, 0
      %p62 = por %p60, %p61
      %s63 = sadd.s32 %s23, 1
      %s64 = smul.u32 %s63, 4
      %s65 = sadd.s32 %s30, 1
      %s66 = smul.u32 %s65, 4
      %s67 = ssub.s32 %s22, %s34
      %s68 = ssub.s32 %s64, %s66
      %s69 = sor.u32 %s67, %s68
      %p70 = scmp.eq.s32.totalorder %s69, 0
      %s72 = sadd.s32 %s71, 1
      %s73 = scalar_select %p70, %s71, %s72
      %p76 = pneg %p70
      %p77 = scmp.eq.s32.totalorder %s15, 1
      %p78 = por %p76, %p77
      %p79 = scmp.ne.s32.totalorder %s71, %s74
      %p80 = scmp.eq.s32.totalorder %s15, 0
      %p81 = por %p79, %p80
      %p82 = scmp.ne.s32.totalorder %s71, %s74
      %p83 = scmp.eq.s32.totalorder %s20, 1
      %p84 = por %p82, %p83
      %p85 = scmp.ne.s32.totalorder %s74, %s75
      %p86 = scmp.eq.s32.totalorder %s20, 0
      %p87 = por %p85, %p86
      %p88 = scmp.ne.s32.totalorder %s74, %s75
      %p89 = scmp.eq.s32.totalorder %s21, 1
      %p90 = por %p88, %p89
      %p92 = scmp.ne.s32.totalorder %s75, %s91
      %p93 = scmp.eq.s32.totalorder %s21, 0
      %p94 = por %p92, %p93
      %s95 = ssub.s32 %s22, %s34
      %s96 = ssub.s32 %s23, %s30
      %s97 = sor.u32 %s95, %s96
      %p98 = scmp.eq.s32.totalorder %s97, 0
      %s100 = sadd.s32 %s99, 1
      %s101 = scalar_select %p98, %s99, %s100
      %p104 = pneg %p98
      %p105 = scmp.eq.s32.totalorder %s15, 1
      %p106 = por %p104, %p105
      %p107 = scmp.ne.s32.totalorder %s99, %s102
      %p108 = scmp.eq.s32.totalorder %s15, 0
      %p109 = por %p107, %p108
      %p110 = scmp.ne.s32.totalorder %s99, %s102
      %p111 = scmp.eq.s32.totalorder %s20, 1
      %p112 = por %p110, %p111
      %p113 = scmp.ne.s32.totalorder %s102, %s103
      %p114 = scmp.eq.s32.totalorder %s20, 0
      %p115 = por %p113, %p114
      %p116 = scmp.ne.s32.totalorder %s102, %s103
      %p117 = scmp.eq.s32.totalorder %s21, 1
      %p118 = por %p116, %p117
      %p120 = scmp.ne.s32.totalorder %s103, %s119
      %p121 = scmp.eq.s32.totalorder %s21, 0
      %p122 = por %p120, %p121
      %s123 = sadd.s32 %s23, 1
      %s124 = smul.u32 %s123, 4
      %s125 = sadd.s32 %s30, 1
      %s126 = smul.u32 %s125, 4
      %s127 = ssub.s32 %s22, %s34
      %s128 = ssub.s32 %s124, %s126
      %s129 = sor.u32 %s127, %s128
      %p130 = scmp.eq.s32.totalorder %s129, 0
      %s132 = sadd.s32 %s131, 1
      %s133 = scalar_select %p130, %s131, %s132
      %p136 = pneg %p130
      %p137 = scmp.eq.s32.totalorder %s15, 1
      %p138 = por %p136, %p137
      %p139 = scmp.ne.s32.totalorder %s131, %s134
      %p140 = scmp.eq.s32.totalorder %s15, 0
      %p141 = por %p139, %p140
      %p142 = scmp.ne.s32.totalorder %s131, %s134
      %p143 = scmp.eq.s32.totalorder %s20, 1
      %p144 = por %p142, %p143
      %p145 = scmp.ne.s32.totalorder %s134, %s135
      %p146 = scmp.eq.s32.totalorder %s20, 0
      %p147 = por %p145, %p146
      %p148 = scmp.ne.s32.totalorder %s134, %s135
      %p149 = scmp.eq.s32.totalorder %s21, 1
      %p150 = por %p148, %p149
      %p152 = scmp.ne.s32.totalorder %s135, %s151
      %p153 = scmp.eq.s32.totalorder %s21, 0
      %p154 = por %p152, %p153
      %s156 = sadd.s32 %s155, 1
      %p159 = scmp.eq.s32.totalorder %s15, 1
      %p160 = scmp.ne.s32.totalorder %s155, %s157
      %p161 = scmp.eq.s32.totalorder %s15, 0
      %p162 = por %p160, %p161
      %p163 = scmp.ne.s32.totalorder %s155, %s157
      %p164 = scmp.eq.s32.totalorder %s20, 1
      %p165 = por %p163, %p164
      %p166 = scmp.ne.s32.totalorder %s157, %s158
      %p167 = scmp.eq.s32.totalorder %s20, 0
      %p168 = por %p166, %p167
      %p169 = scmp.ne.s32.totalorder %s157, %s158
      %p170 = scmp.eq.s32.totalorder %s21, 1
      %p171 = por %p169, %p170
      %p173 = scmp.ne.s32.totalorder %s158, %s172
      %p174 = scmp.eq.s32.totalorder %s21, 0
      %p175 = por %p173, %p174
      %s177 = sadd.s32 %s176, 1
      %p180 = scmp.eq.s32.totalorder %s15, 1
      %p181 = scmp.ne.s32.totalorder %s176, %s178
      %p182 = scmp.eq.s32.totalorder %s15, 0
      %p183 = por %p181, %p182
      %p184 = scmp.ne.s32.totalorder %s176, %s178
      %p185 = scmp.eq.s32.totalorder %s20, 1
      %p186 = por %p184, %p185
      %p187 = scmp.ne.s32.totalorder %s178, %s179
      %p188 = scmp.eq.s32.totalorder %s20, 0
      %p189 = por %p187, %p188
      %p190 = scmp.ne.s32.totalorder %s178, %s179
      %p191 = scmp.eq.s32.totalorder %s21, 1
      %p192 = por %p190, %p191
      %p194 = scmp.ne.s32.totalorder %s179, %s193
      %p195 = scmp.eq.s32.totalorder %s21, 0
      %p196 = por %p194, %p195
      %s197 = ssub.s32 %s22, %s34
      %s198 = ssub.s32 %s23, %s30
      %s199 = sor.u32 %s197, %s198
      %p200 = scmp.eq.s32.totalorder %s199, 0
      %s202 = sadd.s32 %s201, 1
      %s203 = scalar_select %p200, %s201, %s202
      %p206 = pneg %p200
      %p207 = scmp.eq.s32.totalorder %s15, 1
      %p208 = por %p206, %p207
      %p209 = scmp.ne.s32.totalorder %s201, %s204
      %p210 = scmp.eq.s32.totalorder %s15, 0
      %p211 = por %p209, %p210
      %p212 = scmp.ne.s32.totalorder %s201, %s204
      %p213 = scmp.eq.s32.totalorder %s20, 1
      %p214 = por %p212, %p213
      %p215 = scmp.ne.s32.totalorder %s204, %s205
      %p216 = scmp.eq.s32.totalorder %s20, 0
      %p217 = por %p215, %p216
      %p218 = scmp.ne.s32.totalorder %s204, %s205
      %p219 = scmp.eq.s32.totalorder %s21, 1
      %p220 = por %p218, %p219
      %p222 = scmp.ne.s32.totalorder %s205, %s221
      %p223 = scmp.eq.s32.totalorder %s21, 0
      %p224 = por %p222, %p223
      %p225 = scmp.le.s32.totalorder 1, %s15
      %p226 = scmp.lt.s32.totalorder %s15, 3
      %p227 = pnand %p225, %p226
      %p228 = pneg %p227
      // Predicated region
      $region9: #{tpu_custom_call.1} parent=5 // pred_check
        _
      $region10: #{tpu_custom_call.1} parent=5 // pred_check_branch
        %230 = sbr.rel (%p227) target = $region12
      $region11: #{tpu_custom_call.1} parent=5 // pred_region
        %s231 = ssub.s32 %s15, 1
        // Predicated region
        $region13: #{tpu_custom_call.1} parent=11 // pred_check
          %p232 = pneg %p168
        $region14: #{tpu_custom_call.1} parent=11 // pred_check_branch
          %234 = sbr.rel (%p232) target = $region16
        $region15: #{tpu_custom_call.1} parent=11 // pred_region
          _
        $region16: #{tpu_custom_call.1} parent=11 // pred_fallthru
          _
        // Predicated region
        $region17: #{tpu_custom_call.1} parent=11 // pred_check
          %p235 = pneg %p189
        $region18: #{tpu_custom_call.1} parent=11 // pred_check_branch
          %237 = sbr.rel (%p235) target = $region20
        $region19: #{tpu_custom_call.1} parent=11 // pred_region
          _
        $region20: #{tpu_custom_call.1} parent=11 // pred_fallthru
          _
      $region12: #{tpu_custom_call.1} parent=5 // pred_fallthru
        _
      %p238 = scmp.lt.s32.totalorder %s15, 2
      // Predicated region
      $region21: #{tpu_custom_call.1} parent=5 // pred_check
        %p239 = pneg %p238
      $region22: #{tpu_custom_call.1} parent=5 // pred_check_branch
        %241 = sbr.rel (%p239) target = $region24
      $region23: #{tpu_custom_call.1} parent=5 // pred_region
        // Predicated region
        $region25: #{tpu_custom_call.1} parent=23 // pred_check
          %p242 = pneg %p49
        $region26: #{tpu_custom_call.1} parent=23 // pred_check_branch
          %244 = sbr.rel (%p242) target = $region28
        $region27: #{tpu_custom_call.1} parent=23 // pred_region
          %s245 = smul.u32 32, %s23
          %s246 = ssub.s32 40, %s245
          %p247 = scmp.lt.s32.totalorder %s246, 32
          %s248 = scalar_select %p247, %s246, 32
          %s249 = smul.u32 64, %s248
          %p250 = scmp.lt.s32.totalorder %s22, 1
          %s251 = scalar_select %p250, %s22, 1
          %p252 = scmp.lt.s32.totalorder %s245, 39
          %s253 = scalar_select %p252, %s245, 39
          %s254 = smul.addr %s251, 40
          %s255 = sadd.s32 %s253, %s254
          %s256 = smul.addr %s255, 4
          %s257 = scalar_lea.vmem %s0, %s256
          %s258 = smul.u32 32, %s23
          %s259 = ssub.s32 40, %s258
          %p260 = scmp.lt.s32.totalorder %s259, 32
          %s261 = scalar_select %p260, %s259, 32
          %s262 = smul.u32 64, %s261
        $region28: #{tpu_custom_call.1} parent=23 // pred_fallthru
          _
        // Predicated region
        $region29: #{tpu_custom_call.1} parent=23 // pred_check
          %p263 = pneg %p81
        $region30: #{tpu_custom_call.1} parent=23 // pred_check_branch
          %265 = sbr.rel (%p263) target = $region32
        $region31: #{tpu_custom_call.1} parent=23 // pred_region
          %s266 = sadd.s32 %s23, 1
          %s267 = smul.u32 %s266, 4
          %s268 = smul.u32 8, %s267
          %p269 = scmp.lt.s32.totalorder %s22, 1
          %s270 = scalar_select %p269, %s22, 1
          %p271 = scmp.lt.s32.totalorder %s268, 39
          %s272 = scalar_select %p271, %s268, 39
          %s273 = smul.addr %s270, 40
          %s274 = sadd.s32 %s272, %s273
          %s275 = smul.addr %s274, 4
          %s276 = scalar_lea.vmem %s1, %s275
          %s277 = sadd.s32 %s23, 1
          %s278 = smul.u32 %s277, 4
          %s279 = smul.u32 8, %s278
        $region32: #{tpu_custom_call.1} parent=23 // pred_fallthru
          _
        // Predicated region
        $region33: #{tpu_custom_call.1} parent=23 // pred_check
          %p280 = pneg %p109
        $region34: #{tpu_custom_call.1} parent=23 // pred_check_branch
          %282 = sbr.rel (%p280) target = $region36
        $region35: #{tpu_custom_call.1} parent=23 // pred_region
          %s283 = smul.u32 32, %s23
          %s284 = ssub.s32 40, %s283
          %p285 = scmp.lt.s32.totalorder %s284, 32
          %s286 = scalar_select %p285, %s284, 32
          %s287 = smul.u32 64, %s286
          %p288 = scmp.lt.s32.totalorder %s22, 1
          %s289 = scalar_select %p288, %s22, 1
          %p290 = scmp.lt.s32.totalorder %s283, 39
          %s291 = scalar_select %p290, %s283, 39
          %s292 = smul.addr %s289, 40
          %s293 = sadd.s32 %s291, %s292
          %s294 = smul.addr %s293, 4
          %s295 = scalar_lea.vmem %s2, %s294
          %s296 = smul.u32 32, %s23
          %s297 = ssub.s32 40, %s296
          %p298 = scmp.lt.s32.totalorder %s297, 32
          %s299 = scalar_select %p298, %s297, 32
          %s300 = smul.u32 64, %s299
        $region36: #{tpu_custom_call.1} parent=23 // pred_fallthru
          _
        // Predicated region
        $region37: #{tpu_custom_call.1} parent=23 // pred_check
          %p301 = pneg %p141
        $region38: #{tpu_custom_call.1} parent=23 // pred_check_branch
          %303 = sbr.rel (%p301) target = $region40
        $region39: #{tpu_custom_call.1} parent=23 // pred_region
          %s304 = sadd.s32 %s23, 1
          %s305 = smul.u32 %s304, 4
          %s306 = smul.u32 8, %s305
          %p307 = scmp.lt.s32.totalorder %s22, 1
          %s308 = scalar_select %p307, %s22, 1
          %p309 = scmp.lt.s32.totalorder %s306, 39
          %s310 = scalar_select %p309, %s306, 39
          %s311 = smul.addr %s308, 40
          %s312 = sadd.s32 %s310, %s311
          %s313 = smul.addr %s312, 4
          %s314 = scalar_lea.vmem %s3, %s313
          %s315 = sadd.s32 %s23, 1
          %s316 = smul.u32 %s315, 4
          %s317 = smul.u32 8, %s316
        $region40: #{tpu_custom_call.1} parent=23 // pred_fallthru
          _
      $region24: #{tpu_custom_call.1} parent=5 // pred_fallthru
        _
      %p318 = scmp.le.s32.totalorder 1, %s15
      %p319 = scmp.lt.s32.totalorder %s15, 3
      %p320 = pnand %p318, %p319
      %p321 = pneg %p320
      // Predicated region
      $region41: #{tpu_custom_call.1} parent=5 // pred_check
        _
      $region42: #{tpu_custom_call.1} parent=5 // pred_check_branch
        %323 = sbr.rel (%p320) target = $region44
      $region43: #{tpu_custom_call.1} parent=5 // pred_region
        %s324 = ssub.s32 %s15, 1
        %s325 = smul.u32 32, %s25
        %s326 = ssub.s32 40, %s325
        %p327 = scmp.lt.s32.totalorder %s326, 32
        %s328 = scalar_select %p327, %s326, 32
        %s329 = smul.u32 64, %s328
        %p330 = scmp.lt.s32.totalorder %s24, 1
        %s331 = scalar_select %p330, %s24, 1
        %p332 = scmp.lt.s32.totalorder %s325, 39
        %s333 = scalar_select %p332, %s325, 39
        %s334 = smul.addr %s331, 40
        %s335 = sadd.s32 %s333, %s334
        %s336 = smul.addr %s335, 4
        %s337 = scalar_lea.vmem %s0, %s336
        %p338 = pneg %p55
        %p339 = pneg %p52
        %s340 = sadd.s32 %s25, 1
        %s341 = smul.u32 %s340, 4
        %s342 = smul.u32 8, %s341
        %p343 = scmp.lt.s32.totalorder %s24, 1
        %s344 = scalar_select %p343, %s24, 1
        %p345 = scmp.lt.s32.totalorder %s342, 39
        %s346 = scalar_select %p345, %s342, 39
        %s347 = smul.addr %s344, 40
        %s348 = sadd.s32 %s346, %s347
        %s349 = smul.addr %s348, 4
        %s350 = scalar_lea.vmem %s1, %s349
        %p351 = pneg %p87
        %p352 = pneg %p84
        %s353 = smul.u32 32, %s25
        %s354 = ssub.s32 40, %s353
        %p355 = scmp.lt.s32.totalorder %s354, 32
        %s356 = scalar_select %p355, %s354, 32
        %s357 = smul.u32 64, %s356
        %p358 = scmp.lt.s32.totalorder %s24, 1
        %s359 = scalar_select %p358, %s24, 1
        %p360 = scmp.lt.s32.totalorder %s353, 39
        %s361 = scalar_select %p360, %s353, 39
        %s362 = smul.addr %s359, 40
        %s363 = sadd.s32 %s361, %s362
        %s364 = smul.addr %s363, 4
        %s365 = scalar_lea.vmem %s2, %s364
        %p366 = pneg %p115
        %p367 = pneg %p112
        %s368 = sadd.s32 %s25, 1
        %s369 = smul.u32 %s368, 4
        %s370 = smul.u32 8, %s369
        %p371 = scmp.lt.s32.totalorder %s24, 1
        %s372 = scalar_select %p371, %s24, 1
        %p373 = scmp.lt.s32.totalorder %s370, 39
        %s374 = scalar_select %p373, %s370, 39
        %s375 = smul.addr %s372, 40
        %s376 = sadd.s32 %s374, %s375
        %s377 = smul.addr %s376, 4
        %s378 = scalar_lea.vmem %s3, %s377
        %p379 = pneg %p147
        %p380 = pneg %p144
        %p381 = pneg %p168
        %p382 = pneg %p165
        %p383 = pneg %p189
        %p384 = pneg %p186
        %p385 = pneg %p217
        %p386 = pneg %p214
        %s387 = sand.u32 %s204, 1
        %s388 = scalar_lea.sflag [#allocation4], %s387
        %s389 = sand.u32 %s204, 1
        %s390 = smul.addr %s389, 64
        %s391 = scalar_lea.vmem [#allocation3], %s390
        %s392 = smul.u32 32, %s25
        %s393 = ssub.s32 40, %s392
        %p394 = scmp.lt.s32.totalorder %s393, 32
        %s395 = scalar_select %p394, %s393, 32
        %s396 = smul.u32 64, %s395
        %p397 = scmp.lt.s32.totalorder %s24, 1
        %s398 = scalar_select %p397, %s24, 1
        %p399 = scmp.lt.s32.totalorder %s392, 39
        %s400 = scalar_select %p399, %s392, 39
        %s401 = smul.addr %s398, 40
        %s402 = sadd.s32 %s400, %s401
        %s403 = smul.addr %s402, 4
        %s404 = scalar_lea.vmem %s0, %s403
        %s405 = smul.u32 32, %s25
        %s406 = ssub.s32 40, %s405
        %p407 = scmp.lt.s32.totalorder %s406, 32
        %s408 = scalar_select %p407, %s406, 32
        %s409 = smul.u32 64, %s408
        %s410 = sadd.s32 %s25, 1
        %s411 = smul.u32 %s410, 4
        %s412 = smul.u32 8, %s411
        %p413 = scmp.lt.s32.totalorder %s24, 1
        %s414 = scalar_select %p413, %s24, 1
        %p415 = scmp.lt.s32.totalorder %s412, 39
        %s416 = scalar_select %p415, %s412, 39
        %s417 = smul.addr %s414, 40
        %s418 = sadd.s32 %s416, %s417
        %s419 = smul.addr %s418, 4
        %s420 = scalar_lea.vmem %s1, %s419
        %s421 = sadd.s32 %s25, 1
        %s422 = smul.u32 %s421, 4
        %s423 = smul.u32 8, %s422
        %s424 = smul.u32 32, %s25
        %s425 = ssub.s32 40, %s424
        %p426 = scmp.lt.s32.totalorder %s425, 32
        %s427 = scalar_select %p426, %s425, 32
        %s428 = smul.u32 64, %s427
        %p429 = scmp.lt.s32.totalorder %s24, 1
        %s430 = scalar_select %p429, %s24, 1
        %p431 = scmp.lt.s32.totalorder %s424, 39
        %s432 = scalar_select %p431, %s424, 39
        %s433 = smul.addr %s430, 40
        %s434 = sadd.s32 %s432, %s433
        %s435 = smul.addr %s434, 4
        %s436 = scalar_lea.vmem %s2, %s435
        %s437 = smul.u32 32, %s25
        %s438 = ssub.s32 40, %s437
        %p439 = scmp.lt.s32.totalorder %s438, 32
        %s440 = scalar_select %p439, %s438, 32
        %s441 = smul.u32 64, %s440
        %s442 = sadd.s32 %s25, 1
        %s443 = smul.u32 %s442, 4
        %s444 = smul.u32 8, %s443
        %p445 = scmp.lt.s32.totalorder %s24, 1
        %s446 = scalar_select %p445, %s24, 1
        %p447 = scmp.lt.s32.totalorder %s444, 39
        %s448 = scalar_select %p447, %s444, 39
        %s449 = smul.addr %s446, 40
        %s450 = sadd.s32 %s448, %s449
        %s451 = smul.addr %s450, 4
        %s452 = scalar_lea.vmem %s3, %s451
        %s453 = sadd.s32 %s25, 1
        %s454 = smul.u32 %s453, 4
        %s455 = smul.u32 8, %s454
        %s456 = smul.u32 8, %s25
        %v458 = vld [vmem:[%s404] sm:$0xf]
        %v459 = vld [vmem:[%s404 + $0x4] sm:$0xf]
        %v460 = vld [vmem:[%s404 + $0x8] sm:$0xf]
        %v461 = vld [vmem:[%s404 + $0xc] sm:$0xf]
        %v462 = vld [vmem:[%s404 + $0x10] sm:$0xf]
        %v463 = vld [vmem:[%s404 + $0x14] sm:$0xf]
        %v464 = vld [vmem:[%s404 + $0x18] sm:$0xf]
        %v465 = vld [vmem:[%s404 + $0x1c] sm:$0xf]
        %v466 = vld [vmem:[%s404 + $0x20] sm:$0xf]
        %v467 = vld [vmem:[%s404 + $0x24] sm:$0xf]
        %v468 = vld [vmem:[%s404 + $0x28] sm:$0xf]
        %v469 = vld [vmem:[%s404 + $0x2c] sm:$0xf]
        %v470 = vld [vmem:[%s404 + $0x30] sm:$0xf]
        %v471 = vld [vmem:[%s404 + $0x34] sm:$0xf]
        %v472 = vld [vmem:[%s404 + $0x38] sm:$0xf]
        %v473 = vld [vmem:[%s404 + $0x3c] sm:$0xf]
        %v474 = vld [vmem:[%s404 + $0x40] sm:$0xf]
        %v475 = vld [vmem:[%s404 + $0x44] sm:$0xf]
        %v476 = vld [vmem:[%s404 + $0x48] sm:$0xf]
        %v477 = vld [vmem:[%s404 + $0x4c] sm:$0xf]
        %v478 = vld [vmem:[%s404 + $0x50] sm:$0xf]
        %v479 = vld [vmem:[%s404 + $0x54] sm:$0xf]
        %v480 = vld [vmem:[%s404 + $0x58] sm:$0xf]
        %v481 = vld [vmem:[%s404 + $0x5c] sm:$0xf]
        %v482 = vld [vmem:[%s404 + $0x60] sm:$0xf]
        %v483 = vld [vmem:[%s404 + $0x64] sm:$0xf]
        %v484 = vld [vmem:[%s404 + $0x68] sm:$0xf]
        %v485 = vld [vmem:[%s404 + $0x6c] sm:$0xf]
        %v486 = vld [vmem:[%s404 + $0x70] sm:$0xf]
        %v487 = vld [vmem:[%s404 + $0x74] sm:$0xf]
        %v488 = vld [vmem:[%s404 + $0x78] sm:$0xf]
        %v489 = vld [vmem:[%s404 + $0x7c] sm:$0xf]
        %v490 = vld [vmem:[%s420] sm:$0xf]
        %v491 = vld [vmem:[%s420 + $0x4] sm:$0xf]
        %v492 = vld [vmem:[%s420 + $0x8] sm:$0xf]
        %v493 = vld [vmem:[%s420 + $0xc] sm:$0xf]
        %v494 = vld [vmem:[%s420 + $0x10] sm:$0xf]
        %v495 = vld [vmem:[%s420 + $0x14] sm:$0xf]
        %v496 = vld [vmem:[%s420 + $0x18] sm:$0xf]
        %v497 = vld [vmem:[%s420 + $0x1c] sm:$0xf]
        %v530 = vunpack.c.l.b16 %v458
        %v531 = vunpack.c.l.b16 %v459
        %v532 = vunpack.c.l.b16 %v460
        %v533 = vunpack.c.l.b16 %v461
        %v534 = vunpack.c.l.b16 %v462
        %v535 = vunpack.c.l.b16 %v463
        %v536 = vunpack.c.l.b16 %v464
        %v537 = vunpack.c.l.b16 %v465
        %v538 = vunpack.c.l.b16 %v466
        %v539 = vunpack.c.l.b16 %v467
        %v540 = vunpack.c.l.b16 %v468
        %v541 = vunpack.c.l.b16 %v469
        %v542 = vunpack.c.l.b16 %v470
        %v543 = vunpack.c.l.b16 %v471
        %v544 = vunpack.c.l.b16 %v472
        %v545 = vunpack.c.l.b16 %v473
        %v546 = vunpack.c.l.b16 %v474
        %v547 = vunpack.c.l.b16 %v475
        %v548 = vunpack.c.l.b16 %v476
        %v549 = vunpack.c.l.b16 %v477
        %v550 = vunpack.c.l.b16 %v478
        %v551 = vunpack.c.l.b16 %v479
        %v552 = vunpack.c.l.b16 %v480
        %v553 = vunpack.c.l.b16 %v481
        %v554 = vunpack.c.l.b16 %v482
        %v555 = vunpack.c.l.b16 %v483
        %v556 = vunpack.c.l.b16 %v484
        %v557 = vunpack.c.l.b16 %v485
        %v558 = vunpack.c.l.b16 %v486
        %v559 = vunpack.c.l.b16 %v487
        %v560 = vunpack.c.l.b16 %v488
        %v561 = vunpack.c.l.b16 %v489
        %v562 = vpack.c.b16 %v531, %v530
        %v563 = vpack.c.b16 %v533, %v532
        %v564 = vpack.c.b16 %v535, %v534
        %v565 = vpack.c.b16 %v537, %v536
        %v566 = vpack.c.b16 %v539, %v538
        %v567 = vpack.c.b16 %v541, %v540
        %v568 = vpack.c.b16 %v543, %v542
        %v569 = vpack.c.b16 %v545, %v544
        %v570 = vpack.c.b16 %v547, %v546
        %v571 = vpack.c.b16 %v549, %v548
        %v572 = vpack.c.b16 %v551, %v550
        %v573 = vpack.c.b16 %v553, %v552
        %v574 = vpack.c.b16 %v555, %v554
        %v575 = vpack.c.b16 %v557, %v556
        %v576 = vpack.c.b16 %v559, %v558
        %v577 = vpack.c.b16 %v561, %v560
        %v586 = vunpack.c.l.b16 %v490
        %v587 = vunpack.c.l.b16 %v491
        %v588 = vunpack.c.l.b16 %v492
        %v589 = vunpack.c.l.b16 %v493
        %v590 = vunpack.c.l.b16 %v494
        %v591 = vunpack.c.l.b16 %v495
        %v592 = vunpack.c.l.b16 %v496
        %v593 = vunpack.c.l.b16 %v497
        %v594 = vpack.c.b16 %v587, %v586
        %v595 = vpack.c.b16 %v589, %v588
        %v596 = vpack.c.b16 %v591, %v590
        %v597 = vpack.c.b16 %v593, %v592
        %v598 = vld [vmem:[%s436] sm:$0xf]
        %v599 = vld [vmem:[%s436 + $0x4] sm:$0xf]
        %v600 = vld [vmem:[%s436 + $0x8] sm:$0xf]
        %v601 = vld [vmem:[%s436 + $0xc] sm:$0xf]
        %v602 = vld [vmem:[%s436 + $0x10] sm:$0xf]
        %v603 = vld [vmem:[%s436 + $0x14] sm:$0xf]
        %v604 = vld [vmem:[%s436 + $0x18] sm:$0xf]
        %v605 = vld [vmem:[%s436 + $0x1c] sm:$0xf]
        %v606 = vld [vmem:[%s436 + $0x20] sm:$0xf]
        %v607 = vld [vmem:[%s436 + $0x24] sm:$0xf]
        %v608 = vld [vmem:[%s436 + $0x28] sm:$0xf]
        %v609 = vld [vmem:[%s436 + $0x2c] sm:$0xf]
        %v610 = vld [vmem:[%s436 + $0x30] sm:$0xf]
        %v611 = vld [vmem:[%s436 + $0x34] sm:$0xf]
        %v612 = vld [vmem:[%s436 + $0x38] sm:$0xf]
        %v613 = vld [vmem:[%s436 + $0x3c] sm:$0xf]
        %v614 = vld [vmem:[%s436 + $0x40] sm:$0xf]
        %v615 = vld [vmem:[%s436 + $0x44] sm:$0xf]
        %v616 = vld [vmem:[%s436 + $0x48] sm:$0xf]
        %v617 = vld [vmem:[%s436 + $0x4c] sm:$0xf]
        %v618 = vld [vmem:[%s436 + $0x50] sm:$0xf]
        %v619 = vld [vmem:[%s436 + $0x54] sm:$0xf]
        %v620 = vld [vmem:[%s436 + $0x58] sm:$0xf]
        %v621 = vld [vmem:[%s436 + $0x5c] sm:$0xf]
        %v622 = vld [vmem:[%s436 + $0x60] sm:$0xf]
        %v623 = vld [vmem:[%s436 + $0x64] sm:$0xf]
        %v624 = vld [vmem:[%s436 + $0x68] sm:$0xf]
        %v625 = vld [vmem:[%s436 + $0x6c] sm:$0xf]
        %v626 = vld [vmem:[%s436 + $0x70] sm:$0xf]
        %v627 = vld [vmem:[%s436 + $0x74] sm:$0xf]
        %v628 = vld [vmem:[%s436 + $0x78] sm:$0xf]
        %v629 = vld [vmem:[%s436 + $0x7c] sm:$0xf]
        %v630 = vld [vmem:[%s452] sm:$0xf]
        %v631 = vld [vmem:[%s452 + $0x4] sm:$0xf]
        %v632 = vld [vmem:[%s452 + $0x8] sm:$0xf]
        %v633 = vld [vmem:[%s452 + $0xc] sm:$0xf]
        %v634 = vld [vmem:[%s452 + $0x10] sm:$0xf]
        %v635 = vld [vmem:[%s452 + $0x14] sm:$0xf]
        %v668 = vunpack.c.l.b16 %v598
        %v669 = vunpack.c.l.b16 %v599
        %v670 = vunpack.c.l.b16 %v600
        %v671 = vunpack.c.l.b16 %v601
        %v672 = vunpack.c.l.b16 %v602
        %v673 = vunpack.c.l.b16 %v603
        %v674 = vunpack.c.l.b16 %v604
        %v675 = vunpack.c.l.b16 %v605
        %v676 = vunpack.c.l.b16 %v606
        %v677 = vunpack.c.l.b16 %v607
        %v678 = vunpack.c.l.b16 %v608
        %v679 = vunpack.c.l.b16 %v609
        %v680 = vunpack.c.l.b16 %v610
        %v681 = vunpack.c.l.b16 %v611
        %v682 = vunpack.c.l.b16 %v612
        %v683 = vunpack.c.l.b16 %v613
        %v684 = vunpack.c.l.b16 %v614
        %v685 = vunpack.c.l.b16 %v615
        %v686 = vunpack.c.l.b16 %v616
        %v687 = vunpack.c.l.b16 %v617
        %v688 = vunpack.c.l.b16 %v618
        %v689 = vunpack.c.l.b16 %v619
        %v690 = vunpack.c.l.b16 %v620
        %v691 = vunpack.c.l.b16 %v621
        %v692 = vunpack.c.l.b16 %v622
        %v693 = vunpack.c.l.b16 %v623
        %v694 = vunpack.c.l.b16 %v624
        %v695 = vunpack.c.l.b16 %v625
        %v696 = vunpack.c.l.b16 %v626
        %v697 = vunpack.c.l.b16 %v627
        %v698 = vunpack.c.l.b16 %v628
        %v699 = vunpack.c.l.b16 %v629
        %v700 = vpack.c.b16 %v669, %v668
        %v701 = vpack.c.b16 %v671, %v670
        %v702 = vpack.c.b16 %v673, %v672
        %v703 = vpack.c.b16 %v675, %v674
        %v704 = vpack.c.b16 %v677, %v676
        %v705 = vpack.c.b16 %v679, %v678
        %v706 = vpack.c.b16 %v681, %v680
        %v707 = vpack.c.b16 %v683, %v682
        %v708 = vpack.c.b16 %v685, %v684
        %v709 = vpack.c.b16 %v687, %v686
        %v710 = vpack.c.b16 %v689, %v688
        %v711 = vpack.c.b16 %v691, %v690
        %v712 = vpack.c.b16 %v693, %v692
        %v713 = vpack.c.b16 %v695, %v694
        %v714 = vpack.c.b16 %v697, %v696
        %v715 = vpack.c.b16 %v699, %v698
        %v722 = vunpack.c.l.b16 %v630
        %v723 = vunpack.c.l.b16 %v631
        %v724 = vunpack.c.l.b16 %v632
        %v725 = vunpack.c.l.b16 %v633
        %v726 = vunpack.c.l.b16 %v634
        %v727 = vunpack.c.l.b16 %v635
        %v728 = vpack.c.b16 %v723, %v722
        %v729 = vpack.c.b16 %v725, %v724
        %v730 = vpack.c.b16 %v727, %v726
        %v731 = vld [vmem:[%s4] sm:$0xf]
        %v732 = vld [vmem:[%s4 + $0x4] sm:$0xf]
        %v733 = vld [vmem:[%s4 + $0x8] sm:$0xf]
        %v734 = vld [vmem:[%s4 + $0xc] sm:$0xf]
        %v735 = vld [vmem:[%s4 + $0x10] sm:$0xf]
        %v736 = vld [vmem:[%s4 + $0x14] sm:$0x1]
        %v743 = vunpack.c.l.b16 %v731
        %v744 = vunpack.c.l.b16 %v732
        %v745 = vunpack.c.l.b16 %v733
        %v746 = vunpack.c.l.b16 %v734
        %v747 = vunpack.c.l.b16 %v735
        %v748 = vunpack.c.l.b16 %v736
        %v749 = vpack.c.b16 %v744, %v743
        %v750 = vpack.c.b16 %v746, %v745
        %v751 = vpack.c.b16 %v748, %v747
        %vm754 = vcmask 343040
        %v756 = vsel %vm754, %v562, 0
        %v759 = vsel %vm754, %v563, 0
        %v762 = vsel %vm754, %v564, 0
        %v765 = vsel %vm754, %v565, 0
        %v768 = vsel %vm754, %v566, 0
        %v771 = vsel %vm754, %v567, 0
        %v774 = vsel %vm754, %v568, 0
        %v777 = vsel %vm754, %v569, 0
        %v780 = vsel %vm754, %v570, 0
        %v783 = vsel %vm754, %v571, 0
        %v786 = vsel %vm754, %v572, 0
        %v789 = vsel %vm754, %v573, 0
        %v792 = vsel %vm754, %v574, 0
        %v795 = vsel %vm754, %v575, 0
        %v798 = vsel %vm754, %v576, 0
        %v801 = vsel %vm754, %v577, 0
        %v804 = vsel %vm754, %v594, 0
        %vm806 = vcmask 1044480
        %v808 = vsel %vm806, %v751, 0
        %810 = vmatprep.subr.bf16.mxu0 0
        %811 = vmatpush1.bf16.msra.mxu0 0
        %812 = vmatprep.subr.bf16.mxu0 0
        %813 = vmatpush1.bf16.msra.mxu0 0
        %814 = vmatprep.subr.bf16.mxu0 0
        %815 = vmatpush1.bf16.msra.mxu0 0
        %816 = vmatprep.subr.bf16.mxu0 0
        %817 = vmatpush1.bf16.msra.mxu0 0
        %818 = vmatprep.subr.bf16.mxu0 0
        %819 = vmatpush1.bf16.msra.mxu0 0
        %820 = vmatprep.subr.bf16.mxu0 0
        %821 = vmatpush1.bf16.msra.mxu0 %v808
        %822 = vmatprep.subr.bf16.mxu0 0
        %823 = vmatpush1.bf16.msra.mxu0 %v750
        %824 = vmatprep.subr.bf16.mxu0 0
        %825 = vmatpush1.bf16.msra.mxu0 %v749
        %826 = vmatprep.subr.bf16.mxu0 0
        %827 = vmatpush2.bf16.msra.mxu0 0
        %828 = vmatprep.subr.bf16.mxu0 0
        %829 = vmatpush2.bf16.msra.mxu0 0
        %830 = vmatprep.subr.bf16.mxu0 0
        %831 = vmatpush2.bf16.msra.mxu0 0
        %832 = vmatprep.subr.bf16.mxu0 0
        %833 = vmatpush2.bf16.msra.mxu0 0
        %834 = vmatprep.subr.bf16.mxu0 0
        %835 = vmatpush2.bf16.msra.mxu0 0
        %836 = vmatprep.subr.bf16.mxu0 0
        %837 = vmatpush2.bf16.msra.mxu0 0
        %838 = vmatprep.subr.bf16.mxu0 0
        %839 = vmatpush2.bf16.msra.mxu0 0
        %840 = vmatprep.subr.bf16.mxu0 0
        %841 = vmatpush2.bf16.msra.mxu0 0
        %842 = vmatprep.mubr.bf16.mxu0 0
        %843 = vmatmul.mubr.bf16.gmra.mxu0 %v756
        %v844 = vpop.f32.mrf.mxu0
        %v845 = vadd.f32 0.0, %v844
        %v846 = vpop.f32.mrf.mxu0
        %v847 = vpop.f32.mrf.mxu0
        %v848 = vadd.f32 0.0, %v847
        %v849 = vpop.f32.mrf.mxu0
        %850 = vmatprep.mubr.bf16.mxu0 0
        %851 = vmatmul.mubr.bf16.gmra.mxu0 %v759
        %v852 = vpop.f32.mrf.mxu0
        %v853 = vadd.f32 0.0, %v852
        %v854 = vpop.f32.mrf.mxu0
        %v855 = vpop.f32.mrf.mxu0
        %v856 = vadd.f32 0.0, %v855
        %v857 = vpop.f32.mrf.mxu0
        %858 = vmatprep.mubr.bf16.mxu0 0
        %859 = vmatmul.mubr.bf16.gmra.mxu0 %v762
        %v860 = vpop.f32.mrf.mxu0
        %v861 = vadd.f32 0.0, %v860
        %v862 = vpop.f32.mrf.mxu0
        %v863 = vpop.f32.mrf.mxu0
        %v864 = vadd.f32 0.0, %v863
        %v865 = vpop.f32.mrf.mxu0
        %866 = vmatprep.mubr.bf16.mxu0 0
        %867 = vmatmul.mubr.bf16.gmra.mxu0 %v765
        %v868 = vpop.f32.mrf.mxu0
        %v869 = vadd.f32 0.0, %v868
        %v870 = vpop.f32.mrf.mxu0
        %v871 = vpop.f32.mrf.mxu0
        %v872 = vadd.f32 0.0, %v871
        %v873 = vpop.f32.mrf.mxu0
        %874 = vmatprep.mubr.bf16.mxu0 0
        %875 = vmatmul.mubr.bf16.gmra.mxu0 %v768
        %v876 = vpop.f32.mrf.mxu0
        %v877 = vadd.f32 0.0, %v876
        %v878 = vpop.f32.mrf.mxu0
        %v879 = vpop.f32.mrf.mxu0
        %v880 = vadd.f32 0.0, %v879
        %v881 = vpop.f32.mrf.mxu0
        %882 = vmatprep.mubr.bf16.mxu0 0
        %883 = vmatmul.mubr.bf16.gmra.mxu0 %v771
        %v884 = vpop.f32.mrf.mxu0
        %v885 = vadd.f32 0.0, %v884
        %v886 = vpop.f32.mrf.mxu0
        %v887 = vpop.f32.mrf.mxu0
        %v888 = vadd.f32 0.0, %v887
        %v889 = vpop.f32.mrf.mxu0
        %890 = vmatprep.mubr.bf16.mxu0 0
        %891 = vmatmul.mubr.bf16.gmra.mxu0 %v774
        %v892 = vpop.f32.mrf.mxu0
        %v893 = vadd.f32 0.0, %v892
        %v894 = vpop.f32.mrf.mxu0
        %v895 = vpop.f32.mrf.mxu0
        %v896 = vadd.f32 0.0, %v895
        %v897 = vpop.f32.mrf.mxu0
        %898 = vmatprep.mubr.bf16.mxu0 0
        %899 = vmatmul.mubr.bf16.gmra.mxu0 %v777
        %v900 = vpop.f32.mrf.mxu0
        %v901 = vadd.f32 0.0, %v900
        %v902 = vpop.f32.mrf.mxu0
        %v903 = vpop.f32.mrf.mxu0
        %v904 = vadd.f32 0.0, %v903
        %v905 = vpop.f32.mrf.mxu0
        %906 = vmatprep.mubr.bf16.mxu0 0
        %907 = vmatmul.mubr.bf16.gmra.mxu0 %v780
        %v908 = vpop.f32.mrf.mxu0
        %v909 = vadd.f32 0.0, %v908
        %v910 = vpop.f32.mrf.mxu0
        %v911 = vpop.f32.mrf.mxu0
        %v912 = vadd.f32 0.0, %v911
        %v913 = vpop.f32.mrf.mxu0
        %914 = vmatprep.mubr.bf16.mxu0 0
        %915 = vmatmul.mubr.bf16.gmra.mxu0 %v783
        %v916 = vpop.f32.mrf.mxu0
        %v917 = vadd.f32 0.0, %v916
        %v918 = vpop.f32.mrf.mxu0
        %v919 = vpop.f32.mrf.mxu0
        %v920 = vadd.f32 0.0, %v919
        %v921 = vpop.f32.mrf.mxu0
        %922 = vmatprep.mubr.bf16.mxu0 0
        %923 = vmatmul.mubr.bf16.gmra.mxu0 %v786
        %v924 = vpop.f32.mrf.mxu0
        %v925 = vadd.f32 0.0, %v924
        %v926 = vpop.f32.mrf.mxu0
        %v927 = vpop.f32.mrf.mxu0
        %v928 = vadd.f32 0.0, %v927
        %v929 = vpop.f32.mrf.mxu0
        %930 = vmatprep.mubr.bf16.mxu0 0
        %931 = vmatmul.mubr.bf16.gmra.mxu0 %v789
        %v932 = vpop.f32.mrf.mxu0
        %v933 = vadd.f32 0.0, %v932
        %v934 = vpop.f32.mrf.mxu0
        %v935 = vpop.f32.mrf.mxu0
        %v936 = vadd.f32 0.0, %v935
        %v937 = vpop.f32.mrf.mxu0
        %938 = vmatprep.mubr.bf16.mxu0 0
        %939 = vmatmul.mubr.bf16.gmra.mxu0 %v792
        %v940 = vpop.f32.mrf.mxu0
        %v941 = vadd.f32 0.0, %v940
        %v942 = vpop.f32.mrf.mxu0
        %v943 = vpop.f32.mrf.mxu0
        %v944 = vadd.f32 0.0, %v943
        %v945 = vpop.f32.mrf.mxu0
        %946 = vmatprep.mubr.bf16.mxu0 0
        %947 = vmatmul.mubr.bf16.gmra.mxu0 %v795
        %v948 = vpop.f32.mrf.mxu0
        %v949 = vadd.f32 0.0, %v948
        %v950 = vpop.f32.mrf.mxu0
        %v951 = vpop.f32.mrf.mxu0
        %v952 = vadd.f32 0.0, %v951
        %v953 = vpop.f32.mrf.mxu0
        %954 = vmatprep.mubr.bf16.mxu0 0
        %955 = vmatmul.mubr.bf16.gmra.mxu0 %v798
        %v956 = vpop.f32.mrf.mxu0
        %v957 = vadd.f32 0.0, %v956
        %v958 = vpop.f32.mrf.mxu0
        %v959 = vpop.f32.mrf.mxu0
        %v960 = vadd.f32 0.0, %v959
        %v961 = vpop.f32.mrf.mxu0
        %962 = vmatprep.mubr.bf16.mxu0 0
        %963 = vmatmul.mubr.bf16.gmra.mxu0 %v801
        %v964 = vpop.f32.mrf.mxu0
        %v965 = vadd.f32 0.0, %v964
        %v966 = vpop.f32.mrf.mxu0
        %v967 = vpop.f32.mrf.mxu0
        %v968 = vadd.f32 0.0, %v967
        %v969 = vpop.f32.mrf.mxu0
        %970 = vmatprep.mubr.bf16.mxu0 0
        %971 = vmatmul.mubr.bf16.gmra.mxu0 %v804
        %v972 = vpop.f32.mrf.mxu0
        %v973 = vadd.f32 0.0, %v972
        %v974 = vpop.f32.mrf.mxu0
        %v975 = vpop.f32.mrf.mxu0
        %v976 = vadd.f32 0.0, %v975
        %v977 = vpop.f32.mrf.mxu0
        %978 = vdwg.mxu0
        %979 = vst [vmem:[#allocation2] sm:$0xff] %v845
        %980 = vst [vmem:[#allocation2 + $0x8] sm:$0xff] %v848
        %981 = vst [vmem:[#allocation2 + $0x10] sm:$0xff] %v853
        %982 = vst [vmem:[#allocation2 + $0x18] sm:$0xff] %v856
        %983 = vst [vmem:[#allocation2 + $0x20] sm:$0xff] %v861
        %984 = vst [vmem:[#allocation2 + $0x28] sm:$0xff] %v864
        %985 = vst [vmem:[#allocation2 + $0x30] sm:$0xff] %v869
        %986 = vst [vmem:[#allocation2 + $0x38] sm:$0xff] %v872
        %987 = vst [vmem:[#allocation2 + $0x40] sm:$0xff] %v877
        %988 = vst [vmem:[#allocation2 + $0x48] sm:$0xff] %v880
        %989 = vst [vmem:[#allocation2 + $0x50] sm:$0xff] %v885
        %990 = vst [vmem:[#allocation2 + $0x58] sm:$0xff] %v888
        %991 = vst [vmem:[#allocation2 + $0x60] sm:$0xff] %v893
        %992 = vst [vmem:[#allocation2 + $0x68] sm:$0xff] %v896
        %993 = vst [vmem:[#allocation2 + $0x70] sm:$0xff] %v901
        %994 = vst [vmem:[#allocation2 + $0x78] sm:$0xff] %v904
        %995 = vst [vmem:[#allocation2 + $0x80] sm:$0xff] %v909
        %996 = vst [vmem:[#allocation2 + $0x88] sm:$0xff] %v912
        %997 = vst [vmem:[#allocation2 + $0x90] sm:$0xff] %v917
        %998 = vst [vmem:[#allocation2 + $0x98] sm:$0xff] %v920
        %999 = vst [vmem:[#allocation2 + $0xa0] sm:$0xff] %v925
        %1000 = vst [vmem:[#allocation2 + $0xa8] sm:$0xff] %v928
        %1001 = vst [vmem:[#allocation2 + $0xb0] sm:$0xff] %v933
        %1002 = vst [vmem:[#allocation2 + $0xb8] sm:$0xff] %v936
        %1003 = vst [vmem:[#allocation2 + $0xc0] sm:$0xff] %v941
        %1004 = vst [vmem:[#allocation2 + $0xc8] sm:$0xff] %v944
        %1005 = vst [vmem:[#allocation2 + $0xd0] sm:$0xff] %v949
        %1006 = vst [vmem:[#allocation2 + $0xd8] sm:$0xff] %v952
        %1007 = vst [vmem:[#allocation2 + $0xe0] sm:$0xff] %v957
        %1008 = vst [vmem:[#allocation2 + $0xe8] sm:$0xff] %v960
        %1009 = vst [vmem:[#allocation2 + $0xf0] sm:$0xff] %v965
        %1010 = vst [vmem:[#allocation2 + $0xf8] sm:$0xff] %v968
        %1011 = vst [vmem:[#allocation2 + $0x100] sm:$0xff] %v973
        %1012 = vst [vmem:[#allocation2 + $0x108] sm:$0xff] %v976
        %s1013 = scalar_lea.vmem %s4, 24
        %v1014 = vld [vmem:[%s1013] sm:$0xf]
        %v1015 = vld [vmem:[%s1013 + $0x4] sm:$0xf]
        %v1016 = vld [vmem:[%s1013 + $0x8] sm:$0xf]
        %v1017 = vld [vmem:[%s1013 + $0xc] sm:$0xf]
        %v1018 = vld [vmem:[%s1013 + $0x10] sm:$0xf]
        %v1019 = vld [vmem:[%s1013 + $0x14] sm:$0x1]
        %v1026 = vunpack.c.l.b16 %v1014
        %v1027 = vunpack.c.l.b16 %v1015
        %v1028 = vunpack.c.l.b16 %v1016
        %v1029 = vunpack.c.l.b16 %v1017
        %v1030 = vunpack.c.l.b16 %v1018
        %v1031 = vunpack.c.l.b16 %v1019
        %v1032 = vpack.c.b16 %v1027, %v1026
        %v1033 = vpack.c.b16 %v1029, %v1028
        %v1034 = vpack.c.b16 %v1031, %v1030
        %v1038 = vsel %vm754, %v700, 0
        %v1041 = vsel %vm754, %v701, 0
        %v1044 = vsel %vm754, %v702, 0
        %v1047 = vsel %vm754, %v703, 0
        %v1050 = vsel %vm754, %v704, 0
        %v1053 = vsel %vm754, %v705, 0
        %v1056 = vsel %vm754, %v706, 0
        %v1059 = vsel %vm754, %v707, 0
        %v1062 = vsel %vm754, %v708, 0
        %v1065 = vsel %vm754, %v709, 0
        %v1068 = vsel %vm754, %v710, 0
        %v1071 = vsel %vm754, %v711, 0
        %v1074 = vsel %vm754, %v712, 0
        %v1077 = vsel %vm754, %v713, 0
        %v1080 = vsel %vm754, %v714, 0
        %v1083 = vsel %vm754, %v715, 0
        %v1086 = vsel %vm754, %v728, 0
        %v1089 = vsel %vm806, %v1034, 0
        %1091 = vmatprep.subr.bf16.mxu0 0
        %1092 = vmatpush1.bf16.msra.mxu0 0
        %1093 = vmatprep.subr.bf16.mxu0 0
        %1094 = vmatpush1.bf16.msra.mxu0 0
        %1095 = vmatprep.subr.bf16.mxu0 0
        %1096 = vmatpush1.bf16.msra.mxu0 0
        %1097 = vmatprep.subr.bf16.mxu0 0
        %1098 = vmatpush1.bf16.msra.mxu0 0
        %1099 = vmatprep.subr.bf16.mxu0 0
        %1100 = vmatpush1.bf16.msra.mxu0 0
        %1101 = vmatprep.subr.bf16.mxu0 0
        %1102 = vmatpush1.bf16.msra.mxu0 %v1089
        %1103 = vmatprep.subr.bf16.mxu0 0
        %1104 = vmatpush1.bf16.msra.mxu0 %v1033
        %1105 = vmatprep.subr.bf16.mxu0 0
        %1106 = vmatpush1.bf16.msra.mxu0 %v1032
        %1107 = vmatprep.subr.bf16.mxu0 0
        %1108 = vmatpush2.bf16.msra.mxu0 0
        %1109 = vmatprep.subr.bf16.mxu0 0
        %1110 = vmatpush2.bf16.msra.mxu0 0
        %1111 = vmatprep.subr.bf16.mxu0 0
        %1112 = vmatpush2.bf16.msra.mxu0 0
        %1113 = vmatprep.subr.bf16.mxu0 0
        %1114 = vmatpush2.bf16.msra.mxu0 0
        %1115 = vmatprep.subr.bf16.mxu0 0
        %1116 = vmatpush2.bf16.msra.mxu0 0
        %1117 = vmatprep.subr.bf16.mxu0 0
        %1118 = vmatpush2.bf16.msra.mxu0 0
        %1119 = vmatprep.subr.bf16.mxu0 0
        %1120 = vmatpush2.bf16.msra.mxu0 0
        %1121 = vmatprep.subr.bf16.mxu0 0
        %1122 = vmatpush2.bf16.msra.mxu0 0
        %1123 = vmatprep.mubr.bf16.mxu0 0
        %1124 = vmatmul.mubr.bf16.gmra.mxu0 %v1038
        %v1125 = vpop.f32.mrf.mxu0
        %v1126 = vadd.f32 0.0, %v1125
        %v1127 = vpop.f32.mrf.mxu0
        %v1128 = vpop.f32.mrf.mxu0
        %v1129 = vadd.f32 0.0, %v1128
        %v1130 = vpop.f32.mrf.mxu0
        %1131 = vmatprep.mubr.bf16.mxu0 0
        %1132 = vmatmul.mubr.bf16.gmra.mxu0 %v1041
        %v1133 = vpop.f32.mrf.mxu0
        %v1134 = vadd.f32 0.0, %v1133
        %v1135 = vpop.f32.mrf.mxu0
        %v1136 = vpop.f32.mrf.mxu0
        %v1137 = vadd.f32 0.0, %v1136
        %v1138 = vpop.f32.mrf.mxu0
        %1139 = vmatprep.mubr.bf16.mxu0 0
        %1140 = vmatmul.mubr.bf16.gmra.mxu0 %v1044
        %v1141 = vpop.f32.mrf.mxu0
        %v1142 = vadd.f32 0.0, %v1141
        %v1143 = vpop.f32.mrf.mxu0
        %v1144 = vpop.f32.mrf.mxu0
        %v1145 = vadd.f32 0.0, %v1144
        %v1146 = vpop.f32.mrf.mxu0
        %1147 = vmatprep.mubr.bf16.mxu0 0
        %1148 = vmatmul.mubr.bf16.gmra.mxu0 %v1047
        %v1149 = vpop.f32.mrf.mxu0
        %v1150 = vadd.f32 0.0, %v1149
        %v1151 = vpop.f32.mrf.mxu0
        %v1152 = vpop.f32.mrf.mxu0
        %v1153 = vadd.f32 0.0, %v1152
        %v1154 = vpop.f32.mrf.mxu0
        %1155 = vmatprep.mubr.bf16.mxu0 0
        %1156 = vmatmul.mubr.bf16.gmra.mxu0 %v1050
        %v1157 = vpop.f32.mrf.mxu0
        %v1158 = vadd.f32 0.0, %v1157
        %v1159 = vpop.f32.mrf.mxu0
        %v1160 = vpop.f32.mrf.mxu0
        %v1161 = vadd.f32 0.0, %v1160
        %v1162 = vpop.f32.mrf.mxu0
        %1163 = vmatprep.mubr.bf16.mxu0 0
        %1164 = vmatmul.mubr.bf16.gmra.mxu0 %v1053
        %v1165 = vpop.f32.mrf.mxu0
        %v1166 = vadd.f32 0.0, %v1165
        %v1167 = vpop.f32.mrf.mxu0
        %v1168 = vpop.f32.mrf.mxu0
        %v1169 = vadd.f32 0.0, %v1168
        %v1170 = vpop.f32.mrf.mxu0
        %1171 = vmatprep.mubr.bf16.mxu0 0
        %1172 = vmatmul.mubr.bf16.gmra.mxu0 %v1056
        %v1173 = vpop.f32.mrf.mxu0
        %v1174 = vadd.f32 0.0, %v1173
        %v1175 = vpop.f32.mrf.mxu0
        %v1176 = vpop.f32.mrf.mxu0
        %v1177 = vadd.f32 0.0, %v1176
        %v1178 = vpop.f32.mrf.mxu0
        %1179 = vmatprep.mubr.bf16.mxu0 0
        %1180 = vmatmul.mubr.bf16.gmra.mxu0 %v1059
        %v1181 = vpop.f32.mrf.mxu0
        %v1182 = vadd.f32 0.0, %v1181
        %v1183 = vpop.f32.mrf.mxu0
        %v1184 = vpop.f32.mrf.mxu0
        %v1185 = vadd.f32 0.0, %v1184
        %v1186 = vpop.f32.mrf.mxu0
        %1187 = vmatprep.mubr.bf16.mxu0 0
        %1188 = vmatmul.mubr.bf16.gmra.mxu0 %v1062
        %v1189 = vpop.f32.mrf.mxu0
        %v1190 = vadd.f32 0.0, %v1189
        %v1191 = vpop.f32.mrf.mxu0
        %v1192 = vpop.f32.mrf.mxu0
        %v1193 = vadd.f32 0.0, %v1192
        %v1194 = vpop.f32.mrf.mxu0
        %1195 = vmatprep.mubr.bf16.mxu0 0
        %1196 = vmatmul.mubr.bf16.gmra.mxu0 %v1065
        %v1197 = vpop.f32.mrf.mxu0
        %v1198 = vadd.f32 0.0, %v1197
        %v1199 = vpop.f32.mrf.mxu0
        %v1200 = vpop.f32.mrf.mxu0
        %v1201 = vadd.f32 0.0, %v1200
        %v1202 = vpop.f32.mrf.mxu0
        %1203 = vmatprep.mubr.bf16.mxu0 0
        %1204 = vmatmul.mubr.bf16.gmra.mxu0 %v1068
        %v1205 = vpop.f32.mrf.mxu0
        %v1206 = vadd.f32 0.0, %v1205
        %v1207 = vpop.f32.mrf.mxu0
        %v1208 = vpop.f32.mrf.mxu0
        %v1209 = vadd.f32 0.0, %v1208
        %v1210 = vpop.f32.mrf.mxu0
        %1211 = vmatprep.mubr.bf16.mxu0 0
        %1212 = vmatmul.mubr.bf16.gmra.mxu0 %v1071
        %v1213 = vpop.f32.mrf.mxu0
        %v1214 = vadd.f32 0.0, %v1213
        %v1215 = vpop.f32.mrf.mxu0
        %v1216 = vpop.f32.mrf.mxu0
        %v1217 = vadd.f32 0.0, %v1216
        %v1218 = vpop.f32.mrf.mxu0
        %1219 = vmatprep.mubr.bf16.mxu0 0
        %1220 = vmatmul.mubr.bf16.gmra.mxu0 %v1074
        %v1221 = vpop.f32.mrf.mxu0
        %v1222 = vadd.f32 0.0, %v1221
        %v1223 = vpop.f32.mrf.mxu0
        %v1224 = vpop.f32.mrf.mxu0
        %v1225 = vadd.f32 0.0, %v1224
        %v1226 = vpop.f32.mrf.mxu0
        %1227 = vmatprep.mubr.bf16.mxu0 0
        %1228 = vmatmul.mubr.bf16.gmra.mxu0 %v1077
        %v1229 = vpop.f32.mrf.mxu0
        %v1230 = vadd.f32 0.0, %v1229
        %v1231 = vpop.f32.mrf.mxu0
        %v1232 = vpop.f32.mrf.mxu0
        %v1233 = vadd.f32 0.0, %v1232
        %v1234 = vpop.f32.mrf.mxu0
        %1235 = vmatprep.mubr.bf16.mxu0 0
        %1236 = vmatmul.mubr.bf16.gmra.mxu0 %v1080
        %v1237 = vpop.f32.mrf.mxu0
        %v1238 = vadd.f32 0.0, %v1237
        %v1239 = vpop.f32.mrf.mxu0
        %v1240 = vpop.f32.mrf.mxu0
        %v1241 = vadd.f32 0.0, %v1240
        %v1242 = vpop.f32.mrf.mxu0
        %1243 = vmatprep.mubr.bf16.mxu0 0
        %1244 = vmatmul.mubr.bf16.gmra.mxu0 %v1083
        %v1245 = vpop.f32.mrf.mxu0
        %v1246 = vadd.f32 0.0, %v1245
        %v1247 = vpop.f32.mrf.mxu0
        %v1248 = vpop.f32.mrf.mxu0
        %v1249 = vadd.f32 0.0, %v1248
        %v1250 = vpop.f32.mrf.mxu0
        %1251 = vmatprep.mubr.bf16.mxu0 0
        %1252 = vmatmul.mubr.bf16.gmra.mxu0 %v1086
        %v1253 = vpop.f32.mrf.mxu0
        %v1254 = vadd.f32 0.0, %v1253
        %v1255 = vpop.f32.mrf.mxu0
        %v1256 = vpop.f32.mrf.mxu0
        %v1257 = vadd.f32 0.0, %v1256
        %v1258 = vpop.f32.mrf.mxu0
        %1259 = vdwg.mxu0
        %v1260 = vld [vmem:[#allocation2] sm:$0xff]
        %v1261 = vld [vmem:[#allocation2 + $0x8] sm:$0xff]
        %v1262 = vld [vmem:[#allocation2 + $0x10] sm:$0xff]
        %v1263 = vld [vmem:[#allocation2 + $0x18] sm:$0xff]
        %v1264 = vld [vmem:[#allocation2 + $0x20] sm:$0xff]
        %v1265 = vld [vmem:[#allocation2 + $0x28] sm:$0xff]
        %v1266 = vld [vmem:[#allocation2 + $0x30] sm:$0xff]
        %v1267 = vld [vmem:[#allocation2 + $0x38] sm:$0xff]
        %v1268 = vld [vmem:[#allocation2 + $0x40] sm:$0xff]
        %v1269 = vld [vmem:[#allocation2 + $0x48] sm:$0xff]
        %v1270 = vld [vmem:[#allocation2 + $0x50] sm:$0xff]
        %v1271 = vld [vmem:[#allocation2 + $0x58] sm:$0xff]
        %v1272 = vld [vmem:[#allocation2 + $0x60] sm:$0xff]
        %v1273 = vld [vmem:[#allocation2 + $0x68] sm:$0xff]
        %v1274 = vld [vmem:[#allocation2 + $0x70] sm:$0xff]
        %v1275 = vld [vmem:[#allocation2 + $0x78] sm:$0xff]
        %v1276 = vld [vmem:[#allocation2 + $0x80] sm:$0xff]
        %v1277 = vld [vmem:[#allocation2 + $0x88] sm:$0xff]
        %v1278 = vld [vmem:[#allocation2 + $0x90] sm:$0xff]
        %v1279 = vld [vmem:[#allocation2 + $0x98] sm:$0xff]
        %v1280 = vld [vmem:[#allocation2 + $0xa0] sm:$0xff]
        %v1281 = vld [vmem:[#allocation2 + $0xa8] sm:$0xff]
        %v1282 = vld [vmem:[#allocation2 + $0xb0] sm:$0xff]
        %v1283 = vld [vmem:[#allocation2 + $0xb8] sm:$0xff]
        %v1284 = vld [vmem:[#allocation2 + $0xc0] sm:$0xff]
        %v1285 = vld [vmem:[#allocation2 + $0xc8] sm:$0xff]
        %v1286 = vld [vmem:[#allocation2 + $0xd0] sm:$0xff]
        %v1287 = vld [vmem:[#allocation2 + $0xd8] sm:$0xff]
        %v1288 = vld [vmem:[#allocation2 + $0xe0] sm:$0xff]
        %v1289 = vld [vmem:[#allocation2 + $0xe8] sm:$0xff]
        %v1290 = vld [vmem:[#allocation2 + $0xf0] sm:$0xff]
        %v1291 = vld [vmem:[#allocation2 + $0xf8] sm:$0xff]
        %v1292 = vld [vmem:[#allocation2 + $0x100] sm:$0xff]
        %v1293 = vld [vmem:[#allocation2 + $0x108] sm:$0xff]
        %v1294 = vadd.f32 %v1260, %v1126
        %v1295 = vadd.f32 %v1261, %v1129
        %v1296 = vadd.f32 %v1262, %v1134
        %v1297 = vadd.f32 %v1263, %v1137
        %v1298 = vadd.f32 %v1264, %v1142
        %v1299 = vadd.f32 %v1265, %v1145
        %v1300 = vadd.f32 %v1266, %v1150
        %v1301 = vadd.f32 %v1267, %v1153
        %v1302 = vadd.f32 %v1268, %v1158
        %v1303 = vadd.f32 %v1269, %v1161
        %v1304 = vadd.f32 %v1270, %v1166
        %v1305 = vadd.f32 %v1271, %v1169
        %v1306 = vadd.f32 %v1272, %v1174
        %v1307 = vadd.f32 %v1273, %v1177
        %v1308 = vadd.f32 %v1274, %v1182
        %v1309 = vadd.f32 %v1275, %v1185
        %v1310 = vadd.f32 %v1276, %v1190
        %v1311 = vadd.f32 %v1277, %v1193
        %v1312 = vadd.f32 %v1278, %v1198
        %v1313 = vadd.f32 %v1279, %v1201
        %v1314 = vadd.f32 %v1280, %v1206
        %v1315 = vadd.f32 %v1281, %v1209
        %v1316 = vadd.f32 %v1282, %v1214
        %v1317 = vadd.f32 %v1283, %v1217
        %v1318 = vadd.f32 %v1284, %v1222
        %v1319 = vadd.f32 %v1285, %v1225
        %v1320 = vadd.f32 %v1286, %v1230
        %v1321 = vadd.f32 %v1287, %v1233
        %v1322 = vadd.f32 %v1288, %v1238
        %v1323 = vadd.f32 %v1289, %v1241
        %v1324 = vadd.f32 %v1290, %v1246
        %v1325 = vadd.f32 %v1291, %v1249
        %v1326 = vadd.f32 %v1292, %v1254
        %v1327 = vadd.f32 %v1293, %v1257
        %1328 = vst [vmem:[#allocation2] sm:$0xff] %v1294
        %1329 = vst [vmem:[#allocation2 + $0x8] sm:$0xff] %v1295
        %1330 = vst [vmem:[#allocation2 + $0x10] sm:$0xff] %v1296
        %1331 = vst [vmem:[#allocation2 + $0x18] sm:$0xff] %v1297
        %1332 = vst [vmem:[#allocation2 + $0x20] sm:$0xff] %v1298
        %1333 = vst [vmem:[#allocation2 + $0x28] sm:$0xff] %v1299
        %1334 = vst [vmem:[#allocation2 + $0x30] sm:$0xff] %v1300
        %1335 = vst [vmem:[#allocation2 + $0x38] sm:$0xff] %v1301
        %1336 = vst [vmem:[#allocation2 + $0x40] sm:$0xff] %v1302
        %1337 = vst [vmem:[#allocation2 + $0x48] sm:$0xff] %v1303
        %1338 = vst [vmem:[#allocation2 + $0x50] sm:$0xff] %v1304
        %1339 = vst [vmem:[#allocation2 + $0x58] sm:$0xff] %v1305
        %1340 = vst [vmem:[#allocation2 + $0x60] sm:$0xff] %v1306
        %1341 = vst [vmem:[#allocation2 + $0x68] sm:$0xff] %v1307
        %1342 = vst [vmem:[#allocation2 + $0x70] sm:$0xff] %v1308
        %1343 = vst [vmem:[#allocation2 + $0x78] sm:$0xff] %v1309
        %1344 = vst [vmem:[#allocation2 + $0x80] sm:$0xff] %v1310
        %1345 = vst [vmem:[#allocation2 + $0x88] sm:$0xff] %v1311
        %1346 = vst [vmem:[#allocation2 + $0x90] sm:$0xff] %v1312
        %1347 = vst [vmem:[#allocation2 + $0x98] sm:$0xff] %v1313
        %1348 = vst [vmem:[#allocation2 + $0xa0] sm:$0xff] %v1314
        %1349 = vst [vmem:[#allocation2 + $0xa8] sm:$0xff] %v1315
        %1350 = vst [vmem:[#allocation2 + $0xb0] sm:$0xff] %v1316
        %1351 = vst [vmem:[#allocation2 + $0xb8] sm:$0xff] %v1317
        %1352 = vst [vmem:[#allocation2 + $0xc0] sm:$0xff] %v1318
        %1353 = vst [vmem:[#allocation2 + $0xc8] sm:$0xff] %v1319
        %1354 = vst [vmem:[#allocation2 + $0xd0] sm:$0xff] %v1320
        %1355 = vst [vmem:[#allocation2 + $0xd8] sm:$0xff] %v1321
        %1356 = vst [vmem:[#allocation2 + $0xe0] sm:$0xff] %v1322
        %1357 = vst [vmem:[#allocation2 + $0xe8] sm:$0xff] %v1323
        %1358 = vst [vmem:[#allocation2 + $0xf0] sm:$0xff] %v1324
        %1359 = vst [vmem:[#allocation2 + $0xf8] sm:$0xff] %v1325
        %1360 = vst [vmem:[#allocation2 + $0x100] sm:$0xff] %v1326
        %1361 = vst [vmem:[#allocation2 + $0x108] sm:$0xff] %v1327
        %s1362 = scalar_lea.vmem %s4, 48
        %v1363 = vld [vmem:[%s1362] sm:$0xf]
        %v1364 = vld [vmem:[%s1362 + $0x4] sm:$0xf]
        %v1365 = vld [vmem:[%s1362 + $0x8] sm:$0xf]
        %v1366 = vld [vmem:[%s1362 + $0xc] sm:$0xf]
        %v1367 = vld [vmem:[%s1362 + $0x10] sm:$0xf]
        %v1368 = vld [vmem:[%s1362 + $0x14] sm:$0x1]
        %v1375 = vunpack.c.l.b16 %v1363
        %v1376 = vunpack.c.l.b16 %v1364
        %v1377 = vunpack.c.l.b16 %v1365
        %v1378 = vunpack.c.l.b16 %v1366
        %v1379 = vunpack.c.l.b16 %v1367
        %v1380 = vunpack.c.l.b16 %v1368
        %v1381 = vpack.c.b16 %v1376, %v1375
        %v1382 = vpack.c.b16 %v1378, %v1377
        %v1383 = vpack.c.b16 %v1380, %v1379
        %v1387 = vsel %vm754, %v595, 0
        %v1390 = vsel %vm806, %v1383, 0
        %1392 = vmatprep.subr.bf16.mxu0 0
        %1393 = vmatpush1.bf16.msra.mxu0 0
        %1394 = vmatprep.subr.bf16.mxu0 0
        %1395 = vmatpush1.bf16.msra.mxu0 0
        %1396 = vmatprep.subr.bf16.mxu0 0
        %1397 = vmatpush1.bf16.msra.mxu0 0
        %1398 = vmatprep.subr.bf16.mxu0 0
        %1399 = vmatpush1.bf16.msra.mxu0 0
        %1400 = vmatprep.subr.bf16.mxu0 0
        %1401 = vmatpush1.bf16.msra.mxu0 0
        %1402 = vmatprep.subr.bf16.mxu0 0
        %1403 = vmatpush1.bf16.msra.mxu0 %v1390
        %1404 = vmatprep.subr.bf16.mxu0 0
        %1405 = vmatpush1.bf16.msra.mxu0 %v1382
        %1406 = vmatprep.subr.bf16.mxu0 0
        %1407 = vmatpush1.bf16.msra.mxu0 %v1381
        %1408 = vmatprep.subr.bf16.mxu0 0
        %1409 = vmatpush2.bf16.msra.mxu0 0
        %1410 = vmatprep.subr.bf16.mxu0 0
        %1411 = vmatpush2.bf16.msra.mxu0 0
        %1412 = vmatprep.subr.bf16.mxu0 0
        %1413 = vmatpush2.bf16.msra.mxu0 0
        %1414 = vmatprep.subr.bf16.mxu0 0
        %1415 = vmatpush2.bf16.msra.mxu0 0
        %1416 = vmatprep.subr.bf16.mxu0 0
        %1417 = vmatpush2.bf16.msra.mxu0 0
        %1418 = vmatprep.subr.bf16.mxu0 0
        %1419 = vmatpush2.bf16.msra.mxu0 0
        %1420 = vmatprep.subr.bf16.mxu0 0
        %1421 = vmatpush2.bf16.msra.mxu0 0
        %1422 = vmatprep.subr.bf16.mxu0 0
        %1423 = vmatpush2.bf16.msra.mxu0 0
        %1424 = vmatprep.mubr.bf16.mxu0 0
        %1425 = vmatmul.mubr.bf16.gmra.mxu0 %v759
        %v1426 = vpop.f32.mrf.mxu0
        %v1427 = vadd.f32 0.0, %v1426
        %v1428 = vpop.f32.mrf.mxu0
        %v1429 = vpop.f32.mrf.mxu0
        %v1430 = vadd.f32 0.0, %v1429
        %v1431 = vpop.f32.mrf.mxu0
        %1432 = vmatprep.mubr.bf16.mxu0 0
        %1433 = vmatmul.mubr.bf16.gmra.mxu0 %v762
        %v1434 = vpop.f32.mrf.mxu0
        %v1435 = vadd.f32 0.0, %v1434
        %v1436 = vpop.f32.mrf.mxu0
        %v1437 = vpop.f32.mrf.mxu0
        %v1438 = vadd.f32 0.0, %v1437
        %v1439 = vpop.f32.mrf.mxu0
        %1440 = vmatprep.mubr.bf16.mxu0 0
        %1441 = vmatmul.mubr.bf16.gmra.mxu0 %v765
        %v1442 = vpop.f32.mrf.mxu0
        %v1443 = vadd.f32 0.0, %v1442
        %v1444 = vpop.f32.mrf.mxu0
        %v1445 = vpop.f32.mrf.mxu0
        %v1446 = vadd.f32 0.0, %v1445
        %v1447 = vpop.f32.mrf.mxu0
        %1448 = vmatprep.mubr.bf16.mxu0 0
        %1449 = vmatmul.mubr.bf16.gmra.mxu0 %v768
        %v1450 = vpop.f32.mrf.mxu0
        %v1451 = vadd.f32 0.0, %v1450
        %v1452 = vpop.f32.mrf.mxu0
        %v1453 = vpop.f32.mrf.mxu0
        %v1454 = vadd.f32 0.0, %v1453
        %v1455 = vpop.f32.mrf.mxu0
        %1456 = vmatprep.mubr.bf16.mxu0 0
        %1457 = vmatmul.mubr.bf16.gmra.mxu0 %v771
        %v1458 = vpop.f32.mrf.mxu0
        %v1459 = vadd.f32 0.0, %v1458
        %v1460 = vpop.f32.mrf.mxu0
        %v1461 = vpop.f32.mrf.mxu0
        %v1462 = vadd.f32 0.0, %v1461
        %v1463 = vpop.f32.mrf.mxu0
        %1464 = vmatprep.mubr.bf16.mxu0 0
        %1465 = vmatmul.mubr.bf16.gmra.mxu0 %v774
        %v1466 = vpop.f32.mrf.mxu0
        %v1467 = vadd.f32 0.0, %v1466
        %v1468 = vpop.f32.mrf.mxu0
        %v1469 = vpop.f32.mrf.mxu0
        %v1470 = vadd.f32 0.0, %v1469
        %v1471 = vpop.f32.mrf.mxu0
        %1472 = vmatprep.mubr.bf16.mxu0 0
        %1473 = vmatmul.mubr.bf16.gmra.mxu0 %v777
        %v1474 = vpop.f32.mrf.mxu0
        %v1475 = vadd.f32 0.0, %v1474
        %v1476 = vpop.f32.mrf.mxu0
        %v1477 = vpop.f32.mrf.mxu0
        %v1478 = vadd.f32 0.0, %v1477
        %v1479 = vpop.f32.mrf.mxu0
        %1480 = vmatprep.mubr.bf16.mxu0 0
        %1481 = vmatmul.mubr.bf16.gmra.mxu0 %v780
        %v1482 = vpop.f32.mrf.mxu0
        %v1483 = vadd.f32 0.0, %v1482
        %v1484 = vpop.f32.mrf.mxu0
        %v1485 = vpop.f32.mrf.mxu0
        %v1486 = vadd.f32 0.0, %v1485
        %v1487 = vpop.f32.mrf.mxu0
        %1488 = vmatprep.mubr.bf16.mxu0 0
        %1489 = vmatmul.mubr.bf16.gmra.mxu0 %v783
        %v1490 = vpop.f32.mrf.mxu0
        %v1491 = vadd.f32 0.0, %v1490
        %v1492 = vpop.f32.mrf.mxu0
        %v1493 = vpop.f32.mrf.mxu0
        %v1494 = vadd.f32 0.0, %v1493
        %v1495 = vpop.f32.mrf.mxu0
        %1496 = vmatprep.mubr.bf16.mxu0 0
        %1497 = vmatmul.mubr.bf16.gmra.mxu0 %v786
        %v1498 = vpop.f32.mrf.mxu0
        %v1499 = vadd.f32 0.0, %v1498
        %v1500 = vpop.f32.mrf.mxu0
        %v1501 = vpop.f32.mrf.mxu0
        %v1502 = vadd.f32 0.0, %v1501
        %v1503 = vpop.f32.mrf.mxu0
        %1504 = vmatprep.mubr.bf16.mxu0 0
        %1505 = vmatmul.mubr.bf16.gmra.mxu0 %v789
        %v1506 = vpop.f32.mrf.mxu0
        %v1507 = vadd.f32 0.0, %v1506
        %v1508 = vpop.f32.mrf.mxu0
        %v1509 = vpop.f32.mrf.mxu0
        %v1510 = vadd.f32 0.0, %v1509
        %v1511 = vpop.f32.mrf.mxu0
        %1512 = vmatprep.mubr.bf16.mxu0 0
        %1513 = vmatmul.mubr.bf16.gmra.mxu0 %v792
        %v1514 = vpop.f32.mrf.mxu0
        %v1515 = vadd.f32 0.0, %v1514
        %v1516 = vpop.f32.mrf.mxu0
        %v1517 = vpop.f32.mrf.mxu0
        %v1518 = vadd.f32 0.0, %v1517
        %v1519 = vpop.f32.mrf.mxu0
        %1520 = vmatprep.mubr.bf16.mxu0 0
        %1521 = vmatmul.mubr.bf16.gmra.mxu0 %v795
        %v1522 = vpop.f32.mrf.mxu0
        %v1523 = vadd.f32 0.0, %v1522
        %v1524 = vpop.f32.mrf.mxu0
        %v1525 = vpop.f32.mrf.mxu0
        %v1526 = vadd.f32 0.0, %v1525
        %v1527 = vpop.f32.mrf.mxu0
        %1528 = vmatprep.mubr.bf16.mxu0 0
        %1529 = vmatmul.mubr.bf16.gmra.mxu0 %v798
        %v1530 = vpop.f32.mrf.mxu0
        %v1531 = vadd.f32 0.0, %v1530
        %v1532 = vpop.f32.mrf.mxu0
        %v1533 = vpop.f32.mrf.mxu0
        %v1534 = vadd.f32 0.0, %v1533
        %v1535 = vpop.f32.mrf.mxu0
        %1536 = vmatprep.mubr.bf16.mxu0 0
        %1537 = vmatmul.mubr.bf16.gmra.mxu0 %v801
        %v1538 = vpop.f32.mrf.mxu0
        %v1539 = vadd.f32 0.0, %v1538
        %v1540 = vpop.f32.mrf.mxu0
        %v1541 = vpop.f32.mrf.mxu0
        %v1542 = vadd.f32 0.0, %v1541
        %v1543 = vpop.f32.mrf.mxu0
        %1544 = vmatprep.mubr.bf16.mxu0 0
        %1545 = vmatmul.mubr.bf16.gmra.mxu0 %v804
        %v1546 = vpop.f32.mrf.mxu0
        %v1547 = vadd.f32 0.0, %v1546
        %v1548 = vpop.f32.mrf.mxu0
        %v1549 = vpop.f32.mrf.mxu0
        %v1550 = vadd.f32 0.0, %v1549
        %v1551 = vpop.f32.mrf.mxu0
        %1552 = vmatprep.mubr.bf16.mxu0 0
        %1553 = vmatmul.mubr.bf16.gmra.mxu0 %v1387
        %v1554 = vpop.f32.mrf.mxu0
        %v1555 = vadd.f32 0.0, %v1554
        %v1556 = vpop.f32.mrf.mxu0
        %v1557 = vpop.f32.mrf.mxu0
        %v1558 = vadd.f32 0.0, %v1557
        %v1559 = vpop.f32.mrf.mxu0
        %1560 = vdwg.mxu0
        %v1561 = vld [vmem:[#allocation2] sm:$0xff]
        %v1562 = vld [vmem:[#allocation2 + $0x8] sm:$0xff]
        %v1563 = vld [vmem:[#allocation2 + $0x10] sm:$0xff]
        %v1564 = vld [vmem:[#allocation2 + $0x18] sm:$0xff]
        %v1565 = vld [vmem:[#allocation2 + $0x20] sm:$0xff]
        %v1566 = vld [vmem:[#allocation2 + $0x28] sm:$0xff]
        %v1567 = vld [vmem:[#allocation2 + $0x30] sm:$0xff]
        %v1568 = vld [vmem:[#allocation2 + $0x38] sm:$0xff]
        %v1569 = vld [vmem:[#allocation2 + $0x40] sm:$0xff]
        %v1570 = vld [vmem:[#allocation2 + $0x48] sm:$0xff]
        %v1571 = vld [vmem:[#allocation2 + $0x50] sm:$0xff]
        %v1572 = vld [vmem:[#allocation2 + $0x58] sm:$0xff]
        %v1573 = vld [vmem:[#allocation2 + $0x60] sm:$0xff]
        %v1574 = vld [vmem:[#allocation2 + $0x68] sm:$0xff]
        %v1575 = vld [vmem:[#allocation2 + $0x70] sm:$0xff]
        %v1576 = vld [vmem:[#allocation2 + $0x78] sm:$0xff]
        %v1577 = vld [vmem:[#allocation2 + $0x80] sm:$0xff]
        %v1578 = vld [vmem:[#allocation2 + $0x88] sm:$0xff]
        %v1579 = vld [vmem:[#allocation2 + $0x90] sm:$0xff]
        %v1580 = vld [vmem:[#allocation2 + $0x98] sm:$0xff]
        %v1581 = vld [vmem:[#allocation2 + $0xa0] sm:$0xff]
        %v1582 = vld [vmem:[#allocation2 + $0xa8] sm:$0xff]
        %v1583 = vld [vmem:[#allocation2 + $0xb0] sm:$0xff]
        %v1584 = vld [vmem:[#allocation2 + $0xb8] sm:$0xff]
        %v1585 = vld [vmem:[#allocation2 + $0xc0] sm:$0xff]
        %v1586 = vld [vmem:[#allocation2 + $0xc8] sm:$0xff]
        %v1587 = vld [vmem:[#allocation2 + $0xd0] sm:$0xff]
        %v1588 = vld [vmem:[#allocation2 + $0xd8] sm:$0xff]
        %v1589 = vld [vmem:[#allocation2 + $0xe0] sm:$0xff]
        %v1590 = vld [vmem:[#allocation2 + $0xe8] sm:$0xff]
        %v1591 = vld [vmem:[#allocation2 + $0xf0] sm:$0xff]
        %v1592 = vld [vmem:[#allocation2 + $0xf8] sm:$0xff]
        %v1593 = vld [vmem:[#allocation2 + $0x100] sm:$0xff]
        %v1594 = vld [vmem:[#allocation2 + $0x108] sm:$0xff]
        %v1595 = vadd.f32 %v1561, %v1427
        %v1596 = vadd.f32 %v1562, %v1430
        %v1597 = vadd.f32 %v1563, %v1435
        %v1598 = vadd.f32 %v1564, %v1438
        %v1599 = vadd.f32 %v1565, %v1443
        %v1600 = vadd.f32 %v1566, %v1446
        %v1601 = vadd.f32 %v1567, %v1451
        %v1602 = vadd.f32 %v1568, %v1454
        %v1603 = vadd.f32 %v1569, %v1459
        %v1604 = vadd.f32 %v1570, %v1462
        %v1605 = vadd.f32 %v1571, %v1467
        %v1606 = vadd.f32 %v1572, %v1470
        %v1607 = vadd.f32 %v1573, %v1475
        %v1608 = vadd.f32 %v1574, %v1478
        %v1609 = vadd.f32 %v1575, %v1483
        %v1610 = vadd.f32 %v1576, %v1486
        %v1611 = vadd.f32 %v1577, %v1491
        %v1612 = vadd.f32 %v1578, %v1494
        %v1613 = vadd.f32 %v1579, %v1499
        %v1614 = vadd.f32 %v1580, %v1502
        %v1615 = vadd.f32 %v1581, %v1507
        %v1616 = vadd.f32 %v1582, %v1510
        %v1617 = vadd.f32 %v1583, %v1515
        %v1618 = vadd.f32 %v1584, %v1518
        %v1619 = vadd.f32 %v1585, %v1523
        %v1620 = vadd.f32 %v1586, %v1526
        %v1621 = vadd.f32 %v1587, %v1531
        %v1622 = vadd.f32 %v1588, %v1534
        %v1623 = vadd.f32 %v1589, %v1539
        %v1624 = vadd.f32 %v1590, %v1542
        %v1625 = vadd.f32 %v1591, %v1547
        %v1626 = vadd.f32 %v1592, %v1550
        %v1627 = vadd.f32 %v1593, %v1555
        %v1628 = vadd.f32 %v1594, %v1558
        %1629 = vst [vmem:[#allocation2] sm:$0xff] %v1595
        %1630 = vst [vmem:[#allocation2 + $0x8] sm:$0xff] %v1596
        %1631 = vst [vmem:[#allocation2 + $0x10] sm:$0xff] %v1597
        %1632 = vst [vmem:[#allocation2 + $0x18] sm:$0xff] %v1598
        %1633 = vst [vmem:[#allocation2 + $0x20] sm:$0xff] %v1599
        %1634 = vst [vmem:[#allocation2 + $0x28] sm:$0xff] %v1600
        %1635 = vst [vmem:[#allocation2 + $0x30] sm:$0xff] %v1601
        %1636 = vst [vmem:[#allocation2 + $0x38] sm:$0xff] %v1602
        %1637 = vst [vmem:[#allocation2 + $0x40] sm:$0xff] %v1603
        %1638 = vst [vmem:[#allocation2 + $0x48] sm:$0xff] %v1604
        %1639 = vst [vmem:[#allocation2 + $0x50] sm:$0xff] %v1605
        %1640 = vst [vmem:[#allocation2 + $0x58] sm:$0xff] %v1606
        %1641 = vst [vmem:[#allocation2 + $0x60] sm:$0xff] %v1607
        %1642 = vst [vmem:[#allocation2 + $0x68] sm:$0xff] %v1608
        %1643 = vst [vmem:[#allocation2 + $0x70] sm:$0xff] %v1609
        %1644 = vst [vmem:[#allocation2 + $0x78] sm:$0xff] %v1610
        %1645 = vst [vmem:[#allocation2 + $0x80] sm:$0xff] %v1611
        %1646 = vst [vmem:[#allocation2 + $0x88] sm:$0xff] %v1612
        %1647 = vst [vmem:[#allocation2 + $0x90] sm:$0xff] %v1613
        %1648 = vst [vmem:[#allocation2 + $0x98] sm:$0xff] %v1614
        %1649 = vst [vmem:[#allocation2 + $0xa0] sm:$0xff] %v1615
        %1650 = vst [vmem:[#allocation2 + $0xa8] sm:$0xff] %v1616
        %1651 = vst [vmem:[#allocation2 + $0xb0] sm:$0xff] %v1617
        %1652 = vst [vmem:[#allocation2 + $0xb8] sm:$0xff] %v1618
        %1653 = vst [vmem:[#allocation2 + $0xc0] sm:$0xff] %v1619
        %1654 = vst [vmem:[#allocation2 + $0xc8] sm:$0xff] %v1620
        %1655 = vst [vmem:[#allocation2 + $0xd0] sm:$0xff] %v1621
        %1656 = vst [vmem:[#allocation2 + $0xd8] sm:$0xff] %v1622
        %1657 = vst [vmem:[#allocation2 + $0xe0] sm:$0xff] %v1623
        %1658 = vst [vmem:[#allocation2 + $0xe8] sm:$0xff] %v1624
        %1659 = vst [vmem:[#allocation2 + $0xf0] sm:$0xff] %v1625
        %1660 = vst [vmem:[#allocation2 + $0xf8] sm:$0xff] %v1626
        %1661 = vst [vmem:[#allocation2 + $0x100] sm:$0xff] %v1627
        %1662 = vst [vmem:[#allocation2 + $0x108] sm:$0xff] %v1628
        %s1663 = scalar_lea.vmem %s4, 72
        %v1664 = vld [vmem:[%s1663] sm:$0xf]
        %v1665 = vld [vmem:[%s1663 + $0x4] sm:$0xf]
        %v1666 = vld [vmem:[%s1663 + $0x8] sm:$0xf]
        %v1667 = vld [vmem:[%s1663 + $0xc] sm:$0xf]
        %v1668 = vld [vmem:[%s1663 + $0x10] sm:$0xf]
        %v1669 = vld [vmem:[%s1663 + $0x14] sm:$0x1]
        %v1676 = vunpack.c.l.b16 %v1664
        %v1677 = vunpack.c.l.b16 %v1665
        %v1678 = vunpack.c.l.b16 %v1666
        %v1679 = vunpack.c.l.b16 %v1667
        %v1680 = vunpack.c.l.b16 %v1668
        %v1681 = vunpack.c.l.b16 %v1669
        %v1682 = vpack.c.b16 %v1677, %v1676
        %v1683 = vpack.c.b16 %v1679, %v1678
        %v1684 = vpack.c.b16 %v1681, %v1680
        %v1688 = vsel %vm754, %v729, 0
        %v1691 = vsel %vm806, %v1684, 0
        %1693 = vmatprep.subr.bf16.mxu0 0
        %1694 = vmatpush1.bf16.msra.mxu0 0
        %1695 = vmatprep.subr.bf16.mxu0 0
        %1696 = vmatpush1.bf16.msra.mxu0 0
        %1697 = vmatprep.subr.bf16.mxu0 0
        %1698 = vmatpush1.bf16.msra.mxu0 0
        %1699 = vmatprep.subr.bf16.mxu0 0
        %1700 = vmatpush1.bf16.msra.mxu0 0
        %1701 = vmatprep.subr.bf16.mxu0 0
        %1702 = vmatpush1.bf16.msra.mxu0 0
        %1703 = vmatprep.subr.bf16.mxu0 0
        %1704 = vmatpush1.bf16.msra.mxu0 %v1691
        %1705 = vmatprep.subr.bf16.mxu0 0
        %1706 = vmatpush1.bf16.msra.mxu0 %v1683
        %1707 = vmatprep.subr.bf16.mxu0 0
        %1708 = vmatpush1.bf16.msra.mxu0 %v1682
        %1709 = vmatprep.subr.bf16.mxu0 0
        %1710 = vmatpush2.bf16.msra.mxu0 0
        %1711 = vmatprep.subr.bf16.mxu0 0
        %1712 = vmatpush2.bf16.msra.mxu0 0
        %1713 = vmatprep.subr.bf16.mxu0 0
        %1714 = vmatpush2.bf16.msra.mxu0 0
        %1715 = vmatprep.subr.bf16.mxu0 0
        %1716 = vmatpush2.bf16.msra.mxu0 0
        %1717 = vmatprep.subr.bf16.mxu0 0
        %1718 = vmatpush2.bf16.msra.mxu0 0
        %1719 = vmatprep.subr.bf16.mxu0 0
        %1720 = vmatpush2.bf16.msra.mxu0 0
        %1721 = vmatprep.subr.bf16.mxu0 0
        %1722 = vmatpush2.bf16.msra.mxu0 0
        %1723 = vmatprep.subr.bf16.mxu0 0
        %1724 = vmatpush2.bf16.msra.mxu0 0
        %1725 = vmatprep.mubr.bf16.mxu0 0
        %1726 = vmatmul.mubr.bf16.gmra.mxu0 %v1041
        %v1727 = vpop.f32.mrf.mxu0
        %v1728 = vadd.f32 0.0, %v1727
        %v1729 = vpop.f32.mrf.mxu0
        %v1730 = vpop.f32.mrf.mxu0
        %v1731 = vadd.f32 0.0, %v1730
        %v1732 = vpop.f32.mrf.mxu0
        %1733 = vmatprep.mubr.bf16.mxu0 0
        %1734 = vmatmul.mubr.bf16.gmra.mxu0 %v1044
        %v1735 = vpop.f32.mrf.mxu0
        %v1736 = vadd.f32 0.0, %v1735
        %v1737 = vpop.f32.mrf.mxu0
        %v1738 = vpop.f32.mrf.mxu0
        %v1739 = vadd.f32 0.0, %v1738
        %v1740 = vpop.f32.mrf.mxu0
        %1741 = vmatprep.mubr.bf16.mxu0 0
        %1742 = vmatmul.mubr.bf16.gmra.mxu0 %v1047
        %v1743 = vpop.f32.mrf.mxu0
        %v1744 = vadd.f32 0.0, %v1743
        %v1745 = vpop.f32.mrf.mxu0
        %v1746 = vpop.f32.mrf.mxu0
        %v1747 = vadd.f32 0.0, %v1746
        %v1748 = vpop.f32.mrf.mxu0
        %1749 = vmatprep.mubr.bf16.mxu0 0
        %1750 = vmatmul.mubr.bf16.gmra.mxu0 %v1050
        %v1751 = vpop.f32.mrf.mxu0
        %v1752 = vadd.f32 0.0, %v1751
        %v1753 = vpop.f32.mrf.mxu0
        %v1754 = vpop.f32.mrf.mxu0
        %v1755 = vadd.f32 0.0, %v1754
        %v1756 = vpop.f32.mrf.mxu0
        %1757 = vmatprep.mubr.bf16.mxu0 0
        %1758 = vmatmul.mubr.bf16.gmra.mxu0 %v1053
        %v1759 = vpop.f32.mrf.mxu0
        %v1760 = vadd.f32 0.0, %v1759
        %v1761 = vpop.f32.mrf.mxu0
        %v1762 = vpop.f32.mrf.mxu0
        %v1763 = vadd.f32 0.0, %v1762
        %v1764 = vpop.f32.mrf.mxu0
        %1765 = vmatprep.mubr.bf16.mxu0 0
        %1766 = vmatmul.mubr.bf16.gmra.mxu0 %v1056
        %v1767 = vpop.f32.mrf.mxu0
        %v1768 = vadd.f32 0.0, %v1767
        %v1769 = vpop.f32.mrf.mxu0
        %v1770 = vpop.f32.mrf.mxu0
        %v1771 = vadd.f32 0.0, %v1770
        %v1772 = vpop.f32.mrf.mxu0
        %1773 = vmatprep.mubr.bf16.mxu0 0
        %1774 = vmatmul.mubr.bf16.gmra.mxu0 %v1059
        %v1775 = vpop.f32.mrf.mxu0
        %v1776 = vadd.f32 0.0, %v1775
        %v1777 = vpop.f32.mrf.mxu0
        %v1778 = vpop.f32.mrf.mxu0
        %v1779 = vadd.f32 0.0, %v1778
        %v1780 = vpop.f32.mrf.mxu0
        %1781 = vmatprep.mubr.bf16.mxu0 0
        %1782 = vmatmul.mubr.bf16.gmra.mxu0 %v1062
        %v1783 = vpop.f32.mrf.mxu0
        %v1784 = vadd.f32 0.0, %v1783
        %v1785 = vpop.f32.mrf.mxu0
        %v1786 = vpop.f32.mrf.mxu0
        %v1787 = vadd.f32 0.0, %v1786
        %v1788 = vpop.f32.mrf.mxu0
        %1789 = vmatprep.mubr.bf16.mxu0 0
        %1790 = vmatmul.mubr.bf16.gmra.mxu0 %v1065
        %v1791 = vpop.f32.mrf.mxu0
        %v1792 = vadd.f32 0.0, %v1791
        %v1793 = vpop.f32.mrf.mxu0
        %v1794 = vpop.f32.mrf.mxu0
        %v1795 = vadd.f32 0.0, %v1794
        %v1796 = vpop.f32.mrf.mxu0
        %1797 = vmatprep.mubr.bf16.mxu0 0
        %1798 = vmatmul.mubr.bf16.gmra.mxu0 %v1068
        %v1799 = vpop.f32.mrf.mxu0
        %v1800 = vadd.f32 0.0, %v1799
        %v1801 = vpop.f32.mrf.mxu0
        %v1802 = vpop.f32.mrf.mxu0
        %v1803 = vadd.f32 0.0, %v1802
        %v1804 = vpop.f32.mrf.mxu0
        %1805 = vmatprep.mubr.bf16.mxu0 0
        %1806 = vmatmul.mubr.bf16.gmra.mxu0 %v1071
        %v1807 = vpop.f32.mrf.mxu0
        %v1808 = vadd.f32 0.0, %v1807
        %v1809 = vpop.f32.mrf.mxu0
        %v1810 = vpop.f32.mrf.mxu0
        %v1811 = vadd.f32 0.0, %v1810
        %v1812 = vpop.f32.mrf.mxu0
        %1813 = vmatprep.mubr.bf16.mxu0 0
        %1814 = vmatmul.mubr.bf16.gmra.mxu0 %v1074
        %v1815 = vpop.f32.mrf.mxu0
        %v1816 = vadd.f32 0.0, %v1815
        %v1817 = vpop.f32.mrf.mxu0
        %v1818 = vpop.f32.mrf.mxu0
        %v1819 = vadd.f32 0.0, %v1818
        %v1820 = vpop.f32.mrf.mxu0
        %1821 = vmatprep.mubr.bf16.mxu0 0
        %1822 = vmatmul.mubr.bf16.gmra.mxu0 %v1077
        %v1823 = vpop.f32.mrf.mxu0
        %v1824 = vadd.f32 0.0, %v1823
        %v1825 = vpop.f32.mrf.mxu0
        %v1826 = vpop.f32.mrf.mxu0
        %v1827 = vadd.f32 0.0, %v1826
        %v1828 = vpop.f32.mrf.mxu0
        %1829 = vmatprep.mubr.bf16.mxu0 0
        %1830 = vmatmul.mubr.bf16.gmra.mxu0 %v1080
        %v1831 = vpop.f32.mrf.mxu0
        %v1832 = vadd.f32 0.0, %v1831
        %v1833 = vpop.f32.mrf.mxu0
        %v1834 = vpop.f32.mrf.mxu0
        %v1835 = vadd.f32 0.0, %v1834
        %v1836 = vpop.f32.mrf.mxu0
        %1837 = vmatprep.mubr.bf16.mxu0 0
        %1838 = vmatmul.mubr.bf16.gmra.mxu0 %v1083
        %v1839 = vpop.f32.mrf.mxu0
        %v1840 = vadd.f32 0.0, %v1839
        %v1841 = vpop.f32.mrf.mxu0
        %v1842 = vpop.f32.mrf.mxu0
        %v1843 = vadd.f32 0.0, %v1842
        %v1844 = vpop.f32.mrf.mxu0
        %1845 = vmatprep.mubr.bf16.mxu0 0
        %1846 = vmatmul.mubr.bf16.gmra.mxu0 %v1086
        %v1847 = vpop.f32.mrf.mxu0
        %v1848 = vadd.f32 0.0, %v1847
        %v1849 = vpop.f32.mrf.mxu0
        %v1850 = vpop.f32.mrf.mxu0
        %v1851 = vadd.f32 0.0, %v1850
        %v1852 = vpop.f32.mrf.mxu0
        %1853 = vmatprep.mubr.bf16.mxu0 0
        %1854 = vmatmul.mubr.bf16.gmra.mxu0 %v1688
        %v1855 = vpop.f32.mrf.mxu0
        %v1856 = vadd.f32 0.0, %v1855
        %v1857 = vpop.f32.mrf.mxu0
        %v1858 = vpop.f32.mrf.mxu0
        %v1859 = vadd.f32 0.0, %v1858
        %v1860 = vpop.f32.mrf.mxu0
        %1861 = vdwg.mxu0
        %v1862 = vld [vmem:[#allocation2] sm:$0xff]
        %v1863 = vld [vmem:[#allocation2 + $0x8] sm:$0xff]
        %v1864 = vld [vmem:[#allocation2 + $0x10] sm:$0xff]
        %v1865 = vld [vmem:[#allocation2 + $0x18] sm:$0xff]
        %v1866 = vld [vmem:[#allocation2 + $0x20] sm:$0xff]
        %v1867 = vld [vmem:[#allocation2 + $0x28] sm:$0xff]
        %v1868 = vld [vmem:[#allocation2 + $0x30] sm:$0xff]
        %v1869 = vld [vmem:[#allocation2 + $0x38] sm:$0xff]
        %v1870 = vld [vmem:[#allocation2 + $0x40] sm:$0xff]
        %v1871 = vld [vmem:[#allocation2 + $0x48] sm:$0xff]
        %v1872 = vld [vmem:[#allocation2 + $0x50] sm:$0xff]
        %v1873 = vld [vmem:[#allocation2 + $0x58] sm:$0xff]
        %v1874 = vld [vmem:[#allocation2 + $0x60] sm:$0xff]
        %v1875 = vld [vmem:[#allocation2 + $0x68] sm:$0xff]
        %v1876 = vld [vmem:[#allocation2 + $0x70] sm:$0xff]
        %v1877 = vld [vmem:[#allocation2 + $0x78] sm:$0xff]
        %v1878 = vld [vmem:[#allocation2 + $0x80] sm:$0xff]
        %v1879 = vld [vmem:[#allocation2 + $0x88] sm:$0xff]
        %v1880 = vld [vmem:[#allocation2 + $0x90] sm:$0xff]
        %v1881 = vld [vmem:[#allocation2 + $0x98] sm:$0xff]
        %v1882 = vld [vmem:[#allocation2 + $0xa0] sm:$0xff]
        %v1883 = vld [vmem:[#allocation2 + $0xa8] sm:$0xff]
        %v1884 = vld [vmem:[#allocation2 + $0xb0] sm:$0xff]
        %v1885 = vld [vmem:[#allocation2 + $0xb8] sm:$0xff]
        %v1886 = vld [vmem:[#allocation2 + $0xc0] sm:$0xff]
        %v1887 = vld [vmem:[#allocation2 + $0xc8] sm:$0xff]
        %v1888 = vld [vmem:[#allocation2 + $0xd0] sm:$0xff]
        %v1889 = vld [vmem:[#allocation2 + $0xd8] sm:$0xff]
        %v1890 = vld [vmem:[#allocation2 + $0xe0] sm:$0xff]
        %v1891 = vld [vmem:[#allocation2 + $0xe8] sm:$0xff]
        %v1892 = vld [vmem:[#allocation2 + $0xf0] sm:$0xff]
        %v1893 = vld [vmem:[#allocation2 + $0xf8] sm:$0xff]
        %v1894 = vld [vmem:[#allocation2 + $0x100] sm:$0xff]
        %v1895 = vld [vmem:[#allocation2 + $0x108] sm:$0xff]
        %v1896 = vadd.f32 %v1862, %v1728
        %v1897 = vadd.f32 %v1863, %v1731
        %v1898 = vadd.f32 %v1864, %v1736
        %v1899 = vadd.f32 %v1865, %v1739
        %v1900 = vadd.f32 %v1866, %v1744
        %v1901 = vadd.f32 %v1867, %v1747
        %v1902 = vadd.f32 %v1868, %v1752
        %v1903 = vadd.f32 %v1869, %v1755
        %v1904 = vadd.f32 %v1870, %v1760
        %v1905 = vadd.f32 %v1871, %v1763
        %v1906 = vadd.f32 %v1872, %v1768
        %v1907 = vadd.f32 %v1873, %v1771
        %v1908 = vadd.f32 %v1874, %v1776
        %v1909 = vadd.f32 %v1875, %v1779
        %v1910 = vadd.f32 %v1876, %v1784
        %v1911 = vadd.f32 %v1877, %v1787
        %v1912 = vadd.f32 %v1878, %v1792
        %v1913 = vadd.f32 %v1879, %v1795
        %v1914 = vadd.f32 %v1880, %v1800
        %v1915 = vadd.f32 %v1881, %v1803
        %v1916 = vadd.f32 %v1882, %v1808
        %v1917 = vadd.f32 %v1883, %v1811
        %v1918 = vadd.f32 %v1884, %v1816
        %v1919 = vadd.f32 %v1885, %v1819
        %v1920 = vadd.f32 %v1886, %v1824
        %v1921 = vadd.f32 %v1887, %v1827
        %v1922 = vadd.f32 %v1888, %v1832
        %v1923 = vadd.f32 %v1889, %v1835
        %v1924 = vadd.f32 %v1890, %v1840
        %v1925 = vadd.f32 %v1891, %v1843
        %v1926 = vadd.f32 %v1892, %v1848
        %v1927 = vadd.f32 %v1893, %v1851
        %v1928 = vadd.f32 %v1894, %v1856
        %v1929 = vadd.f32 %v1895, %v1859
        %1930 = vst [vmem:[#allocation2] sm:$0xff] %v1896
        %1931 = vst [vmem:[#allocation2 + $0x8] sm:$0xff] %v1897
        %1932 = vst [vmem:[#allocation2 + $0x10] sm:$0xff] %v1898
        %1933 = vst [vmem:[#allocation2 + $0x18] sm:$0xff] %v1899
        %1934 = vst [vmem:[#allocation2 + $0x20] sm:$0xff] %v1900
        %1935 = vst [vmem:[#allocation2 + $0x28] sm:$0xff] %v1901
        %1936 = vst [vmem:[#allocation2 + $0x30] sm:$0xff] %v1902
        %1937 = vst [vmem:[#allocation2 + $0x38] sm:$0xff] %v1903
        %1938 = vst [vmem:[#allocation2 + $0x40] sm:$0xff] %v1904
        %1939 = vst [vmem:[#allocation2 + $0x48] sm:$0xff] %v1905
        %1940 = vst [vmem:[#allocation2 + $0x50] sm:$0xff] %v1906
        %1941 = vst [vmem:[#allocation2 + $0x58] sm:$0xff] %v1907
        %1942 = vst [vmem:[#allocation2 + $0x60] sm:$0xff] %v1908
        %1943 = vst [vmem:[#allocation2 + $0x68] sm:$0xff] %v1909
        %1944 = vst [vmem:[#allocation2 + $0x70] sm:$0xff] %v1910
        %1945 = vst [vmem:[#allocation2 + $0x78] sm:$0xff] %v1911
        %1946 = vst [vmem:[#allocation2 + $0x80] sm:$0xff] %v1912
        %1947 = vst [vmem:[#allocation2 + $0x88] sm:$0xff] %v1913
        %1948 = vst [vmem:[#allocation2 + $0x90] sm:$0xff] %v1914
        %1949 = vst [vmem:[#allocation2 + $0x98] sm:$0xff] %v1915
        %1950 = vst [vmem:[#allocation2 + $0xa0] sm:$0xff] %v1916
        %1951 = vst [vmem:[#allocation2 + $0xa8] sm:$0xff] %v1917
        %1952 = vst [vmem:[#allocation2 + $0xb0] sm:$0xff] %v1918
        %1953 = vst [vmem:[#allocation2 + $0xb8] sm:$0xff] %v1919
        %1954 = vst [vmem:[#allocation2 + $0xc0] sm:$0xff] %v1920
        %1955 = vst [vmem:[#allocation2 + $0xc8] sm:$0xff] %v1921
        %1956 = vst [vmem:[#allocation2 + $0xd0] sm:$0xff] %v1922
        %1957 = vst [vmem:[#allocation2 + $0xd8] sm:$0xff] %v1923
        %1958 = vst [vmem:[#allocation2 + $0xe0] sm:$0xff] %v1924
        %1959 = vst [vmem:[#allocation2 + $0xe8] sm:$0xff] %v1925
        %1960 = vst [vmem:[#allocation2 + $0xf0] sm:$0xff] %v1926
        %1961 = vst [vmem:[#allocation2 + $0xf8] sm:$0xff] %v1927
        %1962 = vst [vmem:[#allocation2 + $0x100] sm:$0xff] %v1928
        %1963 = vst [vmem:[#allocation2 + $0x108] sm:$0xff] %v1929
        %s1964 = scalar_lea.vmem %s4, 96
        %v1965 = vld [vmem:[%s1964] sm:$0xf]
        %v1966 = vld [vmem:[%s1964 + $0x4] sm:$0xf]
        %v1967 = vld [vmem:[%s1964 + $0x8] sm:$0xf]
        %v1968 = vld [vmem:[%s1964 + $0xc] sm:$0xf]
        %v1969 = vld [vmem:[%s1964 + $0x10] sm:$0xf]
        %v1970 = vld [vmem:[%s1964 + $0x14] sm:$0x1]
        %v1977 = vunpack.c.l.b16 %v1965
        %v1978 = vunpack.c.l.b16 %v1966
        %v1979 = vunpack.c.l.b16 %v1967
        %v1980 = vunpack.c.l.b16 %v1968
        %v1981 = vunpack.c.l.b16 %v1969
        %v1982 = vunpack.c.l.b16 %v1970
        %v1983 = vpack.c.b16 %v1978, %v1977
        %v1984 = vpack.c.b16 %v1980, %v1979
        %v1985 = vpack.c.b16 %v1982, %v1981
        %v1989 = vsel %vm754, %v596, 0
        %v1992 = vsel %vm806, %v1985, 0
        %1994 = vmatprep.subr.bf16.mxu0 0
        %1995 = vmatpush1.bf16.msra.mxu0 0
        %1996 = vmatprep.subr.bf16.mxu0 0
        %1997 = vmatpush1.bf16.msra.mxu0 0
        %1998 = vmatprep.subr.bf16.mxu0 0
        %1999 = vmatpush1.bf16.msra.mxu0 0
        %2000 = vmatprep.subr.bf16.mxu0 0
        %2001 = vmatpush1.bf16.msra.mxu0 0
        %2002 = vmatprep.subr.bf16.mxu0 0
        %2003 = vmatpush1.bf16.msra.mxu0 0
        %2004 = vmatprep.subr.bf16.mxu0 0
        %2005 = vmatpush1.bf16.msra.mxu0 %v1992
        %2006 = vmatprep.subr.bf16.mxu0 0
        %2007 = vmatpush1.bf16.msra.mxu0 %v1984
        %2008 = vmatprep.subr.bf16.mxu0 0
        %2009 = vmatpush1.bf16.msra.mxu0 %v1983
        %2010 = vmatprep.subr.bf16.mxu0 0
        %2011 = vmatpush2.bf16.msra.mxu0 0
        %2012 = vmatprep.subr.bf16.mxu0 0
        %2013 = vmatpush2.bf16.msra.mxu0 0
        %2014 = vmatprep.subr.bf16.mxu0 0
        %2015 = vmatpush2.bf16.msra.mxu0 0
        %2016 = vmatprep.subr.bf16.mxu0 0
        %2017 = vmatpush2.bf16.msra.mxu0 0
        %2018 = vmatprep.subr.bf16.mxu0 0
        %2019 = vmatpush2.bf16.msra.mxu0 0
        %2020 = vmatprep.subr.bf16.mxu0 0
        %2021 = vmatpush2.bf16.msra.mxu0 0
        %2022 = vmatprep.subr.bf16.mxu0 0
        %2023 = vmatpush2.bf16.msra.mxu0 0
        %2024 = vmatprep.subr.bf16.mxu0 0
        %2025 = vmatpush2.bf16.msra.mxu0 0
        %2026 = vmatprep.mubr.bf16.mxu0 0
        %2027 = vmatmul.mubr.bf16.gmra.mxu0 %v762
        %v2028 = vpop.f32.mrf.mxu0
        %v2029 = vadd.f32 0.0, %v2028
        %v2030 = vpop.f32.mrf.mxu0
        %v2031 = vpop.f32.mrf.mxu0
        %v2032 = vadd.f32 0.0, %v2031
        %v2033 = vpop.f32.mrf.mxu0
        %2034 = vmatprep.mubr.bf16.mxu0 0
        %2035 = vmatmul.mubr.bf16.gmra.mxu0 %v765
        %v2036 = vpop.f32.mrf.mxu0
        %v2037 = vadd.f32 0.0, %v2036
        %v2038 = vpop.f32.mrf.mxu0
        %v2039 = vpop.f32.mrf.mxu0
        %v2040 = vadd.f32 0.0, %v2039
        %v2041 = vpop.f32.mrf.mxu0
        %2042 = vmatprep.mubr.bf16.mxu0 0
        %2043 = vmatmul.mubr.bf16.gmra.mxu0 %v768
        %v2044 = vpop.f32.mrf.mxu0
        %v2045 = vadd.f32 0.0, %v2044
        %v2046 = vpop.f32.mrf.mxu0
        %v2047 = vpop.f32.mrf.mxu0
        %v2048 = vadd.f32 0.0, %v2047
        %v2049 = vpop.f32.mrf.mxu0
        %2050 = vmatprep.mubr.bf16.mxu0 0
        %2051 = vmatmul.mubr.bf16.gmra.mxu0 %v771
        %v2052 = vpop.f32.mrf.mxu0
        %v2053 = vadd.f32 0.0, %v2052
        %v2054 = vpop.f32.mrf.mxu0
        %v2055 = vpop.f32.mrf.mxu0
        %v2056 = vadd.f32 0.0, %v2055
        %v2057 = vpop.f32.mrf.mxu0
        %2058 = vmatprep.mubr.bf16.mxu0 0
        %2059 = vmatmul.mubr.bf16.gmra.mxu0 %v774
        %v2060 = vpop.f32.mrf.mxu0
        %v2061 = vadd.f32 0.0, %v2060
        %v2062 = vpop.f32.mrf.mxu0
        %v2063 = vpop.f32.mrf.mxu0
        %v2064 = vadd.f32 0.0, %v2063
        %v2065 = vpop.f32.mrf.mxu0
        %2066 = vmatprep.mubr.bf16.mxu0 0
        %2067 = vmatmul.mubr.bf16.gmra.mxu0 %v777
        %v2068 = vpop.f32.mrf.mxu0
        %v2069 = vadd.f32 0.0, %v2068
        %v2070 = vpop.f32.mrf.mxu0
        %v2071 = vpop.f32.mrf.mxu0
        %v2072 = vadd.f32 0.0, %v2071
        %v2073 = vpop.f32.mrf.mxu0
        %2074 = vmatprep.mubr.bf16.mxu0 0
        %2075 = vmatmul.mubr.bf16.gmra.mxu0 %v780
        %v2076 = vpop.f32.mrf.mxu0
        %v2077 = vadd.f32 0.0, %v2076
        %v2078 = vpop.f32.mrf.mxu0
        %v2079 = vpop.f32.mrf.mxu0
        %v2080 = vadd.f32 0.0, %v2079
        %v2081 = vpop.f32.mrf.mxu0
        %2082 = vmatprep.mubr.bf16.mxu0 0
        %2083 = vmatmul.mubr.bf16.gmra.mxu0 %v783
        %v2084 = vpop.f32.mrf.mxu0
        %v2085 = vadd.f32 0.0, %v2084
        %v2086 = vpop.f32.mrf.mxu0
        %v2087 = vpop.f32.mrf.mxu0
        %v2088 = vadd.f32 0.0, %v2087
        %v2089 = vpop.f32.mrf.mxu0
        %2090 = vmatprep.mubr.bf16.mxu0 0
        %2091 = vmatmul.mubr.bf16.gmra.mxu0 %v786
        %v2092 = vpop.f32.mrf.mxu0
        %v2093 = vadd.f32 0.0, %v2092
        %v2094 = vpop.f32.mrf.mxu0
        %v2095 = vpop.f32.mrf.mxu0
        %v2096 = vadd.f32 0.0, %v2095
        %v2097 = vpop.f32.mrf.mxu0
        %2098 = vmatprep.mubr.bf16.mxu0 0
        %2099 = vmatmul.mubr.bf16.gmra.mxu0 %v789
        %v2100 = vpop.f32.mrf.mxu0
        %v2101 = vadd.f32 0.0, %v2100
        %v2102 = vpop.f32.mrf.mxu0
        %v2103 = vpop.f32.mrf.mxu0
        %v2104 = vadd.f32 0.0, %v2103
        %v2105 = vpop.f32.mrf.mxu0
        %2106 = vmatprep.mubr.bf16.mxu0 0
        %2107 = vmatmul.mubr.bf16.gmra.mxu0 %v792
        %v2108 = vpop.f32.mrf.mxu0
        %v2109 = vadd.f32 0.0, %v2108
        %v2110 = vpop.f32.mrf.mxu0
        %v2111 = vpop.f32.mrf.mxu0
        %v2112 = vadd.f32 0.0, %v2111
        %v2113 = vpop.f32.mrf.mxu0
        %2114 = vmatprep.mubr.bf16.mxu0 0
        %2115 = vmatmul.mubr.bf16.gmra.mxu0 %v795
        %v2116 = vpop.f32.mrf.mxu0
        %v2117 = vadd.f32 0.0, %v2116
        %v2118 = vpop.f32.mrf.mxu0
        %v2119 = vpop.f32.mrf.mxu0
        %v2120 = vadd.f32 0.0, %v2119
        %v2121 = vpop.f32.mrf.mxu0
        %2122 = vmatprep.mubr.bf16.mxu0 0
        %2123 = vmatmul.mubr.bf16.gmra.mxu0 %v798
        %v2124 = vpop.f32.mrf.mxu0
        %v2125 = vadd.f32 0.0, %v2124
        %v2126 = vpop.f32.mrf.mxu0
        %v2127 = vpop.f32.mrf.mxu0
        %v2128 = vadd.f32 0.0, %v2127
        %v2129 = vpop.f32.mrf.mxu0
        %2130 = vmatprep.mubr.bf16.mxu0 0
        %2131 = vmatmul.mubr.bf16.gmra.mxu0 %v801
        %v2132 = vpop.f32.mrf.mxu0
        %v2133 = vadd.f32 0.0, %v2132
        %v2134 = vpop.f32.mrf.mxu0
        %v2135 = vpop.f32.mrf.mxu0
        %v2136 = vadd.f32 0.0, %v2135
        %v2137 = vpop.f32.mrf.mxu0
        %2138 = vmatprep.mubr.bf16.mxu0 0
        %2139 = vmatmul.mubr.bf16.gmra.mxu0 %v804
        %v2140 = vpop.f32.mrf.mxu0
        %v2141 = vadd.f32 0.0, %v2140
        %v2142 = vpop.f32.mrf.mxu0
        %v2143 = vpop.f32.mrf.mxu0
        %v2144 = vadd.f32 0.0, %v2143
        %v2145 = vpop.f32.mrf.mxu0
        %2146 = vmatprep.mubr.bf16.mxu0 0
        %2147 = vmatmul.mubr.bf16.gmra.mxu0 %v1387
        %v2148 = vpop.f32.mrf.mxu0
        %v2149 = vadd.f32 0.0, %v2148
        %v2150 = vpop.f32.mrf.mxu0
        %v2151 = vpop.f32.mrf.mxu0
        %v2152 = vadd.f32 0.0, %v2151
        %v2153 = vpop.f32.mrf.mxu0
        %2154 = vmatprep.mubr.bf16.mxu0 0
        %2155 = vmatmul.mubr.bf16.gmra.mxu0 %v1989
        %v2156 = vpop.f32.mrf.mxu0
        %v2157 = vadd.f32 0.0, %v2156
        %v2158 = vpop.f32.mrf.mxu0
        %v2159 = vpop.f32.mrf.mxu0
        %v2160 = vadd.f32 0.0, %v2159
        %v2161 = vpop.f32.mrf.mxu0
        %2162 = vdwg.mxu0
        %v2163 = vld [vmem:[#allocation2] sm:$0xff]
        %v2164 = vld [vmem:[#allocation2 + $0x8] sm:$0xff]
        %v2165 = vld [vmem:[#allocation2 + $0x10] sm:$0xff]
        %v2166 = vld [vmem:[#allocation2 + $0x18] sm:$0xff]
        %v2167 = vld [vmem:[#allocation2 + $0x20] sm:$0xff]
        %v2168 = vld [vmem:[#allocation2 + $0x28] sm:$0xff]
        %v2169 = vld [vmem:[#allocation2 + $0x30] sm:$0xff]
        %v2170 = vld [vmem:[#allocation2 + $0x38] sm:$0xff]
        %v2171 = vld [vmem:[#allocation2 + $0x40] sm:$0xff]
        %v2172 = vld [vmem:[#allocation2 + $0x48] sm:$0xff]
        %v2173 = vld [vmem:[#allocation2 + $0x50] sm:$0xff]
        %v2174 = vld [vmem:[#allocation2 + $0x58] sm:$0xff]
        %v2175 = vld [vmem:[#allocation2 + $0x60] sm:$0xff]
        %v2176 = vld [vmem:[#allocation2 + $0x68] sm:$0xff]
        %v2177 = vld [vmem:[#allocation2 + $0x70] sm:$0xff]
        %v2178 = vld [vmem:[#allocation2 + $0x78] sm:$0xff]
        %v2179 = vld [vmem:[#allocation2 + $0x80] sm:$0xff]
        %v2180 = vld [vmem:[#allocation2 + $0x88] sm:$0xff]
        %v2181 = vld [vmem:[#allocation2 + $0x90] sm:$0xff]
        %v2182 = vld [vmem:[#allocation2 + $0x98] sm:$0xff]
        %v2183 = vld [vmem:[#allocation2 + $0xa0] sm:$0xff]
        %v2184 = vld [vmem:[#allocation2 + $0xa8] sm:$0xff]
        %v2185 = vld [vmem:[#allocation2 + $0xb0] sm:$0xff]
        %v2186 = vld [vmem:[#allocation2 + $0xb8] sm:$0xff]
        %v2187 = vld [vmem:[#allocation2 + $0xc0] sm:$0xff]
        %v2188 = vld [vmem:[#allocation2 + $0xc8] sm:$0xff]
        %v2189 = vld [vmem:[#allocation2 + $0xd0] sm:$0xff]
        %v2190 = vld [vmem:[#allocation2 + $0xd8] sm:$0xff]
        %v2191 = vld [vmem:[#allocation2 + $0xe0] sm:$0xff]
        %v2192 = vld [vmem:[#allocation2 + $0xe8] sm:$0xff]
        %v2193 = vld [vmem:[#allocation2 + $0xf0] sm:$0xff]
        %v2194 = vld [vmem:[#allocation2 + $0xf8] sm:$0xff]
        %v2195 = vld [vmem:[#allocation2 + $0x100] sm:$0xff]
        %v2196 = vld [vmem:[#allocation2 + $0x108] sm:$0xff]
        %v2197 = vadd.f32 %v2163, %v2029
        %v2198 = vadd.f32 %v2164, %v2032
        %v2199 = vadd.f32 %v2165, %v2037
        %v2200 = vadd.f32 %v2166, %v2040
        %v2201 = vadd.f32 %v2167, %v2045
        %v2202 = vadd.f32 %v2168, %v2048
        %v2203 = vadd.f32 %v2169, %v2053
        %v2204 = vadd.f32 %v2170, %v2056
        %v2205 = vadd.f32 %v2171, %v2061
        %v2206 = vadd.f32 %v2172, %v2064
        %v2207 = vadd.f32 %v2173, %v2069
        %v2208 = vadd.f32 %v2174, %v2072
        %v2209 = vadd.f32 %v2175, %v2077
        %v2210 = vadd.f32 %v2176, %v2080
        %v2211 = vadd.f32 %v2177, %v2085
        %v2212 = vadd.f32 %v2178, %v2088
        %v2213 = vadd.f32 %v2179, %v2093
        %v2214 = vadd.f32 %v2180, %v2096
        %v2215 = vadd.f32 %v2181, %v2101
        %v2216 = vadd.f32 %v2182, %v2104
        %v2217 = vadd.f32 %v2183, %v2109
        %v2218 = vadd.f32 %v2184, %v2112
        %v2219 = vadd.f32 %v2185, %v2117
        %v2220 = vadd.f32 %v2186, %v2120
        %v2221 = vadd.f32 %v2187, %v2125
        %v2222 = vadd.f32 %v2188, %v2128
        %v2223 = vadd.f32 %v2189, %v2133
        %v2224 = vadd.f32 %v2190, %v2136
        %v2225 = vadd.f32 %v2191, %v2141
        %v2226 = vadd.f32 %v2192, %v2144
        %v2227 = vadd.f32 %v2193, %v2149
        %v2228 = vadd.f32 %v2194, %v2152
        %v2229 = vadd.f32 %v2195, %v2157
        %v2230 = vadd.f32 %v2196, %v2160
        %2231 = vst [vmem:[#allocation2] sm:$0xff] %v2197
        %2232 = vst [vmem:[#allocation2 + $0x8] sm:$0xff] %v2198
        %2233 = vst [vmem:[#allocation2 + $0x10] sm:$0xff] %v2199
        %2234 = vst [vmem:[#allocation2 + $0x18] sm:$0xff] %v2200
        %2235 = vst [vmem:[#allocation2 + $0x20] sm:$0xff] %v2201
        %2236 = vst [vmem:[#allocation2 + $0x28] sm:$0xff] %v2202
        %2237 = vst [vmem:[#allocation2 + $0x30] sm:$0xff] %v2203
        %2238 = vst [vmem:[#allocation2 + $0x38] sm:$0xff] %v2204
        %2239 = vst [vmem:[#allocation2 + $0x40] sm:$0xff] %v2205
        %2240 = vst [vmem:[#allocation2 + $0x48] sm:$0xff] %v2206
        %2241 = vst [vmem:[#allocation2 + $0x50] sm:$0xff] %v2207
        %2242 = vst [vmem:[#allocation2 + $0x58] sm:$0xff] %v2208
        %2243 = vst [vmem:[#allocation2 + $0x60] sm:$0xff] %v2209
        %2244 = vst [vmem:[#allocation2 + $0x68] sm:$0xff] %v2210
        %2245 = vst [vmem:[#allocation2 + $0x70] sm:$0xff] %v2211
        %2246 = vst [vmem:[#allocation2 + $0x78] sm:$0xff] %v2212
        %2247 = vst [vmem:[#allocation2 + $0x80] sm:$0xff] %v2213
        %2248 = vst [vmem:[#allocation2 + $0x88] sm:$0xff] %v2214
        %2249 = vst [vmem:[#allocation2 + $0x90] sm:$0xff] %v2215
        %2250 = vst [vmem:[#allocation2 + $0x98] sm:$0xff] %v2216
        %2251 = vst [vmem:[#allocation2 + $0xa0] sm:$0xff] %v2217
        %2252 = vst [vmem:[#allocation2 + $0xa8] sm:$0xff] %v2218
        %2253 = vst [vmem:[#allocation2 + $0xb0] sm:$0xff] %v2219
        %2254 = vst [vmem:[#allocation2 + $0xb8] sm:$0xff] %v2220
        %2255 = vst [vmem:[#allocation2 + $0xc0] sm:$0xff] %v2221
        %2256 = vst [vmem:[#allocation2 + $0xc8] sm:$0xff] %v2222
        %2257 = vst [vmem:[#allocation2 + $0xd0] sm:$0xff] %v2223
        %2258 = vst [vmem:[#allocation2 + $0xd8] sm:$0xff] %v2224
        %2259 = vst [vmem:[#allocation2 + $0xe0] sm:$0xff] %v2225
        %2260 = vst [vmem:[#allocation2 + $0xe8] sm:$0xff] %v2226
        %2261 = vst [vmem:[#allocation2 + $0xf0] sm:$0xff] %v2227
        %2262 = vst [vmem:[#allocation2 + $0xf8] sm:$0xff] %v2228
        %2263 = vst [vmem:[#allocation2 + $0x100] sm:$0xff] %v2229
        %2264 = vst [vmem:[#allocation2 + $0x108] sm:$0xff] %v2230
        %s2265 = scalar_lea.vmem %s4, 120
        %v2266 = vld [vmem:[%s2265] sm:$0xf]
        %v2267 = vld [vmem:[%s2265 + $0x4] sm:$0xf]
        %v2268 = vld [vmem:[%s2265 + $0x8] sm:$0xf]
        %v2269 = vld [vmem:[%s2265 + $0xc] sm:$0xf]
        %v2270 = vld [vmem:[%s2265 + $0x10] sm:$0xf]
        %v2271 = vld [vmem:[%s2265 + $0x14] sm:$0x1]
        %v2278 = vunpack.c.l.b16 %v2266
        %v2279 = vunpack.c.l.b16 %v2267
        %v2280 = vunpack.c.l.b16 %v2268
        %v2281 = vunpack.c.l.b16 %v2269
        %v2282 = vunpack.c.l.b16 %v2270
        %v2283 = vunpack.c.l.b16 %v2271
        %v2284 = vpack.c.b16 %v2279, %v2278
        %v2285 = vpack.c.b16 %v2281, %v2280
        %v2286 = vpack.c.b16 %v2283, %v2282
        %v2290 = vsel %vm754, %v730, 0
        %v2293 = vsel %vm806, %v2286, 0
        %2295 = vmatprep.subr.bf16.mxu0 0
        %2296 = vmatpush1.bf16.msra.mxu0 0
        %2297 = vmatprep.subr.bf16.mxu0 0
        %2298 = vmatpush1.bf16.msra.mxu0 0
        %2299 = vmatprep.subr.bf16.mxu0 0
        %2300 = vmatpush1.bf16.msra.mxu0 0
        %2301 = vmatprep.subr.bf16.mxu0 0
        %2302 = vmatpush1.bf16.msra.mxu0 0
        %2303 = vmatprep.subr.bf16.mxu0 0
        %2304 = vmatpush1.bf16.msra.mxu0 0
        %2305 = vmatprep.subr.bf16.mxu0 0
        %2306 = vmatpush1.bf16.msra.mxu0 %v2293
        %2307 = vmatprep.subr.bf16.mxu0 0
        %2308 = vmatpush1.bf16.msra.mxu0 %v2285
        %2309 = vmatprep.subr.bf16.mxu0 0
        %2310 = vmatpush1.bf16.msra.mxu0 %v2284
        %2311 = vmatprep.subr.bf16.mxu0 0
        %2312 = vmatpush2.bf16.msra.mxu0 0
        %2313 = vmatprep.subr.bf16.mxu0 0
        %2314 = vmatpush2.bf16.msra.mxu0 0
        %2315 = vmatprep.subr.bf16.mxu0 0
        %2316 = vmatpush2.bf16.msra.mxu0 0
        %2317 = vmatprep.subr.bf16.mxu0 0
        %2318 = vmatpush2.bf16.msra.mxu0 0
        %2319 = vmatprep.subr.bf16.mxu0 0
        %2320 = vmatpush2.bf16.msra.mxu0 0
        %2321 = vmatprep.subr.bf16.mxu0 0
        %2322 = vmatpush2.bf16.msra.mxu0 0
        %2323 = vmatprep.subr.bf16.mxu0 0
        %2324 = vmatpush2.bf16.msra.mxu0 0
        %2325 = vmatprep.subr.bf16.mxu0 0
        %2326 = vmatpush2.bf16.msra.mxu0 0
        %2327 = vmatprep.mubr.bf16.mxu0 0
        %2328 = vmatmul.mubr.bf16.gmra.mxu0 %v1044
        %v2329 = vpop.f32.mrf.mxu0
        %v2330 = vadd.f32 0.0, %v2329
        %v2331 = vpop.f32.mrf.mxu0
        %v2332 = vpop.f32.mrf.mxu0
        %v2333 = vadd.f32 0.0, %v2332
        %v2334 = vpop.f32.mrf.mxu0
        %2335 = vmatprep.mubr.bf16.mxu0 0
        %2336 = vmatmul.mubr.bf16.gmra.mxu0 %v1047
        %v2337 = vpop.f32.mrf.mxu0
        %v2338 = vadd.f32 0.0, %v2337
        %v2339 = vpop.f32.mrf.mxu0
        %v2340 = vpop.f32.mrf.mxu0
        %v2341 = vadd.f32 0.0, %v2340
        %v2342 = vpop.f32.mrf.mxu0
        %2343 = vmatprep.mubr.bf16.mxu0 0
        %2344 = vmatmul.mubr.bf16.gmra.mxu0 %v1050
        %v2345 = vpop.f32.mrf.mxu0
        %v2346 = vadd.f32 0.0, %v2345
        %v2347 = vpop.f32.mrf.mxu0
        %v2348 = vpop.f32.mrf.mxu0
        %v2349 = vadd.f32 0.0, %v2348
        %v2350 = vpop.f32.mrf.mxu0
        %2351 = vmatprep.mubr.bf16.mxu0 0
        %2352 = vmatmul.mubr.bf16.gmra.mxu0 %v1053
        %v2353 = vpop.f32.mrf.mxu0
        %v2354 = vadd.f32 0.0, %v2353
        %v2355 = vpop.f32.mrf.mxu0
        %v2356 = vpop.f32.mrf.mxu0
        %v2357 = vadd.f32 0.0, %v2356
        %v2358 = vpop.f32.mrf.mxu0
        %2359 = vmatprep.mubr.bf16.mxu0 0
        %2360 = vmatmul.mubr.bf16.gmra.mxu0 %v1056
        %v2361 = vpop.f32.mrf.mxu0
        %v2362 = vadd.f32 0.0, %v2361
        %v2363 = vpop.f32.mrf.mxu0
        %v2364 = vpop.f32.mrf.mxu0
        %v2365 = vadd.f32 0.0, %v2364
        %v2366 = vpop.f32.mrf.mxu0
        %2367 = vmatprep.mubr.bf16.mxu0 0
        %2368 = vmatmul.mubr.bf16.gmra.mxu0 %v1059
        %v2369 = vpop.f32.mrf.mxu0
        %v2370 = vadd.f32 0.0, %v2369
        %v2371 = vpop.f32.mrf.mxu0
        %v2372 = vpop.f32.mrf.mxu0
        %v2373 = vadd.f32 0.0, %v2372
        %v2374 = vpop.f32.mrf.mxu0
        %2375 = vmatprep.mubr.bf16.mxu0 0
        %2376 = vmatmul.mubr.bf16.gmra.mxu0 %v1062
        %v2377 = vpop.f32.mrf.mxu0
        %v2378 = vadd.f32 0.0, %v2377
        %v2379 = vpop.f32.mrf.mxu0
        %v2380 = vpop.f32.mrf.mxu0
        %v2381 = vadd.f32 0.0, %v2380
        %v2382 = vpop.f32.mrf.mxu0
        %2383 = vmatprep.mubr.bf16.mxu0 0
        %2384 = vmatmul.mubr.bf16.gmra.mxu0 %v1065
        %v2385 = vpop.f32.mrf.mxu0
        %v2386 = vadd.f32 0.0, %v2385
        %v2387 = vpop.f32.mrf.mxu0
        %v2388 = vpop.f32.mrf.mxu0
        %v2389 = vadd.f32 0.0, %v2388
        %v2390 = vpop.f32.mrf.mxu0
        %2391 = vmatprep.mubr.bf16.mxu0 0
        %2392 = vmatmul.mubr.bf16.gmra.mxu0 %v1068
        %v2393 = vpop.f32.mrf.mxu0
        %v2394 = vadd.f32 0.0, %v2393
        %v2395 = vpop.f32.mrf.mxu0
        %v2396 = vpop.f32.mrf.mxu0
        %v2397 = vadd.f32 0.0, %v2396
        %v2398 = vpop.f32.mrf.mxu0
        %2399 = vmatprep.mubr.bf16.mxu0 0
        %2400 = vmatmul.mubr.bf16.gmra.mxu0 %v1071
        %v2401 = vpop.f32.mrf.mxu0
        %v2402 = vadd.f32 0.0, %v2401
        %v2403 = vpop.f32.mrf.mxu0
        %v2404 = vpop.f32.mrf.mxu0
        %v2405 = vadd.f32 0.0, %v2404
        %v2406 = vpop.f32.mrf.mxu0
        %2407 = vmatprep.mubr.bf16.mxu0 0
        %2408 = vmatmul.mubr.bf16.gmra.mxu0 %v1074
        %v2409 = vpop.f32.mrf.mxu0
        %v2410 = vadd.f32 0.0, %v2409
        %v2411 = vpop.f32.mrf.mxu0
        %v2412 = vpop.f32.mrf.mxu0
        %v2413 = vadd.f32 0.0, %v2412
        %v2414 = vpop.f32.mrf.mxu0
        %2415 = vmatprep.mubr.bf16.mxu0 0
        %2416 = vmatmul.mubr.bf16.gmra.mxu0 %v1077
        %v2417 = vpop.f32.mrf.mxu0
        %v2418 = vadd.f32 0.0, %v2417
        %v2419 = vpop.f32.mrf.mxu0
        %v2420 = vpop.f32.mrf.mxu0
        %v2421 = vadd.f32 0.0, %v2420
        %v2422 = vpop.f32.mrf.mxu0
        %2423 = vmatprep.mubr.bf16.mxu0 0
        %2424 = vmatmul.mubr.bf16.gmra.mxu0 %v1080
        %v2425 = vpop.f32.mrf.mxu0
        %v2426 = vadd.f32 0.0, %v2425
        %v2427 = vpop.f32.mrf.mxu0
        %v2428 = vpop.f32.mrf.mxu0
        %v2429 = vadd.f32 0.0, %v2428
        %v2430 = vpop.f32.mrf.mxu0
        %2431 = vmatprep.mubr.bf16.mxu0 0
        %2432 = vmatmul.mubr.bf16.gmra.mxu0 %v1083
        %v2433 = vpop.f32.mrf.mxu0
        %v2434 = vadd.f32 0.0, %v2433
        %v2435 = vpop.f32.mrf.mxu0
        %v2436 = vpop.f32.mrf.mxu0
        %v2437 = vadd.f32 0.0, %v2436
        %v2438 = vpop.f32.mrf.mxu0
        %2439 = vmatprep.mubr.bf16.mxu0 0
        %2440 = vmatmul.mubr.bf16.gmra.mxu0 %v1086
        %v2441 = vpop.f32.mrf.mxu0
        %v2442 = vadd.f32 0.0, %v2441
        %v2443 = vpop.f32.mrf.mxu0
        %v2444 = vpop.f32.mrf.mxu0
        %v2445 = vadd.f32 0.0, %v2444
        %v2446 = vpop.f32.mrf.mxu0
        %2447 = vmatprep.mubr.bf16.mxu0 0
        %2448 = vmatmul.mubr.bf16.gmra.mxu0 %v1688
        %v2449 = vpop.f32.mrf.mxu0
        %v2450 = vadd.f32 0.0, %v2449
        %v2451 = vpop.f32.mrf.mxu0
        %v2452 = vpop.f32.mrf.mxu0
        %v2453 = vadd.f32 0.0, %v2452
        %v2454 = vpop.f32.mrf.mxu0
        %2455 = vmatprep.mubr.bf16.mxu0 0
        %2456 = vmatmul.mubr.bf16.gmra.mxu0 %v2290
        %v2457 = vpop.f32.mrf.mxu0
        %v2458 = vadd.f32 0.0, %v2457
        %v2459 = vpop.f32.mrf.mxu0
        %v2460 = vpop.f32.mrf.mxu0
        %v2461 = vadd.f32 0.0, %v2460
        %v2462 = vpop.f32.mrf.mxu0
        %2463 = vdwg.mxu0
        %v2464 = vld [vmem:[#allocation2] sm:$0xff]
        %v2465 = vld [vmem:[#allocation2 + $0x8] sm:$0xff]
        %v2466 = vld [vmem:[#allocation2 + $0x10] sm:$0xff]
        %v2467 = vld [vmem:[#allocation2 + $0x18] sm:$0xff]
        %v2468 = vld [vmem:[#allocation2 + $0x20] sm:$0xff]
        %v2469 = vld [vmem:[#allocation2 + $0x28] sm:$0xff]
        %v2470 = vld [vmem:[#allocation2 + $0x30] sm:$0xff]
        %v2471 = vld [vmem:[#allocation2 + $0x38] sm:$0xff]
        %v2472 = vld [vmem:[#allocation2 + $0x40] sm:$0xff]
        %v2473 = vld [vmem:[#allocation2 + $0x48] sm:$0xff]
        %v2474 = vld [vmem:[#allocation2 + $0x50] sm:$0xff]
        %v2475 = vld [vmem:[#allocation2 + $0x58] sm:$0xff]
        %v2476 = vld [vmem:[#allocation2 + $0x60] sm:$0xff]
        %v2477 = vld [vmem:[#allocation2 + $0x68] sm:$0xff]
        %v2478 = vld [vmem:[#allocation2 + $0x70] sm:$0xff]
        %v2479 = vld [vmem:[#allocation2 + $0x78] sm:$0xff]
        %v2480 = vld [vmem:[#allocation2 + $0x80] sm:$0xff]
        %v2481 = vld [vmem:[#allocation2 + $0x88] sm:$0xff]
        %v2482 = vld [vmem:[#allocation2 + $0x90] sm:$0xff]
        %v2483 = vld [vmem:[#allocation2 + $0x98] sm:$0xff]
        %v2484 = vld [vmem:[#allocation2 + $0xa0] sm:$0xff]
        %v2485 = vld [vmem:[#allocation2 + $0xa8] sm:$0xff]
        %v2486 = vld [vmem:[#allocation2 + $0xb0] sm:$0xff]
        %v2487 = vld [vmem:[#allocation2 + $0xb8] sm:$0xff]
        %v2488 = vld [vmem:[#allocation2 + $0xc0] sm:$0xff]
        %v2489 = vld [vmem:[#allocation2 + $0xc8] sm:$0xff]
        %v2490 = vld [vmem:[#allocation2 + $0xd0] sm:$0xff]
        %v2491 = vld [vmem:[#allocation2 + $0xd8] sm:$0xff]
        %v2492 = vld [vmem:[#allocation2 + $0xe0] sm:$0xff]
        %v2493 = vld [vmem:[#allocation2 + $0xe8] sm:$0xff]
        %v2494 = vld [vmem:[#allocation2 + $0xf0] sm:$0xff]
        %v2495 = vld [vmem:[#allocation2 + $0xf8] sm:$0xff]
        %v2496 = vld [vmem:[#allocation2 + $0x100] sm:$0xff]
        %v2497 = vld [vmem:[#allocation2 + $0x108] sm:$0xff]
        %v2498 = vadd.f32 %v2464, %v2330
        %v2499 = vadd.f32 %v2465, %v2333
        %v2500 = vadd.f32 %v2466, %v2338
        %v2501 = vadd.f32 %v2467, %v2341
        %v2502 = vadd.f32 %v2468, %v2346
        %v2503 = vadd.f32 %v2469, %v2349
        %v2504 = vadd.f32 %v2470, %v2354
        %v2505 = vadd.f32 %v2471, %v2357
        %v2506 = vadd.f32 %v2472, %v2362
        %v2507 = vadd.f32 %v2473, %v2365
        %v2508 = vadd.f32 %v2474, %v2370
        %v2509 = vadd.f32 %v2475, %v2373
        %v2510 = vadd.f32 %v2476, %v2378
        %v2511 = vadd.f32 %v2477, %v2381
        %v2512 = vadd.f32 %v2478, %v2386
        %v2513 = vadd.f32 %v2479, %v2389
        %v2514 = vadd.f32 %v2480, %v2394
        %v2515 = vadd.f32 %v2481, %v2397
        %v2516 = vadd.f32 %v2482, %v2402
        %v2517 = vadd.f32 %v2483, %v2405
        %v2518 = vadd.f32 %v2484, %v2410
        %v2519 = vadd.f32 %v2485, %v2413
        %v2520 = vadd.f32 %v2486, %v2418
        %v2521 = vadd.f32 %v2487, %v2421
        %v2522 = vadd.f32 %v2488, %v2426
        %v2523 = vadd.f32 %v2489, %v2429
        %v2524 = vadd.f32 %v2490, %v2434
        %v2525 = vadd.f32 %v2491, %v2437
        %v2526 = vadd.f32 %v2492, %v2442
        %v2527 = vadd.f32 %v2493, %v2445
        %v2528 = vadd.f32 %v2494, %v2450
        %v2529 = vadd.f32 %v2495, %v2453
        %v2530 = vadd.f32 %v2496, %v2458
        %v2531 = vadd.f32 %v2497, %v2461
        %2532 = vst [vmem:[#allocation2] sm:$0xff] %v2498
        %2533 = vst [vmem:[#allocation2 + $0x8] sm:$0xff] %v2499
        %2534 = vst [vmem:[#allocation2 + $0x10] sm:$0xff] %v2500
        %2535 = vst [vmem:[#allocation2 + $0x18] sm:$0xff] %v2501
        %2536 = vst [vmem:[#allocation2 + $0x20] sm:$0xff] %v2502
        %2537 = vst [vmem:[#allocation2 + $0x28] sm:$0xff] %v2503
        %2538 = vst [vmem:[#allocation2 + $0x30] sm:$0xff] %v2504
        %2539 = vst [vmem:[#allocation2 + $0x38] sm:$0xff] %v2505
        %2540 = vst [vmem:[#allocation2 + $0x40] sm:$0xff] %v2506
        %2541 = vst [vmem:[#allocation2 + $0x48] sm:$0xff] %v2507
        %2542 = vst [vmem:[#allocation2 + $0x50] sm:$0xff] %v2508
        %2543 = vst [vmem:[#allocation2 + $0x58] sm:$0xff] %v2509
        %2544 = vst [vmem:[#allocation2 + $0x60] sm:$0xff] %v2510
        %2545 = vst [vmem:[#allocation2 + $0x68] sm:$0xff] %v2511
        %2546 = vst [vmem:[#allocation2 + $0x70] sm:$0xff] %v2512
        %2547 = vst [vmem:[#allocation2 + $0x78] sm:$0xff] %v2513
        %2548 = vst [vmem:[#allocation2 + $0x80] sm:$0xff] %v2514
        %2549 = vst [vmem:[#allocation2 + $0x88] sm:$0xff] %v2515
        %2550 = vst [vmem:[#allocation2 + $0x90] sm:$0xff] %v2516
        %2551 = vst [vmem:[#allocation2 + $0x98] sm:$0xff] %v2517
        %2552 = vst [vmem:[#allocation2 + $0xa0] sm:$0xff] %v2518
        %2553 = vst [vmem:[#allocation2 + $0xa8] sm:$0xff] %v2519
        %2554 = vst [vmem:[#allocation2 + $0xb0] sm:$0xff] %v2520
        %2555 = vst [vmem:[#allocation2 + $0xb8] sm:$0xff] %v2521
        %2556 = vst [vmem:[#allocation2 + $0xc0] sm:$0xff] %v2522
        %2557 = vst [vmem:[#allocation2 + $0xc8] sm:$0xff] %v2523
        %2558 = vst [vmem:[#allocation2 + $0xd0] sm:$0xff] %v2524
        %2559 = vst [vmem:[#allocation2 + $0xd8] sm:$0xff] %v2525
        %2560 = vst [vmem:[#allocation2 + $0xe0] sm:$0xff] %v2526
        %2561 = vst [vmem:[#allocation2 + $0xe8] sm:$0xff] %v2527
        %2562 = vst [vmem:[#allocation2 + $0xf0] sm:$0xff] %v2528
        %2563 = vst [vmem:[#allocation2 + $0xf8] sm:$0xff] %v2529
        %2564 = vst [vmem:[#allocation2 + $0x100] sm:$0xff] %v2530
        %2565 = vst [vmem:[#allocation2 + $0x108] sm:$0xff] %v2531
        %s2566 = scalar_lea.vmem %s4, 144
        %v2567 = vld [vmem:[%s2566] sm:$0xf]
        %v2568 = vld [vmem:[%s2566 + $0x4] sm:$0xf]
        %v2569 = vld [vmem:[%s2566 + $0x8] sm:$0xf]
        %v2570 = vld [vmem:[%s2566 + $0xc] sm:$0xf]
        %v2571 = vld [vmem:[%s2566 + $0x10] sm:$0xf]
        %v2572 = vld [vmem:[%s2566 + $0x14] sm:$0x1]
        %v2579 = vunpack.c.l.b16 %v2567
        %v2580 = vunpack.c.l.b16 %v2568
        %v2581 = vunpack.c.l.b16 %v2569
        %v2582 = vunpack.c.l.b16 %v2570
        %v2583 = vunpack.c.l.b16 %v2571
        %v2584 = vunpack.c.l.b16 %v2572
        %v2585 = vpack.c.b16 %v2580, %v2579
        %v2586 = vpack.c.b16 %v2582, %v2581
        %v2587 = vpack.c.b16 %v2584, %v2583
        %v2591 = vsel %vm754, %v597, 0
        %v2594 = vsel %vm806, %v2587, 0
        %2596 = vmatprep.subr.bf16.mxu0 0
        %2597 = vmatpush1.bf16.msra.mxu0 0
        %2598 = vmatprep.subr.bf16.mxu0 0
        %2599 = vmatpush1.bf16.msra.mxu0 0
        %2600 = vmatprep.subr.bf16.mxu0 0
        %2601 = vmatpush1.bf16.msra.mxu0 0
        %2602 = vmatprep.subr.bf16.mxu0 0
        %2603 = vmatpush1.bf16.msra.mxu0 0
        %2604 = vmatprep.subr.bf16.mxu0 0
        %2605 = vmatpush1.bf16.msra.mxu0 0
        %2606 = vmatprep.subr.bf16.mxu0 0
        %2607 = vmatpush1.bf16.msra.mxu0 %v2594
        %2608 = vmatprep.subr.bf16.mxu0 0
        %2609 = vmatpush1.bf16.msra.mxu0 %v2586
        %2610 = vmatprep.subr.bf16.mxu0 0
        %2611 = vmatpush1.bf16.msra.mxu0 %v2585
        %2612 = vmatprep.subr.bf16.mxu0 0
        %2613 = vmatpush2.bf16.msra.mxu0 0
        %2614 = vmatprep.subr.bf16.mxu0 0
        %2615 = vmatpush2.bf16.msra.mxu0 0
        %2616 = vmatprep.subr.bf16.mxu0 0
        %2617 = vmatpush2.bf16.msra.mxu0 0
        %2618 = vmatprep.subr.bf16.mxu0 0
        %2619 = vmatpush2.bf16.msra.mxu0 0
        %2620 = vmatprep.subr.bf16.mxu0 0
        %2621 = vmatpush2.bf16.msra.mxu0 0
        %2622 = vmatprep.subr.bf16.mxu0 0
        %2623 = vmatpush2.bf16.msra.mxu0 0
        %2624 = vmatprep.subr.bf16.mxu0 0
        %2625 = vmatpush2.bf16.msra.mxu0 0
        %2626 = vmatprep.subr.bf16.mxu0 0
        %2627 = vmatpush2.bf16.msra.mxu0 0
        %2628 = vmatprep.mubr.bf16.mxu0 0
        %2629 = vmatmul.mubr.bf16.gmra.mxu0 %v765
        %v2630 = vpop.f32.mrf.mxu0
        %v2631 = vadd.f32 0.0, %v2630
        %v2632 = vpop.f32.mrf.mxu0
        %v2633 = vpop.f32.mrf.mxu0
        %v2634 = vadd.f32 0.0, %v2633
        %v2635 = vpop.f32.mrf.mxu0
        %2636 = vmatprep.mubr.bf16.mxu0 0
        %2637 = vmatmul.mubr.bf16.gmra.mxu0 %v768
        %v2638 = vpop.f32.mrf.mxu0
        %v2639 = vadd.f32 0.0, %v2638
        %v2640 = vpop.f32.mrf.mxu0
        %v2641 = vpop.f32.mrf.mxu0
        %v2642 = vadd.f32 0.0, %v2641
        %v2643 = vpop.f32.mrf.mxu0
        %2644 = vmatprep.mubr.bf16.mxu0 0
        %2645 = vmatmul.mubr.bf16.gmra.mxu0 %v771
        %v2646 = vpop.f32.mrf.mxu0
        %v2647 = vadd.f32 0.0, %v2646
        %v2648 = vpop.f32.mrf.mxu0
        %v2649 = vpop.f32.mrf.mxu0
        %v2650 = vadd.f32 0.0, %v2649
        %v2651 = vpop.f32.mrf.mxu0
        %2652 = vmatprep.mubr.bf16.mxu0 0
        %2653 = vmatmul.mubr.bf16.gmra.mxu0 %v774
        %v2654 = vpop.f32.mrf.mxu0
        %v2655 = vadd.f32 0.0, %v2654
        %v2656 = vpop.f32.mrf.mxu0
        %v2657 = vpop.f32.mrf.mxu0
        %v2658 = vadd.f32 0.0, %v2657
        %v2659 = vpop.f32.mrf.mxu0
        %2660 = vmatprep.mubr.bf16.mxu0 0
        %2661 = vmatmul.mubr.bf16.gmra.mxu0 %v777
        %v2662 = vpop.f32.mrf.mxu0
        %v2663 = vadd.f32 0.0, %v2662
        %v2664 = vpop.f32.mrf.mxu0
        %v2665 = vpop.f32.mrf.mxu0
        %v2666 = vadd.f32 0.0, %v2665
        %v2667 = vpop.f32.mrf.mxu0
        %2668 = vmatprep.mubr.bf16.mxu0 0
        %2669 = vmatmul.mubr.bf16.gmra.mxu0 %v780
        %v2670 = vpop.f32.mrf.mxu0
        %v2671 = vadd.f32 0.0, %v2670
        %v2672 = vpop.f32.mrf.mxu0
        %v2673 = vpop.f32.mrf.mxu0
        %v2674 = vadd.f32 0.0, %v2673
        %v2675 = vpop.f32.mrf.mxu0
        %2676 = vmatprep.mubr.bf16.mxu0 0
        %2677 = vmatmul.mubr.bf16.gmra.mxu0 %v783
        %v2678 = vpop.f32.mrf.mxu0
        %v2679 = vadd.f32 0.0, %v2678
        %v2680 = vpop.f32.mrf.mxu0
        %v2681 = vpop.f32.mrf.mxu0
        %v2682 = vadd.f32 0.0, %v2681
        %v2683 = vpop.f32.mrf.mxu0
        %2684 = vmatprep.mubr.bf16.mxu0 0
        %2685 = vmatmul.mubr.bf16.gmra.mxu0 %v786
        %v2686 = vpop.f32.mrf.mxu0
        %v2687 = vadd.f32 0.0, %v2686
        %v2688 = vpop.f32.mrf.mxu0
        %v2689 = vpop.f32.mrf.mxu0
        %v2690 = vadd.f32 0.0, %v2689
        %v2691 = vpop.f32.mrf.mxu0
        %2692 = vmatprep.mubr.bf16.mxu0 0
        %2693 = vmatmul.mubr.bf16.gmra.mxu0 %v789
        %v2694 = vpop.f32.mrf.mxu0
        %v2695 = vadd.f32 0.0, %v2694
        %v2696 = vpop.f32.mrf.mxu0
        %v2697 = vpop.f32.mrf.mxu0
        %v2698 = vadd.f32 0.0, %v2697
        %v2699 = vpop.f32.mrf.mxu0
        %2700 = vmatprep.mubr.bf16.mxu0 0
        %2701 = vmatmul.mubr.bf16.gmra.mxu0 %v792
        %v2702 = vpop.f32.mrf.mxu0
        %v2703 = vadd.f32 0.0, %v2702
        %v2704 = vpop.f32.mrf.mxu0
        %v2705 = vpop.f32.mrf.mxu0
        %v2706 = vadd.f32 0.0, %v2705
        %v2707 = vpop.f32.mrf.mxu0
        %2708 = vmatprep.mubr.bf16.mxu0 0
        %2709 = vmatmul.mubr.bf16.gmra.mxu0 %v795
        %v2710 = vpop.f32.mrf.mxu0
        %v2711 = vadd.f32 0.0, %v2710
        %v2712 = vpop.f32.mrf.mxu0
        %v2713 = vpop.f32.mrf.mxu0
        %v2714 = vadd.f32 0.0, %v2713
        %v2715 = vpop.f32.mrf.mxu0
        %2716 = vmatprep.mubr.bf16.mxu0 0
        %2717 = vmatmul.mubr.bf16.gmra.mxu0 %v798
        %v2718 = vpop.f32.mrf.mxu0
        %v2719 = vadd.f32 0.0, %v2718
        %v2720 = vpop.f32.mrf.mxu0
        %v2721 = vpop.f32.mrf.mxu0
        %v2722 = vadd.f32 0.0, %v2721
        %v2723 = vpop.f32.mrf.mxu0
        %2724 = vmatprep.mubr.bf16.mxu0 0
        %2725 = vmatmul.mubr.bf16.gmra.mxu0 %v801
        %v2726 = vpop.f32.mrf.mxu0
        %v2727 = vadd.f32 0.0, %v2726
        %v2728 = vpop.f32.mrf.mxu0
        %v2729 = vpop.f32.mrf.mxu0
        %v2730 = vadd.f32 0.0, %v2729
        %v2731 = vpop.f32.mrf.mxu0
        %2732 = vmatprep.mubr.bf16.mxu0 0
        %2733 = vmatmul.mubr.bf16.gmra.mxu0 %v804
        %v2734 = vpop.f32.mrf.mxu0
        %v2735 = vadd.f32 0.0, %v2734
        %v2736 = vpop.f32.mrf.mxu0
        %v2737 = vpop.f32.mrf.mxu0
        %v2738 = vadd.f32 0.0, %v2737
        %v2739 = vpop.f32.mrf.mxu0
        %2740 = vmatprep.mubr.bf16.mxu0 0
        %2741 = vmatmul.mubr.bf16.gmra.mxu0 %v1387
        %v2742 = vpop.f32.mrf.mxu0
        %v2743 = vadd.f32 0.0, %v2742
        %v2744 = vpop.f32.mrf.mxu0
        %v2745 = vpop.f32.mrf.mxu0
        %v2746 = vadd.f32 0.0, %v2745
        %v2747 = vpop.f32.mrf.mxu0
        %2748 = vmatprep.mubr.bf16.mxu0 0
        %2749 = vmatmul.mubr.bf16.gmra.mxu0 %v1989
        %v2750 = vpop.f32.mrf.mxu0
        %v2751 = vadd.f32 0.0, %v2750
        %v2752 = vpop.f32.mrf.mxu0
        %v2753 = vpop.f32.mrf.mxu0
        %v2754 = vadd.f32 0.0, %v2753
        %v2755 = vpop.f32.mrf.mxu0
        %2756 = vmatprep.mubr.bf16.mxu0 0
        %2757 = vmatmul.mubr.bf16.gmra.mxu0 %v2591
        %v2758 = vpop.f32.mrf.mxu0
        %v2759 = vadd.f32 0.0, %v2758
        %v2760 = vpop.f32.mrf.mxu0
        %v2761 = vpop.f32.mrf.mxu0
        %v2762 = vadd.f32 0.0, %v2761
        %v2763 = vpop.f32.mrf.mxu0
        %2764 = vdwg.mxu0
        %v2765 = vld [vmem:[#allocation2] sm:$0xff]
        %v2766 = vld [vmem:[#allocation2 + $0x8] sm:$0xff]
        %v2767 = vld [vmem:[#allocation2 + $0x10] sm:$0xff]
        %v2768 = vld [vmem:[#allocation2 + $0x18] sm:$0xff]
        %v2769 = vld [vmem:[#allocation2 + $0x20] sm:$0xff]
        %v2770 = vld [vmem:[#allocation2 + $0x28] sm:$0xff]
        %v2771 = vld [vmem:[#allocation2 + $0x30] sm:$0xff]
        %v2772 = vld [vmem:[#allocation2 + $0x38] sm:$0xff]
        %v2773 = vld [vmem:[#allocation2 + $0x40] sm:$0xff]
        %v2774 = vld [vmem:[#allocation2 + $0x48] sm:$0xff]
        %v2775 = vld [vmem:[#allocation2 + $0x50] sm:$0xff]
        %v2776 = vld [vmem:[#allocation2 + $0x58] sm:$0xff]
        %v2777 = vld [vmem:[#allocation2 + $0x60] sm:$0xff]
        %v2778 = vld [vmem:[#allocation2 + $0x68] sm:$0xff]
        %v2779 = vld [vmem:[#allocation2 + $0x70] sm:$0xff]
        %v2780 = vld [vmem:[#allocation2 + $0x78] sm:$0xff]
        %v2781 = vld [vmem:[#allocation2 + $0x80] sm:$0xff]
        %v2782 = vld [vmem:[#allocation2 + $0x88] sm:$0xff]
        %v2783 = vld [vmem:[#allocation2 + $0x90] sm:$0xff]
        %v2784 = vld [vmem:[#allocation2 + $0x98] sm:$0xff]
        %v2785 = vld [vmem:[#allocation2 + $0xa0] sm:$0xff]
        %v2786 = vld [vmem:[#allocation2 + $0xa8] sm:$0xff]
        %v2787 = vld [vmem:[#allocation2 + $0xb0] sm:$0xff]
        %v2788 = vld [vmem:[#allocation2 + $0xb8] sm:$0xff]
        %v2789 = vld [vmem:[#allocation2 + $0xc0] sm:$0xff]
        %v2790 = vld [vmem:[#allocation2 + $0xc8] sm:$0xff]
        %v2791 = vld [vmem:[#allocation2 + $0xd0] sm:$0xff]
        %v2792 = vld [vmem:[#allocation2 + $0xd8] sm:$0xff]
        %v2793 = vld [vmem:[#allocation2 + $0xe0] sm:$0xff]
        %v2794 = vld [vmem:[#allocation2 + $0xe8] sm:$0xff]
        %v2795 = vld [vmem:[#allocation2 + $0xf0] sm:$0xff]
        %v2796 = vld [vmem:[#allocation2 + $0xf8] sm:$0xff]
        %v2797 = vld [vmem:[#allocation2 + $0x100] sm:$0xff]
        %v2798 = vld [vmem:[#allocation2 + $0x108] sm:$0xff]
        %v2799 = vadd.f32 %v2765, %v2631
        %v2800 = vadd.f32 %v2766, %v2634
        %v2801 = vadd.f32 %v2767, %v2639
        %v2802 = vadd.f32 %v2768, %v2642
        %v2803 = vadd.f32 %v2769, %v2647
        %v2804 = vadd.f32 %v2770, %v2650
        %v2805 = vadd.f32 %v2771, %v2655
        %v2806 = vadd.f32 %v2772, %v2658
        %v2807 = vadd.f32 %v2773, %v2663
        %v2808 = vadd.f32 %v2774, %v2666
        %v2809 = vadd.f32 %v2775, %v2671
        %v2810 = vadd.f32 %v2776, %v2674
        %v2811 = vadd.f32 %v2777, %v2679
        %v2812 = vadd.f32 %v2778, %v2682
        %v2813 = vadd.f32 %v2779, %v2687
        %v2814 = vadd.f32 %v2780, %v2690
        %v2815 = vadd.f32 %v2781, %v2695
        %v2816 = vadd.f32 %v2782, %v2698
        %v2817 = vadd.f32 %v2783, %v2703
        %v2818 = vadd.f32 %v2784, %v2706
        %v2819 = vadd.f32 %v2785, %v2711
        %v2820 = vadd.f32 %v2786, %v2714
        %v2821 = vadd.f32 %v2787, %v2719
        %v2822 = vadd.f32 %v2788, %v2722
        %v2823 = vadd.f32 %v2789, %v2727
        %v2824 = vadd.f32 %v2790, %v2730
        %v2825 = vadd.f32 %v2791, %v2735
        %v2826 = vadd.f32 %v2792, %v2738
        %v2827 = vadd.f32 %v2793, %v2743
        %v2828 = vadd.f32 %v2794, %v2746
        %v2829 = vadd.f32 %v2795, %v2751
        %v2830 = vadd.f32 %v2796, %v2754
        %v2831 = vadd.f32 %v2797, %v2759
        %v2832 = vadd.f32 %v2798, %v2762
        %2833 = vst [vmem:[#allocation2] sm:$0xff] %v2799
        %2834 = vst [vmem:[#allocation2 + $0x8] sm:$0xff] %v2800
        %2835 = vst [vmem:[#allocation2 + $0x10] sm:$0xff] %v2801
        %2836 = vst [vmem:[#allocation2 + $0x18] sm:$0xff] %v2802
        %2837 = vst [vmem:[#allocation2 + $0x20] sm:$0xff] %v2803
        %2838 = vst [vmem:[#allocation2 + $0x28] sm:$0xff] %v2804
        %2839 = vst [vmem:[#allocation2 + $0x30] sm:$0xff] %v2805
        %2840 = vst [vmem:[#allocation2 + $0x38] sm:$0xff] %v2806
        %2841 = vst [vmem:[#allocation2 + $0x40] sm:$0xff] %v2807
        %2842 = vst [vmem:[#allocation2 + $0x48] sm:$0xff] %v2808
        %2843 = vst [vmem:[#allocation2 + $0x50] sm:$0xff] %v2809
        %2844 = vst [vmem:[#allocation2 + $0x58] sm:$0xff] %v2810
        %2845 = vst [vmem:[#allocation2 + $0x60] sm:$0xff] %v2811
        %2846 = vst [vmem:[#allocation2 + $0x68] sm:$0xff] %v2812
        %2847 = vst [vmem:[#allocation2 + $0x70] sm:$0xff] %v2813
        %2848 = vst [vmem:[#allocation2 + $0x78] sm:$0xff] %v2814
        %2849 = vst [vmem:[#allocation2 + $0x80] sm:$0xff] %v2815
        %2850 = vst [vmem:[#allocation2 + $0x88] sm:$0xff] %v2816
        %2851 = vst [vmem:[#allocation2 + $0x90] sm:$0xff] %v2817
        %2852 = vst [vmem:[#allocation2 + $0x98] sm:$0xff] %v2818
        %2853 = vst [vmem:[#allocation2 + $0xa0] sm:$0xff] %v2819
        %2854 = vst [vmem:[#allocation2 + $0xa8] sm:$0xff] %v2820
        %2855 = vst [vmem:[#allocation2 + $0xb0] sm:$0xff] %v2821
        %2856 = vst [vmem:[#allocation2 + $0xb8] sm:$0xff] %v2822
        %2857 = vst [vmem:[#allocation2 + $0xc0] sm:$0xff] %v2823
        %2858 = vst [vmem:[#allocation2 + $0xc8] sm:$0xff] %v2824
        %2859 = vst [vmem:[#allocation2 + $0xd0] sm:$0xff] %v2825
        %2860 = vst [vmem:[#allocation2 + $0xd8] sm:$0xff] %v2826
        %2861 = vst [vmem:[#allocation2 + $0xe0] sm:$0xff] %v2827
        %2862 = vst [vmem:[#allocation2 + $0xe8] sm:$0xff] %v2828
        %2863 = vst [vmem:[#allocation2 + $0xf0] sm:$0xff] %v2829
        %2864 = vst [vmem:[#allocation2 + $0xf8] sm:$0xff] %v2830
        %2865 = vst [vmem:[#allocation2 + $0x100] sm:$0xff] %v2831
        %2866 = vst [vmem:[#allocation2 + $0x108] sm:$0xff] %v2832
        %v2867 = vld [vmem:[#allocation2] sm:$0xff]
        %v2868 = vld [vmem:[#allocation2 + $0x8] sm:$0xff]
        %v2869 = vld [vmem:[#allocation2 + $0x10] sm:$0xff]
        %v2870 = vld [vmem:[#allocation2 + $0x18] sm:$0xff]
        %v2871 = vld [vmem:[#allocation2 + $0x20] sm:$0xff]
        %v2872 = vld [vmem:[#allocation2 + $0x28] sm:$0xff]
        %v2873 = vld [vmem:[#allocation2 + $0x30] sm:$0xff]
        %v2874 = vld [vmem:[#allocation2 + $0x38] sm:$0xff]
        %v2875 = vld [vmem:[#allocation2 + $0x40] sm:$0xff]
        %v2876 = vld [vmem:[#allocation2 + $0x48] sm:$0xff]
        %v2877 = vld [vmem:[#allocation2 + $0x50] sm:$0xff]
        %v2878 = vld [vmem:[#allocation2 + $0x58] sm:$0xff]
        %v2879 = vld [vmem:[#allocation2 + $0x60] sm:$0xff]
        %v2880 = vld [vmem:[#allocation2 + $0x68] sm:$0xff]
        %v2881 = vld [vmem:[#allocation2 + $0x70] sm:$0xff]
        %v2882 = vld [vmem:[#allocation2 + $0x78] sm:$0xff]
        %v2883 = vld [vmem:[#allocation2 + $0x80] sm:$0xff]
        %v2884 = vld [vmem:[#allocation2 + $0x88] sm:$0xff]
        %v2885 = vld [vmem:[#allocation2 + $0x90] sm:$0xff]
        %v2886 = vld [vmem:[#allocation2 + $0x98] sm:$0xff]
        %v2887 = vld [vmem:[#allocation2 + $0xa0] sm:$0xff]
        %v2888 = vld [vmem:[#allocation2 + $0xa8] sm:$0xff]
        %v2889 = vld [vmem:[#allocation2 + $0xb0] sm:$0xff]
        %v2890 = vld [vmem:[#allocation2 + $0xb8] sm:$0xff]
        %v2891 = vld [vmem:[#allocation2 + $0xc0] sm:$0xff]
        %v2892 = vld [vmem:[#allocation2 + $0xc8] sm:$0xff]
        %v2893 = vld [vmem:[#allocation2 + $0xd0] sm:$0xff]
        %v2894 = vld [vmem:[#allocation2 + $0xd8] sm:$0xff]
        %v2895 = vld [vmem:[#allocation2 + $0xe0] sm:$0xff]
        %v2896 = vld [vmem:[#allocation2 + $0xe8] sm:$0xff]
        %v2897 = vld [vmem:[#allocation2 + $0xf0] sm:$0xff]
        %v2898 = vld [vmem:[#allocation2 + $0xf8] sm:$0xff]
        %v2899 = vld [vmem:[#allocation2 + $0x100] sm:$0xff]
        %v2900 = vld [vmem:[#allocation2 + $0x108] sm:$0xff]
        %v2901 = vld [vmem:[%s5] sm:$0x1]
        %v2903 = vlaneseq
        %v2904 = vshrl.u32 %v2903, 7
        %v2905 = vsub.s32 0, %v2904
        %v2906 = vrot.slane %v2901, %v2905
        %v2908 = vadd.f32 %v2867, %v2906
        %v2909 = vadd.f32 %v2868, %v2906
        %v2910 = vadd.f32 %v2869, %v2906
        %v2911 = vadd.f32 %v2870, %v2906
        %v2912 = vadd.f32 %v2871, %v2906
        %v2913 = vadd.f32 %v2872, %v2906
        %v2914 = vadd.f32 %v2873, %v2906
        %v2915 = vadd.f32 %v2874, %v2906
        %v2916 = vadd.f32 %v2875, %v2906
        %v2917 = vadd.f32 %v2876, %v2906
        %v2918 = vadd.f32 %v2877, %v2906
        %v2919 = vadd.f32 %v2878, %v2906
        %v2920 = vadd.f32 %v2879, %v2906
        %v2921 = vadd.f32 %v2880, %v2906
        %v2922 = vadd.f32 %v2881, %v2906
        %v2923 = vadd.f32 %v2882, %v2906
        %v2924 = vadd.f32 %v2883, %v2906
        %v2925 = vadd.f32 %v2884, %v2906
        %v2926 = vadd.f32 %v2885, %v2906
        %v2927 = vadd.f32 %v2886, %v2906
        %v2928 = vadd.f32 %v2887, %v2906
        %v2929 = vadd.f32 %v2888, %v2906
        %v2930 = vadd.f32 %v2889, %v2906
        %v2931 = vadd.f32 %v2890, %v2906
        %v2932 = vadd.f32 %v2891, %v2906
        %v2933 = vadd.f32 %v2892, %v2906
        %v2934 = vadd.f32 %v2893, %v2906
        %v2935 = vadd.f32 %v2894, %v2906
        %v2936 = vadd.f32 %v2895, %v2906
        %v2937 = vadd.f32 %v2896, %v2906
        %v2938 = vadd.f32 %v2897, %v2906
        %v2939 = vadd.f32 %v2898, %v2906
        %v2940 = vadd.f32 %v2899, %v2906
        %v2941 = vadd.f32 %v2900, %v2906
        %v2942 = vmax.f32 %v2908, 0.0
        %v2943 = vmax.f32 %v2909, 0.0
        %v2944 = vmax.f32 %v2910, 0.0
        %v2945 = vmax.f32 %v2911, 0.0
        %v2946 = vmax.f32 %v2912, 0.0
        %v2947 = vmax.f32 %v2913, 0.0
        %v2948 = vmax.f32 %v2914, 0.0
        %v2949 = vmax.f32 %v2915, 0.0
        %v2950 = vmax.f32 %v2916, 0.0
        %v2951 = vmax.f32 %v2917, 0.0
        %v2952 = vmax.f32 %v2918, 0.0
        %v2953 = vmax.f32 %v2919, 0.0
        %v2954 = vmax.f32 %v2920, 0.0
        %v2955 = vmax.f32 %v2921, 0.0
        %v2956 = vmax.f32 %v2922, 0.0
        %v2957 = vmax.f32 %v2923, 0.0
        %v2958 = vmax.f32 %v2924, 0.0
        %v2959 = vmax.f32 %v2925, 0.0
        %v2960 = vmax.f32 %v2926, 0.0
        %v2961 = vmax.f32 %v2927, 0.0
        %v2962 = vmax.f32 %v2928, 0.0
        %v2963 = vmax.f32 %v2929, 0.0
        %v2964 = vmax.f32 %v2930, 0.0
        %v2965 = vmax.f32 %v2931, 0.0
        %v2966 = vmax.f32 %v2932, 0.0
        %v2967 = vmax.f32 %v2933, 0.0
        %v2968 = vmax.f32 %v2934, 0.0
        %v2969 = vmax.f32 %v2935, 0.0
        %v2970 = vmax.f32 %v2936, 0.0
        %v2971 = vmax.f32 %v2937, 0.0
        %v2972 = vmax.f32 %v2938, 0.0
        %v2973 = vmax.f32 %v2939, 0.0
        %v2974 = vmax.f32 %v2940, 0.0
        %v2975 = vmax.f32 %v2941, 0.0
        %3010 = vrot.lane.b32.xlu0 %v2942, 64
        %v3011 = vpop.permute.xlu0 %3010
        %3012 = vrot.lane.b32.xlu0 %v2943, 64
        %v3013 = vpop.permute.xlu0 %3012
        %3014 = vrot.lane.b32.xlu0 %v2944, 64
        %v3015 = vpop.permute.xlu0 %3014
        %3016 = vrot.lane.b32.xlu0 %v2945, 64
        %v3017 = vpop.permute.xlu0 %3016
        %3018 = vrot.lane.b32.xlu0 %v2946, 64
        %v3019 = vpop.permute.xlu0 %3018
        %3020 = vrot.lane.b32.xlu0 %v2947, 64
        %v3021 = vpop.permute.xlu0 %3020
        %3022 = vrot.lane.b32.xlu0 %v2948, 64
        %v3023 = vpop.permute.xlu0 %3022
        %3024 = vrot.lane.b32.xlu0 %v2949, 64
        %v3025 = vpop.permute.xlu0 %3024
        %3026 = vrot.lane.b32.xlu0 %v2950, 64
        %v3027 = vpop.permute.xlu0 %3026
        %3028 = vrot.lane.b32.xlu0 %v2951, 64
        %v3029 = vpop.permute.xlu0 %3028
        %3030 = vrot.lane.b32.xlu0 %v2952, 64
        %v3031 = vpop.permute.xlu0 %3030
        %3032 = vrot.lane.b32.xlu0 %v2953, 64
        %v3033 = vpop.permute.xlu0 %3032
        %3034 = vrot.lane.b32.xlu0 %v2954, 64
        %v3035 = vpop.permute.xlu0 %3034
        %3036 = vrot.lane.b32.xlu0 %v2955, 64
        %v3037 = vpop.permute.xlu0 %3036
        %3038 = vrot.lane.b32.xlu0 %v2956, 64
        %v3039 = vpop.permute.xlu0 %3038
        %3040 = vrot.lane.b32.xlu0 %v2957, 64
        %v3041 = vpop.permute.xlu0 %3040
        %3042 = vrot.lane.b32.xlu0 %v2958, 64
        %v3043 = vpop.permute.xlu0 %3042
        %3044 = vrot.lane.b32.xlu0 %v2959, 64
        %v3045 = vpop.permute.xlu0 %3044
        %3046 = vrot.lane.b32.xlu0 %v2960, 64
        %v3047 = vpop.permute.xlu0 %3046
        %3048 = vrot.lane.b32.xlu0 %v2961, 64
        %v3049 = vpop.permute.xlu0 %3048
        %3050 = vrot.lane.b32.xlu0 %v2962, 64
        %v3051 = vpop.permute.xlu0 %3050
        %3052 = vrot.lane.b32.xlu0 %v2963, 64
        %v3053 = vpop.permute.xlu0 %3052
        %3054 = vrot.lane.b32.xlu0 %v2964, 64
        %v3055 = vpop.permute.xlu0 %3054
        %3056 = vrot.lane.b32.xlu0 %v2965, 64
        %v3057 = vpop.permute.xlu0 %3056
        %3058 = vrot.lane.b32.xlu0 %v2966, 64
        %v3059 = vpop.permute.xlu0 %3058
        %3060 = vrot.lane.b32.xlu0 %v2967, 64
        %v3061 = vpop.permute.xlu0 %3060
        %3062 = vrot.lane.b32.xlu0 %v2968, 64
        %v3063 = vpop.permute.xlu0 %3062
        %3064 = vrot.lane.b32.xlu0 %v2969, 64
        %v3065 = vpop.permute.xlu0 %3064
        %3066 = vrot.lane.b32.xlu0 %v2970, 64
        %v3067 = vpop.permute.xlu0 %3066
        %3068 = vrot.lane.b32.xlu0 %v2971, 64
        %v3069 = vpop.permute.xlu0 %3068
        %3070 = vrot.lane.b32.xlu0 %v2972, 64
        %v3071 = vpop.permute.xlu0 %3070
        %3072 = vrot.lane.b32.xlu0 %v2973, 64
        %v3073 = vpop.permute.xlu0 %3072
        %3074 = vrot.lane.b32.xlu0 %v2974, 64
        %v3075 = vpop.permute.xlu0 %3074
        %3076 = vrot.lane.b32.xlu0 %v2975, 64
        %v3077 = vpop.permute.xlu0 %3076
        %v3112 = vrot.slane %v3011, 7
        %v3113 = vrot.slane %v3013, 7
        %v3114 = vrot.slane %v3015, 7
        %v3115 = vrot.slane %v3017, 7
        %v3116 = vrot.slane %v3019, 7
        %v3117 = vrot.slane %v3021, 7
        %v3118 = vrot.slane %v3023, 7
        %v3119 = vrot.slane %v3025, 7
        %v3120 = vrot.slane %v3027, 7
        %v3121 = vrot.slane %v3029, 7
        %v3122 = vrot.slane %v3031, 7
        %v3123 = vrot.slane %v3033, 7
        %v3124 = vrot.slane %v3035, 7
        %v3125 = vrot.slane %v3037, 7
        %v3126 = vrot.slane %v3039, 7
        %v3127 = vrot.slane %v3041, 7
        %v3128 = vrot.slane %v3043, 7
        %v3129 = vrot.slane %v3045, 7
        %v3130 = vrot.slane %v3047, 7
        %v3131 = vrot.slane %v3049, 7
        %v3132 = vrot.slane %v3051, 7
        %v3133 = vrot.slane %v3053, 7
        %v3134 = vrot.slane %v3055, 7
        %v3135 = vrot.slane %v3057, 7
        %v3136 = vrot.slane %v3059, 7
        %v3137 = vrot.slane %v3061, 7
        %v3138 = vrot.slane %v3063, 7
        %v3139 = vrot.slane %v3065, 7
        %v3140 = vrot.slane %v3067, 7
        %v3141 = vrot.slane %v3069, 7
        %v3142 = vrot.slane %v3071, 7
        %v3143 = vrot.slane %v3073, 7
        %v3144 = vrot.slane %v3075, 7
        %v3145 = vrot.slane %v3077, 7
        %v3146 = vlaneseq
        %v3147 = vshrl.u32 %v3146, 7
        %vm3148 = vcmp.lt.s32.totalorder %v3147, 1
        %v3149 = vsel %vm3148, %v3143, %v3144
        %v3150 = vsel %vm3148, %v3141, %v3142
        %v3151 = vsel %vm3148, %v3139, %v3140
        %v3152 = vsel %vm3148, %v3137, %v3138
        %v3153 = vsel %vm3148, %v3135, %v3136
        %v3154 = vsel %vm3148, %v3133, %v3134
        %v3155 = vsel %vm3148, %v3131, %v3132
        %v3156 = vsel %vm3148, %v3129, %v3130
        %v3157 = vsel %vm3148, %v3127, %v3128
        %v3158 = vsel %vm3148, %v3125, %v3126
        %v3159 = vsel %vm3148, %v3123, %v3124
        %v3160 = vsel %vm3148, %v3121, %v3122
        %v3161 = vsel %vm3148, %v3119, %v3120
        %v3162 = vsel %vm3148, %v3117, %v3118
        %v3163 = vsel %vm3148, %v3115, %v3116
        %v3164 = vsel %vm3148, %v3113, %v3114
        %v3165 = vsel %vm3148, %v3145, %v3112
        %v3166 = vadd.s32 %v3147, 16
        %v3167 = vadd.s32 %v3147, 32
        %v3168 = vadd.s32 %v3147, 48
        %v3169 = vadd.s32 %v3147, 64
        %v3170 = vadd.s32 %v3147, 80
        %v3171 = vadd.s32 %v3147, 96
        %v3172 = vadd.s32 %v3147, 112
        %v3173 = vadd.s32 %v3147, 128
        %v3174 = vadd.s32 %v3147, 144
        %v3175 = vadd.s32 %v3147, 160
        %v3176 = vadd.s32 %v3147, 176
        %v3177 = vadd.s32 %v3147, 192
        %v3178 = vadd.s32 %v3147, 208
        %v3179 = vadd.s32 %v3147, 224
        %v3180 = vadd.s32 %v3147, 240
        %v3181 = vadd.s32 %v3147, 256
        %vm3182 = vcmp.lt.s32.totalorder %v3147, 0
        %v3183 = vsub.s32 0, %v3147
        %v3184 = vsel %vm3182, %v3183, %v3147
        %v3185 = vshrl.u32 %v3184, 4
        %v3186 = vand.u32 %v3184, 15
        %v3187 = vsub.s32 0, %v3186
        %v3188 = vsel %vm3182, %v3187, %v3186
        %vm3189 = vcmp.lt.s32.totalorder %v3166, 0
        %v3190 = vsub.s32 0, %v3166
        %v3191 = vsel %vm3189, %v3190, %v3166
        %v3192 = vshrl.u32 %v3191, 4
        %v3193 = vand.u32 %v3191, 15
        %v3194 = vsub.s32 0, %v3193
        %v3195 = vsel %vm3189, %v3194, %v3193
        %vm3196 = vcmp.lt.s32.totalorder %v3167, 0
        %v3197 = vsub.s32 0, %v3167
        %v3198 = vsel %vm3196, %v3197, %v3167
        %v3199 = vshrl.u32 %v3198, 4
        %v3200 = vand.u32 %v3198, 15
        %v3201 = vsub.s32 0, %v3200
        %v3202 = vsel %vm3196, %v3201, %v3200
        %vm3203 = vcmp.lt.s32.totalorder %v3168, 0
        %v3204 = vsub.s32 0, %v3168
        %v3205 = vsel %vm3203, %v3204, %v3168
        %v3206 = vshrl.u32 %v3205, 4
        %v3207 = vand.u32 %v3205, 15
        %v3208 = vsub.s32 0, %v3207
        %v3209 = vsel %vm3203, %v3208, %v3207
        %vm3210 = vcmp.lt.s32.totalorder %v3169, 0
        %v3211 = vsub.s32 0, %v3169
        %v3212 = vsel %vm3210, %v3211, %v3169
        %v3213 = vshrl.u32 %v3212, 4
        %v3214 = vand.u32 %v3212, 15
        %v3215 = vsub.s32 0, %v3214
        %v3216 = vsel %vm3210, %v3215, %v3214
        %vm3217 = vcmp.lt.s32.totalorder %v3170, 0
        %v3218 = vsub.s32 0, %v3170
        %v3219 = vsel %vm3217, %v3218, %v3170
        %v3220 = vshrl.u32 %v3219, 4
        %v3221 = vand.u32 %v3219, 15
        %v3222 = vsub.s32 0, %v3221
        %v3223 = vsel %vm3217, %v3222, %v3221
        %vm3224 = vcmp.lt.s32.totalorder %v3171, 0
        %v3225 = vsub.s32 0, %v3171
        %v3226 = vsel %vm3224, %v3225, %v3171
        %v3227 = vshrl.u32 %v3226, 4
        %v3228 = vand.u32 %v3226, 15
        %v3229 = vsub.s32 0, %v3228
        %v3230 = vsel %vm3224, %v3229, %v3228
        %vm3231 = vcmp.lt.s32.totalorder %v3172, 0
        %v3232 = vsub.s32 0, %v3172
        %v3233 = vsel %vm3231, %v3232, %v3172
        %v3234 = vshrl.u32 %v3233, 4
        %v3235 = vand.u32 %v3233, 15
        %v3236 = vsub.s32 0, %v3235
        %v3237 = vsel %vm3231, %v3236, %v3235
        %vm3238 = vcmp.lt.s32.totalorder %v3173, 0
        %v3239 = vsub.s32 0, %v3173
        %v3240 = vsel %vm3238, %v3239, %v3173
        %v3241 = vshrl.u32 %v3240, 4
        %v3242 = vand.u32 %v3240, 15
        %v3243 = vsub.s32 0, %v3242
        %v3244 = vsel %vm3238, %v3243, %v3242
        %vm3245 = vcmp.lt.s32.totalorder %v3174, 0
        %v3246 = vsub.s32 0, %v3174
        %v3247 = vsel %vm3245, %v3246, %v3174
        %v3248 = vshrl.u32 %v3247, 4
        %v3249 = vand.u32 %v3247, 15
        %v3250 = vsub.s32 0, %v3249
        %v3251 = vsel %vm3245, %v3250, %v3249
        %vm3252 = vcmp.lt.s32.totalorder %v3175, 0
        %v3253 = vsub.s32 0, %v3175
        %v3254 = vsel %vm3252, %v3253, %v3175
        %v3255 = vshrl.u32 %v3254, 4
        %v3256 = vand.u32 %v3254, 15
        %v3257 = vsub.s32 0, %v3256
        %v3258 = vsel %vm3252, %v3257, %v3256
        %vm3259 = vcmp.lt.s32.totalorder %v3176, 0
        %v3260 = vsub.s32 0, %v3176
        %v3261 = vsel %vm3259, %v3260, %v3176
        %v3262 = vshrl.u32 %v3261, 4
        %v3263 = vand.u32 %v3261, 15
        %v3264 = vsub.s32 0, %v3263
        %v3265 = vsel %vm3259, %v3264, %v3263
        %vm3266 = vcmp.lt.s32.totalorder %v3177, 0
        %v3267 = vsub.s32 0, %v3177
        %v3268 = vsel %vm3266, %v3267, %v3177
        %v3269 = vshrl.u32 %v3268, 4
        %v3270 = vand.u32 %v3268, 15
        %v3271 = vsub.s32 0, %v3270
        %v3272 = vsel %vm3266, %v3271, %v3270
        %vm3273 = vcmp.lt.s32.totalorder %v3178, 0
        %v3274 = vsub.s32 0, %v3178
        %v3275 = vsel %vm3273, %v3274, %v3178
        %v3276 = vshrl.u32 %v3275, 4
        %v3277 = vand.u32 %v3275, 15
        %v3278 = vsub.s32 0, %v3277
        %v3279 = vsel %vm3273, %v3278, %v3277
        %vm3280 = vcmp.lt.s32.totalorder %v3179, 0
        %v3281 = vsub.s32 0, %v3179
        %v3282 = vsel %vm3280, %v3281, %v3179
        %v3283 = vshrl.u32 %v3282, 4
        %v3284 = vand.u32 %v3282, 15
        %v3285 = vsub.s32 0, %v3284
        %v3286 = vsel %vm3280, %v3285, %v3284
        %vm3287 = vcmp.lt.s32.totalorder %v3180, 0
        %v3288 = vsub.s32 0, %v3180
        %v3289 = vsel %vm3287, %v3288, %v3180
        %v3290 = vshrl.u32 %v3289, 4
        %v3291 = vand.u32 %v3289, 15
        %v3292 = vsub.s32 0, %v3291
        %v3293 = vsel %vm3287, %v3292, %v3291
        %vm3294 = vcmp.lt.s32.totalorder %v3181, 0
        %v3295 = vsub.s32 0, %v3181
        %v3296 = vsel %vm3294, %v3295, %v3181
        %v3297 = vshrl.u32 %v3296, 4
        %v3298 = vand.u32 %v3296, 15
        %v3299 = vsub.s32 0, %v3298
        %v3300 = vsel %vm3294, %v3299, %v3298
        %vm3301 = vcmp.ne.s32.totalorder %v3188, 0
        %vm3302 = vcmp.ne.s32.totalorder %v3195, 0
        %vm3303 = vcmp.ne.s32.totalorder %v3202, 0
        %vm3304 = vcmp.ne.s32.totalorder %v3209, 0
        %vm3305 = vcmp.ne.s32.totalorder %v3216, 0
        %vm3306 = vcmp.ne.s32.totalorder %v3223, 0
        %vm3307 = vcmp.ne.s32.totalorder %v3230, 0
        %vm3308 = vcmp.ne.s32.totalorder %v3237, 0
        %vm3309 = vcmp.ne.s32.totalorder %v3244, 0
        %vm3310 = vcmp.ne.s32.totalorder %v3251, 0
        %vm3311 = vcmp.ne.s32.totalorder %v3258, 0
        %vm3312 = vcmp.ne.s32.totalorder %v3265, 0
        %vm3313 = vcmp.ne.s32.totalorder %v3272, 0
        %vm3314 = vcmp.ne.s32.totalorder %v3279, 0
        %vm3315 = vcmp.ne.s32.totalorder %v3286, 0
        %vm3316 = vcmp.ne.s32.totalorder %v3293, 0
        %vm3317 = vcmp.ne.s32.totalorder %v3300, 0
        %vm3318 = vcmp.lt.s32.totalorder %v3188, 0
        %vm3319 = vcmp.lt.s32.totalorder %v3195, 0
        %vm3320 = vcmp.lt.s32.totalorder %v3202, 0
        %vm3321 = vcmp.lt.s32.totalorder %v3209, 0
        %vm3322 = vcmp.lt.s32.totalorder %v3216, 0
        %vm3323 = vcmp.lt.s32.totalorder %v3223, 0
        %vm3324 = vcmp.lt.s32.totalorder %v3230, 0
        %vm3325 = vcmp.lt.s32.totalorder %v3237, 0
        %vm3326 = vcmp.lt.s32.totalorder %v3244, 0
        %vm3327 = vcmp.lt.s32.totalorder %v3251, 0
        %vm3328 = vcmp.lt.s32.totalorder %v3258, 0
        %vm3329 = vcmp.lt.s32.totalorder %v3265, 0
        %vm3330 = vcmp.lt.s32.totalorder %v3272, 0
        %vm3331 = vcmp.lt.s32.totalorder %v3279, 0
        %vm3332 = vcmp.lt.s32.totalorder %v3286, 0
        %vm3333 = vcmp.lt.s32.totalorder %v3293, 0
        %vm3334 = vcmp.lt.s32.totalorder %v3300, 0
        %vm3335 = vmand %vm3318, %vm3301
        %vm3336 = vmand %vm3319, %vm3302
        %vm3337 = vmand %vm3320, %vm3303
        %vm3338 = vmand %vm3321, %vm3304
        %vm3339 = vmand %vm3322, %vm3305
        %vm3340 = vmand %vm3323, %vm3306
        %vm3341 = vmand %vm3324, %vm3307
        %vm3342 = vmand %vm3325, %vm3308
        %vm3343 = vmand %vm3326, %vm3309
        %vm3344 = vmand %vm3327, %vm3310
        %vm3345 = vmand %vm3328, %vm3311
        %vm3346 = vmand %vm3329, %vm3312
        %vm3347 = vmand %vm3330, %vm3313
        %vm3348 = vmand %vm3331, %vm3314
        %vm3349 = vmand %vm3332, %vm3315
        %vm3350 = vmand %vm3333, %vm3316
        %vm3351 = vmand %vm3334, %vm3317
        %v3352 = vadd.s32 %v3188, 16
        %v3353 = vadd.s32 %v3195, 16
        %v3354 = vadd.s32 %v3202, 16
        %v3355 = vadd.s32 %v3209, 16
        %v3356 = vadd.s32 %v3216, 16
        %v3357 = vadd.s32 %v3223, 16
        %v3358 = vadd.s32 %v3230, 16
        %v3359 = vadd.s32 %v3237, 16
        %v3360 = vadd.s32 %v3244, 16
        %v3361 = vadd.s32 %v3251, 16
        %v3362 = vadd.s32 %v3258, 16
        %v3363 = vadd.s32 %v3265, 16
        %v3364 = vadd.s32 %v3272, 16
        %v3365 = vadd.s32 %v3279, 16
        %v3366 = vadd.s32 %v3286, 16
        %v3367 = vadd.s32 %v3293, 16
        %v3368 = vadd.s32 %v3300, 16
        %v3369 = vsel %vm3335, %v3352, %v3188
        %v3370 = vsel %vm3336, %v3353, %v3195
        %v3371 = vsel %vm3337, %v3354, %v3202
        %v3372 = vsel %vm3338, %v3355, %v3209
        %v3373 = vsel %vm3339, %v3356, %v3216
        %v3374 = vsel %vm3340, %v3357, %v3223
        %v3375 = vsel %vm3341, %v3358, %v3230
        %v3376 = vsel %vm3342, %v3359, %v3237
        %v3377 = vsel %vm3343, %v3360, %v3244
        %v3378 = vsel %vm3344, %v3361, %v3251
        %v3379 = vsel %vm3345, %v3362, %v3258
        %v3380 = vsel %vm3346, %v3363, %v3265
        %v3381 = vsel %vm3347, %v3364, %v3272
        %v3382 = vsel %vm3348, %v3365, %v3279
        %v3383 = vsel %vm3349, %v3366, %v3286
        %v3384 = vsel %vm3350, %v3367, %v3293
        %v3385 = vsel %vm3351, %v3368, %v3300
        %vm3386 = vcmp.eq.s32.totalorder %v3369, 0
        %vm3387 = vcmp.eq.s32.totalorder %v3370, 0
        %vm3388 = vcmp.eq.s32.totalorder %v3371, 0
        %vm3389 = vcmp.eq.s32.totalorder %v3372, 0
        %vm3390 = vcmp.eq.s32.totalorder %v3373, 0
        %vm3391 = vcmp.eq.s32.totalorder %v3374, 0
        %vm3392 = vcmp.eq.s32.totalorder %v3375, 0
        %vm3393 = vcmp.eq.s32.totalorder %v3376, 0
        %vm3394 = vcmp.eq.s32.totalorder %v3377, 0
        %vm3395 = vcmp.eq.s32.totalorder %v3378, 0
        %vm3396 = vcmp.eq.s32.totalorder %v3379, 0
        %vm3397 = vcmp.eq.s32.totalorder %v3380, 0
        %vm3398 = vcmp.eq.s32.totalorder %v3381, 0
        %vm3399 = vcmp.eq.s32.totalorder %v3382, 0
        %vm3400 = vcmp.eq.s32.totalorder %v3383, 0
        %vm3401 = vcmp.eq.s32.totalorder %v3384, 0
        %vm3402 = vcmp.eq.s32.totalorder %v3385, 0
        %3420 = vrot.lane.b32.xlu0 %v3165, 64
        %v3421 = vpop.permute.xlu0 %3420
        %3422 = vrot.lane.b32.xlu0 %v3164, 64
        %v3423 = vpop.permute.xlu0 %3422
        %3424 = vrot.lane.b32.xlu0 %v3163, 64
        %v3425 = vpop.permute.xlu0 %3424
        %3426 = vrot.lane.b32.xlu0 %v3162, 64
        %v3427 = vpop.permute.xlu0 %3426
        %3428 = vrot.lane.b32.xlu0 %v3161, 64
        %v3429 = vpop.permute.xlu0 %3428
        %3430 = vrot.lane.b32.xlu0 %v3160, 64
        %v3431 = vpop.permute.xlu0 %3430
        %3432 = vrot.lane.b32.xlu0 %v3159, 64
        %v3433 = vpop.permute.xlu0 %3432
        %3434 = vrot.lane.b32.xlu0 %v3158, 64
        %v3435 = vpop.permute.xlu0 %3434
        %3436 = vrot.lane.b32.xlu0 %v3157, 64
        %v3437 = vpop.permute.xlu0 %3436
        %3438 = vrot.lane.b32.xlu0 %v3156, 64
        %v3439 = vpop.permute.xlu0 %3438
        %3440 = vrot.lane.b32.xlu0 %v3155, 64
        %v3441 = vpop.permute.xlu0 %3440
        %3442 = vrot.lane.b32.xlu0 %v3154, 64
        %v3443 = vpop.permute.xlu0 %3442
        %3444 = vrot.lane.b32.xlu0 %v3153, 64
        %v3445 = vpop.permute.xlu0 %3444
        %3446 = vrot.lane.b32.xlu0 %v3152, 64
        %v3447 = vpop.permute.xlu0 %3446
        %3448 = vrot.lane.b32.xlu0 %v3151, 64
        %v3449 = vpop.permute.xlu0 %3448
        %3450 = vrot.lane.b32.xlu0 %v3150, 64
        %v3451 = vpop.permute.xlu0 %3450
        %3452 = vrot.lane.b32.xlu0 %v3149, 64
        %v3453 = vpop.permute.xlu0 %3452
        %v3471 = vsel %vm3386, %v2942, %v3421
        %v3472 = vsel %vm3387, %v2944, %v3423
        %v3473 = vsel %vm3388, %v2946, %v3425
        %v3474 = vsel %vm3389, %v2948, %v3427
        %v3475 = vsel %vm3390, %v2950, %v3429
        %v3476 = vsel %vm3391, %v2952, %v3431
        %v3477 = vsel %vm3392, %v2954, %v3433
        %v3478 = vsel %vm3393, %v2956, %v3435
        %v3479 = vsel %vm3394, %v2958, %v3437
        %v3480 = vsel %vm3395, %v2960, %v3439
        %v3481 = vsel %vm3396, %v2962, %v3441
        %v3482 = vsel %vm3397, %v2964, %v3443
        %v3483 = vsel %vm3398, %v2966, %v3445
        %v3484 = vsel %vm3399, %v2968, %v3447
        %v3485 = vsel %vm3400, %v2970, %v3449
        %v3486 = vsel %vm3401, %v2972, %v3451
        %v3487 = vsel %vm3402, %v2974, %v3453
        %v3488 = vmax.f32 %v2942, %v3011
        %v3489 = vmax.f32 %v2944, %v3015
        %v3490 = vmax.f32 %v2946, %v3019
        %v3491 = vmax.f32 %v2948, %v3023
        %v3492 = vmax.f32 %v2950, %v3027
        %v3493 = vmax.f32 %v2952, %v3031
        %v3494 = vmax.f32 %v2954, %v3035
        %v3495 = vmax.f32 %v2956, %v3039
        %v3496 = vmax.f32 %v2958, %v3043
        %v3497 = vmax.f32 %v2960, %v3047
        %v3498 = vmax.f32 %v2962, %v3051
        %v3499 = vmax.f32 %v2964, %v3055
        %v3500 = vmax.f32 %v2966, %v3059
        %v3501 = vmax.f32 %v2968, %v3063
        %v3502 = vmax.f32 %v2970, %v3067
        %v3503 = vmax.f32 %v2972, %v3071
        %v3504 = vmax.f32 %v2974, %v3075
        %3522 = vrot.lane.b32.xlu0 %v3471, 64
        %v3523 = vpop.permute.xlu0 %3522
        %3524 = vrot.lane.b32.xlu0 %v3472, 64
        %v3525 = vpop.permute.xlu0 %3524
        %3526 = vrot.lane.b32.xlu0 %v3473, 64
        %v3527 = vpop.permute.xlu0 %3526
        %3528 = vrot.lane.b32.xlu0 %v3474, 64
        %v3529 = vpop.permute.xlu0 %3528
        %3530 = vrot.lane.b32.xlu0 %v3475, 64
        %v3531 = vpop.permute.xlu0 %3530
        %3532 = vrot.lane.b32.xlu0 %v3476, 64
        %v3533 = vpop.permute.xlu0 %3532
        %3534 = vrot.lane.b32.xlu0 %v3477, 64
        %v3535 = vpop.permute.xlu0 %3534
        %3536 = vrot.lane.b32.xlu0 %v3478, 64
        %v3537 = vpop.permute.xlu0 %3536
        %3538 = vrot.lane.b32.xlu0 %v3479, 64
        %v3539 = vpop.permute.xlu0 %3538
        %3540 = vrot.lane.b32.xlu0 %v3480, 64
        %v3541 = vpop.permute.xlu0 %3540
        %3542 = vrot.lane.b32.xlu0 %v3481, 64
        %v3543 = vpop.permute.xlu0 %3542
        %3544 = vrot.lane.b32.xlu0 %v3482, 64
        %v3545 = vpop.permute.xlu0 %3544
        %3546 = vrot.lane.b32.xlu0 %v3483, 64
        %v3547 = vpop.permute.xlu0 %3546
        %3548 = vrot.lane.b32.xlu0 %v3484, 64
        %v3549 = vpop.permute.xlu0 %3548
        %3550 = vrot.lane.b32.xlu0 %v3485, 64
        %v3551 = vpop.permute.xlu0 %3550
        %3552 = vrot.lane.b32.xlu0 %v3486, 64
        %v3553 = vpop.permute.xlu0 %3552
        %3554 = vrot.lane.b32.xlu0 %v3487, 64
        %v3555 = vpop.permute.xlu0 %3554
        %v3573 = vmax.f32 %v3488, %v3523
        %v3574 = vmax.f32 %v3489, %v3525
        %v3575 = vmax.f32 %v3490, %v3527
        %v3576 = vmax.f32 %v3491, %v3529
        %v3577 = vmax.f32 %v3492, %v3531
        %v3578 = vmax.f32 %v3493, %v3533
        %v3579 = vmax.f32 %v3494, %v3535
        %v3580 = vmax.f32 %v3495, %v3537
        %v3581 = vmax.f32 %v3496, %v3539
        %v3582 = vmax.f32 %v3497, %v3541
        %v3583 = vmax.f32 %v3498, %v3543
        %v3584 = vmax.f32 %v3499, %v3545
        %v3585 = vmax.f32 %v3500, %v3547
        %v3586 = vmax.f32 %v3501, %v3549
        %v3587 = vmax.f32 %v3502, %v3551
        %v3588 = vmax.f32 %v3503, %v3553
        %v3589 = vmax.f32 %v3504, %v3555
        %p3590 = scmp.eq.s32.totalorder %s25, 0
        %s3591 = scalar_select %p3590, 1, 0
        %v3592 = vstv %s3591
        %vm3593 = vcmp.eq.s32.totalorder %v3592, 1
        %v3594 = vsel %vm3593, %v3574, %v3573
        %v3595 = vmax.f32 %v3594, %v3574
        %v3596 = vmax.f32 %v3595, %v3575
        %vm3597 = vcmask 523264
        %3598 = vst.msk [vmem:[%s391] sm:$0xff] %vm3597, %v3596
        %v3599 = vmax.f32 %v3575, %v3576
        %v3600 = vmax.f32 %v3599, %v3577
        %s3601 = scalar_lea.vmem %s391, 8 [#allocation3]
        %3602 = vst.msk [vmem:[%s3601] sm:$0xff] %vm3597, %v3600
        %v3603 = vmax.f32 %v3577, %v3578
        %v3604 = vmax.f32 %v3603, %v3579
        %s3605 = scalar_lea.vmem %s391, 16 [#allocation3]
        %3606 = vst.msk [vmem:[%s3605] sm:$0xff] %vm3597, %v3604
        %v3607 = vmax.f32 %v3579, %v3580
        %v3608 = vmax.f32 %v3607, %v3581
        %s3609 = scalar_lea.vmem %s391, 24 [#allocation3]
        %3610 = vst.msk [vmem:[%s3609] sm:$0xff] %vm3597, %v3608
        %v3611 = vmax.f32 %v3581, %v3582
        %v3612 = vmax.f32 %v3611, %v3583
        %s3613 = scalar_lea.vmem %s391, 32 [#allocation3]
        %3614 = vst.msk [vmem:[%s3613] sm:$0xff] %vm3597, %v3612
        %v3615 = vmax.f32 %v3583, %v3584
        %v3616 = vmax.f32 %v3615, %v3585
        %s3617 = scalar_lea.vmem %s391, 40 [#allocation3]
        %3618 = vst.msk [vmem:[%s3617] sm:$0xff] %vm3597, %v3616
        %v3619 = vmax.f32 %v3585, %v3586
        %v3620 = vmax.f32 %v3619, %v3587
        %s3621 = scalar_lea.vmem %s391, 48 [#allocation3]
        %3622 = vst.msk [vmem:[%s3621] sm:$0xff] %vm3597, %v3620
        %v3623 = vmax.f32 %v3587, %v3588
        %v3624 = vmax.f32 %v3623, %v3589
        %s3625 = scalar_lea.vmem %s391, 56 [#allocation3]
        %3626 = vst.msk [vmem:[%s3625] sm:$0xff] %vm3597, %v3624
        %s3627 = sand.u32 %s204, 1
        %s3628 = scalar_lea.sflag [#allocation4], %s3627
        %s3629 = sand.u32 %s204, 1
        %s3630 = smul.addr %s3629, 64
        %s3631 = scalar_lea.vmem [#allocation3], %s3630
        // Predicated region
        $region45: #{tpu_custom_call.1} parent=43 // pred_check
          %p3632 = pneg %p214
        $region46: #{tpu_custom_call.1} parent=43 // pred_check_branch
          %3634 = sbr.rel (%p3632) target = $region48
        $region47: #{tpu_custom_call.1} parent=43 // pred_region
          %s3635 = smul.u32 8, %s25
          %s3637 = ssub.s32 1024, 1024
          %3638 = vsyncadd %s3628, %s3637
          %s3639 = smul.addr %s24, 8
          %s3640 = sadd.s32 %s3635, %s3639
          %s3641 = smul.addr %s3640, 128
          %s3642 = scalar_lea.hbm %s6, %s3641
          %s3643 = sshll.u32 %s3631, 4
          %s3644 = int_to_ptr.vmem [resolvable:$true] %s3643
          %3649 = dma.vmem_to_hbm [thread:$0]  %s3644, 1024, %s3642, %s3628, 128, 128, 8
        $region48: #{tpu_custom_call.1} parent=43 // pred_fallthru
          _
      $region44: #{tpu_custom_call.1} parent=5 // pred_fallthru
        _
      %p3650 = scmp.le.s32.totalorder 2, %s15
      // Predicated region
      $region49: #{tpu_custom_call.1} parent=5 // pred_check
        %p3651 = pneg %p3650
      $region50: #{tpu_custom_call.1} parent=5 // pred_check_branch
        %3653 = sbr.rel (%p3651) target = $region52
      $region51: #{tpu_custom_call.1} parent=5 // pred_region
        %s3654 = ssub.s32 %s15, 2
        // Predicated region
        $region53: #{tpu_custom_call.1} parent=51 // pred_check
          %p3655 = pneg %p220
        $region54: #{tpu_custom_call.1} parent=51 // pred_check_branch
          %3657 = sbr.rel (%p3655) target = $region56
        $region55: #{tpu_custom_call.1} parent=51 // pred_region
          %s3658 = sand.u32 %s205, 1
          %s3659 = scalar_lea.sflag [#allocation4], %s3658
          %s3660 = sand.u32 %s205, 1
          %s3661 = smul.addr %s3660, 64
          %s3662 = scalar_lea.vmem [#allocation3], %s3661
          %3663 = dma.done %s3659, 1024
        $region56: #{tpu_custom_call.1} parent=51 // pred_fallthru
          _
      $region52: #{tpu_custom_call.1} parent=5 // pred_fallthru
        _
    $region6: #{tpu_custom_call.1} parent=1 // loop_footer
      %s19 = sadd.s32 1, %s15
    $region7: #{tpu_custom_call.1} parent=1 // loop_footer_branch
      %14 = sbr.rel target = $region3
    $region8: #{tpu_custom_call.1} parent=1 // loop_exit
      _
    %3664 = vsyncpa [#allocation4], 1
    %s3665 = scalar_lea.sflag [#allocation4], 1
    %3666 = vsyncpa %s3665, 1

</llo_original>
